<compile_context>
chip_gen: v6e
topology: v6e:2x2x1
jax: 0.10.0
libtpu: 0.0.40
codegen_flags: <defaults>
</compile_context>

<pallas_src>
import functools

import jax
import jax.numpy as jnp
from jax.experimental import pallas as pl
from jax.experimental.pallas import tpu as pltpu


def _round_up(x, m):
    return (x + m - 1) // m * m


def _pick_tile_h(H, Wp, max_rows=2048):
    """Largest divisor of H whose strip (tile_h * Wp rows) stays modest."""
    tile_h = 1
    for th in range(1, H + 1):
        if H % th == 0 and th * Wp <= max_rows:
            tile_h = th
    return tile_h


def _bisenet_output_kernel(a_ref, b0_ref, b1_ref, w1_ref, bias_ref, w2_ref,
                           out_ref, xs_ref, *, TH, W, Wp, Cin, Cmid, Cout_pad):
    # a_ref:   (1, TH, Wp, Cin) bf16  main TH rows of the padded strip
    # b0_ref:  (1, 1,  Wp, Cin) bf16  halo row h*TH + TH      (of padded image)
    # b1_ref:  (1, 1,  Wp, Cin) bf16  halo row h*TH + TH + 1
    # w1_ref:  (9, Cin, Cmid)   bf16  3x3 weights, tap-major, BN scale folded in
    # bias_ref:(1, Cmid)        f32   folded BN bias
    # w2_ref:  (Cmid, Cout_pad) bf16  1x1 conv weights (zero-padded classes)
    # out_ref: (1, TH, W, Cout_pad) f32
    # xs_ref:  (TH*Wp + 2*Wp + 8, Cin) bf16  flat staging scratch
    M = TH * Wp

    # Stage the (TH+2)-row padded strip into one flat, contiguous VMEM buffer.
    xs_ref[0:M, :] = a_ref[0].reshape(M, Cin)
    xs_ref[M:M + Wp, :] = b0_ref[0, 0]
    xs_ref[M + Wp:M + 2 * Wp, :] = b1_ref[0, 0]
    # Tail rows are only touched by the (cropped) pad-column rows; keep finite.
    tail = xs_ref.shape[0] - (M + 2 * Wp)
    xs_ref[M + 2 * Wp:, :] = jnp.zeros((tail, Cin), xs_ref.dtype)

    # 3x3 "same" conv as 9 shifted matmuls over contiguous row windows.
    # Window rows include the 2 pad columns per image row; those rows are junk
    # and get cropped at the store (they never contaminate valid rows).
    acc = jnp.zeros((M, Cmid), jnp.float32)
    for k in range(9):
        off = (k // 3) * Wp + (k % 3)            # static offset
        acc += jnp.dot(xs_ref[off:off + M, :], w1_ref[k],
                       preferred_element_type=jnp.float32)

    # Folded BatchNorm bias + ReLU, then the 1x1 conv on the MXU (bf16 in,
    # f32 accumulate).
    y = jnp.maximum(acc + bias_ref[...], 0.0).astype(w2_ref.dtype)
    z = jnp.dot(y, w2_ref[...], preferred_element_type=jnp.float32)

    # Crop the pad columns (j in [W, Wp)) and store a lane-dense slab.
    out_ref[0] = z.reshape(TH, Wp, Cout_pad)[:, :W, :].astype(out_ref.dtype)


def bisenet_output_forward(x_nchw, params, *, tile_h=None):
    """x_nchw: (N, Cin, H, W) float32. Returns (N, Cout, H, W) float32."""
    w3x3 = params["conv_w"]           # (Cmid, Cin, 3, 3)  PyTorch layout
    gamma = params["bn_gamma"]        # (Cmid,)
    beta = params["bn_beta"]          # (Cmid,)
    mean = params["bn_mean"]          # (Cmid,)
    var = params["bn_var"]            # (Cmid,)
    eps = params["bn_eps"]
    w1x1 = params["conv_out_w"]       # (Cout, Cmid, 1, 1)

    N, Cin, H, W = x_nchw.shape
    Cmid = w3x3.shape[0]
    Cout = w1x1.shape[0]
    Wp = W + 2
    Cout_pad = _round_up(Cout, 128)

    if tile_h is None:
        tile_h = _pick_tile_h(H, Wp)
    assert H % tile_h == 0, "tile_h must divide H"
    TH = tile_h
    M = TH * Wp

    # NCHW -> NHWC, cast to bf16, zero-pad H/W by 1 for the 3x3 "same" conv.
    x_nhwc = jnp.transpose(x_nchw, (0, 2, 3, 1)).astype(jnp.bfloat16)
    x_pad = jnp.pad(x_nhwc, ((0, 0), (1, 1), (1, 1), (0, 0)))

    # Fold BN (inference form) into the 3x3 weights + a bias:
    #   relu((x*w)*s + b) == relu(x*(w*s) + b)
    inv = (gamma / jnp.sqrt(var + eps)).astype(jnp.float32)          # (Cmid,)
    w1 = jnp.transpose(w3x3, (2, 3, 1, 0)).reshape(9, Cin, Cmid)     # tap-major
    w1 = (w1 * inv[None, None, :]).astype(jnp.bfloat16)
    bias = (beta - mean * inv).reshape(1, Cmid).astype(jnp.float32)
    w2 = jnp.transpose(w1x1[:, :, 0, 0], (1, 0))                     # (Cmid, Cout)
    w2 = jnp.pad(w2, ((0, 0), (0, Cout_pad - Cout))).astype(jnp.bfloat16)

    # VMEM budget: double-buffered strips + weights + staging + intermediates.
    est = (2 * (M + 2 * Wp) * Cin * 2              # input strip + halo (bf16)
           + 2 * 9 * Cin * Cmid * 2                # w1
           + 2 * Cmid * Cout_pad * 2 + 2 * Cmid * 4  # w2 + bias
           + 2 * TH * W * Cout_pad * 4             # output strip (f32)
           + (M + 2 * Wp + 8) * Cin * 2            # staging scratch
           + M * (2 * Cmid * 4 + Cout_pad * 4))    # acc / y / z values
    vmem_limit = int(min(max(2 * est, 32 * 1024 * 1024), 48 * 1024 * 1024))

    kernel = functools.partial(_bisenet_output_kernel, TH=TH, W=W, Wp=Wp,
                               Cin=Cin, Cmid=Cmid, Cout_pad=Cout_pad)

    out_nhwc = pl.pallas_call(
        kernel,
        out_shape=jax.ShapeDtypeStruct((N, H, W, Cout_pad), jnp.float32),
        grid_spec=pltpu.PrefetchScalarGridSpec(
            num_scalar_prefetch=0,
            grid=(N, H // TH),
            in_specs=[
                # main TH rows of the padded strip
                pl.BlockSpec((1, TH, Wp, Cin), lambda n, h: (n, h, 0, 0)),
                # two 1-row halo views of the same padded input
                pl.BlockSpec((1, 1, Wp, Cin),
                             lambda n, h: (n, (h + 1) * TH, 0, 0)),
                pl.BlockSpec((1, 1, Wp, Cin),
                             lambda n, h: (n, (h + 1) * TH + 1, 0, 0)),
                # weights / bias stay resident across grid steps
                pl.BlockSpec((9, Cin, Cmid), lambda n, h: (0, 0, 0)),
                pl.BlockSpec((1, Cmid), lambda n, h: (0, 0)),
                pl.BlockSpec((Cmid, Cout_pad), lambda n, h: (0, 0)),
            ],
            out_specs=pl.BlockSpec((1, TH, W, Cout_pad),
                                   lambda n, h: (n, h, 0, 0)),
            scratch_shapes=[pltpu.VMEM((M + 2 * Wp + 8, Cin), jnp.bfloat16)],
        ),
        compiler_params=pltpu.CompilerParams(
            dimension_semantics=("parallel", "parallel"),
            vmem_limit_bytes=vmem_limit),
    )(x_pad, x_pad, x_pad, w1, bias, w2)

    # Crop padded classes, NHWC -> NCHW.
    return jnp.transpose(out_nhwc[..., :Cout], (0, 3, 1, 2))


def _reference_forward(x_nchw, params):
    """Pure-JAX f32 reference (lax.conv) for correctness checking."""
    w3x3 = params["conv_w"]
    gamma, beta = params["bn_gamma"], params["bn_beta"]
    mean, var, eps = params["bn_mean"], params["bn_var"], params["bn_eps"]
    w1x1 = params["conv_out_w"]

    y = jax.lax.conv_general_dilated(
        x_nchw, w3x3, window_strides=(1, 1), padding=((1, 1), (1, 1)),
        dimension_numbers=("NCHW", "OIHW", "NCHW"))
    scale = (gamma / jnp.sqrt(var + eps)).reshape(1, -1, 1, 1)
    bias = (beta - mean * gamma / jnp.sqrt(var + eps)).reshape(1, -1, 1, 1)
    y = jnp.maximum(y * scale + bias, 0.0)
    z = jax.lax.conv_general_dilated(
        y, w1x1, window_strides=(1, 1), padding=((0, 0), (0, 0)),
        dimension_numbers=("NCHW", "OIHW", "NCHW"))
    return z


def make_params(key, in_channels, mid_channels, out_channels):
    k1, k2, k3, k4, k5 = jax.random.split(key, 5)
    return {
        "conv_w": 0.1 * jax.random.normal(
            k1, (mid_channels, in_channels, 3, 3), dtype=jnp.float32),
        "bn_gamma": 1.0 + 0.05 * jax.random.normal(k2, (mid_channels,), jnp.float32),
        "bn_beta": 0.05 * jax.random.normal(k3, (mid_channels,), jnp.float32),
        "bn_mean": 0.05 * jax.random.normal(k4, (mid_channels,), jnp.float32),
        "bn_var": jnp.abs(1.0 + 0.05 * jax.random.normal(k5, (mid_channels,), jnp.float32)),
        "bn_eps": 1e-5,
        "conv_out_w": 0.1 * jax.random.normal(
            jax.random.fold_in(key, 99), (out_channels, mid_channels, 1, 1), jnp.float32),
    }


if __name__ == "__main__":
    key = jax.random.PRNGKey(0)
    N, Cin, H, W = 2, 4, 16, 16
    Cmid, Cout = 8, 4

    kx, kp = jax.random.split(key)
    x = jax.random.normal(kx, (N, Cin, H, W), dtype=jnp.float32)
    params = make_params(kp, Cin, Cmid, Cout)

    # tile_h=8 -> grid=(2, 2): exercises the H-strip tiling and halo handling.
    out = jax.block_until_ready(bisenet_output_forward(x, params, tile_h=8))
    ref = jax.block_until_ready(_reference_forward(x, params))

    assert out.shape == (N, Cout, H, W)
    max_err = float(jnp.max(jnp.abs(out - ref)))
    assert jnp.allclose(out, ref, atol=5e-2, rtol=5e-2), f"max err {max_err}"

    print("KERNEL_OK")
</pallas_src>

<mosaic_0001>
module attributes {stable_mosaic.version = 11 : i64} {
  func.func @_bisenet_output_kernel(%arg0: i32, %arg1: i32, %arg2: memref<1x8x18x4xbf16, #tpu.memory_space<vmem>>, %arg3: memref<1x1x18x4xbf16, #tpu.memory_space<vmem>>, %arg4: memref<1x1x18x4xbf16, #tpu.memory_space<vmem>>, %arg5: memref<9x4x8xbf16, #tpu.memory_space<vmem>>, %arg6: memref<1x8xf32, #tpu.memory_space<vmem>>, %arg7: memref<8x128xbf16, #tpu.memory_space<vmem>>, %arg8: memref<1x8x16x128xf32, #tpu.memory_space<vmem>>, %arg9: memref<188x4xbf16, #tpu.memory_space<vmem>>) attributes {dimension_semantics = [#tpu.dimension_semantics<parallel>, #tpu.dimension_semantics<parallel>], iteration_bounds = array<i64: 2, 2>, scalar_prefetch = 0 : i64, scratch_operands = 1 : i64, tpu.core_type = #tpu.core_type<tc>, window_params = [{transform_indices = @transform_0, window_bounds = array<i64: 1, 8, 18, 4>}, {transform_indices = @transform_1, window_bounds = array<i64: 1, 1, 18, 4>}, {transform_indices = @transform_2, window_bounds = array<i64: 1, 1, 18, 4>}, {pipeline_mode = #tpu.pipeline_mode<synchronous>, transform_indices = @transform_3, window_bounds = array<i64: 9, 4, 8>}, {pipeline_mode = #tpu.pipeline_mode<synchronous>, transform_indices = @transform_4, window_bounds = array<i64: 1, 8>}, {pipeline_mode = #tpu.pipeline_mode<synchronous>, transform_indices = @transform_5, window_bounds = array<i64: 8, 128>}, {transform_indices = @transform_6, window_bounds = array<i64: 1, 8, 16, 128>}]} {
    %c0 = arith.constant 0 : index
    %c0_0 = arith.constant 0 : index
    %c0_1 = arith.constant 0 : index
    %c0_2 = arith.constant 0 : index
    %0 = vector.load %arg2[%c0, %c0_0, %c0_1, %c0_2] : memref<1x8x18x4xbf16, #tpu.memory_space<vmem>>, vector<1x8x18x4xbf16>
    %1 = vector.shape_cast %0 : vector<1x8x18x4xbf16> to vector<8x18x4xbf16>
    %2 = vector.shape_cast %1 : vector<8x18x4xbf16> to vector<144x4xbf16>
    %c0_3 = arith.constant 0 : index
    %c0_4 = arith.constant 0 : index
    %3 = vector.load %arg9[%c0_3, %c0_4] : memref<188x4xbf16, #tpu.memory_space<vmem>>, vector<144x4xbf16>
    tpu.vector_store %arg9[%c0_3, %c0_4], %2 {strides = array<i32>} : memref<188x4xbf16, #tpu.memory_space<vmem>>, vector<144x4xbf16>,
    %c0_5 = arith.constant 0 : index
    %c0_6 = arith.constant 0 : index
    %c0_7 = arith.constant 0 : index
    %c0_8 = arith.constant 0 : index
    %4 = vector.load %arg3[%c0_5, %c0_6, %c0_7, %c0_8] : memref<1x1x18x4xbf16, #tpu.memory_space<vmem>>, vector<1x1x18x4xbf16>
    %5 = vector.shape_cast %4 : vector<1x1x18x4xbf16> to vector<18x4xbf16>
    %c144 = arith.constant 144 : index
    %c0_9 = arith.constant 0 : index
    %6 = vector.load %arg9[%c144, %c0_9] : memref<188x4xbf16, #tpu.memory_space<vmem>>, vector<18x4xbf16>
    tpu.vector_store %arg9[%c144, %c0_9], %5 {strides = array<i32>} : memref<188x4xbf16, #tpu.memory_space<vmem>>, vector<18x4xbf16>,
    %c0_10 = arith.constant 0 : index
    %c0_11 = arith.constant 0 : index
    %c0_12 = arith.constant 0 : index
    %c0_13 = arith.constant 0 : index
    %7 = vector.load %arg4[%c0_10, %c0_11, %c0_12, %c0_13] : memref<1x1x18x4xbf16, #tpu.memory_space<vmem>>, vector<1x1x18x4xbf16>
    %8 = vector.shape_cast %7 : vector<1x1x18x4xbf16> to vector<18x4xbf16>
    %c162 = arith.constant 162 : index
    %c0_14 = arith.constant 0 : index
    %9 = vector.load %arg9[%c162, %c0_14] : memref<188x4xbf16, #tpu.memory_space<vmem>>, vector<18x4xbf16>
    tpu.vector_store %arg9[%c162, %c0_14], %8 {strides = array<i32>} : memref<188x4xbf16, #tpu.memory_space<vmem>>, vector<18x4xbf16>,
    %cst = arith.constant 0.000000e+00 : bf16
    %10 = vector.broadcast %cst : bf16 to vector<8x4xbf16>
    %c180 = arith.constant 180 : index
    %c0_15 = arith.constant 0 : index
    %11 = vector.load %arg9[%c180, %c0_15] : memref<188x4xbf16, #tpu.memory_space<vmem>>, vector<8x4xbf16>
    tpu.vector_store %arg9[%c180, %c0_15], %10 {strides = array<i32>} : memref<188x4xbf16, #tpu.memory_space<vmem>>, vector<8x4xbf16>,
    %cst_16 = arith.constant 0.000000e+00 : f32
    %12 = vector.broadcast %cst_16 : f32 to vector<144x8xf32>
    %c0_17 = arith.constant 0 : index
    %c0_18 = arith.constant 0 : index
    %13 = vector.load %arg9[%c0_17, %c0_18] : memref<188x4xbf16, #tpu.memory_space<vmem>>, vector<144x4xbf16>
    %c0_19 = arith.constant 0 : index
    %c0_20 = arith.constant 0 : index
    %c0_21 = arith.constant 0 : index
    %14 = vector.load %arg5[%c0_19, %c0_20, %c0_21] : memref<9x4x8xbf16, #tpu.memory_space<vmem>>, vector<1x4x8xbf16>
    %15 = vector.shape_cast %14 : vector<1x4x8xbf16> to vector<4x8xbf16>
    %cst_22 = arith.constant dense<0.000000e+00> : vector<144x8xf32>
    %16 = tpu.matmul %13, %15, %cst_22 {dimension_numbers = #tpu.dot_dimension_numbers<[1], [0], [0], [1], [0, 0, 1, 1], [], []>} : vector<144x4xbf16>, vector<4x8xbf16>, vector<144x8xf32> -> vector<144x8xf32>
    %17 = arith.addf %12, %16 : vector<144x8xf32>
    %c1 = arith.constant 1 : index
    %c0_23 = arith.constant 0 : index
    %18 = vector.load %arg9[%c1, %c0_23] : memref<188x4xbf16, #tpu.memory_space<vmem>>, vector<144x4xbf16>
    %c1_24 = arith.constant 1 : index
    %c0_25 = arith.constant 0 : index
    %c0_26 = arith.constant 0 : index
    %19 = vector.load %arg5[%c1_24, %c0_25, %c0_26] : memref<9x4x8xbf16, #tpu.memory_space<vmem>>, vector<1x4x8xbf16>
    %20 = vector.shape_cast %19 : vector<1x4x8xbf16> to vector<4x8xbf16>
    %cst_27 = arith.constant dense<0.000000e+00> : vector<144x8xf32>
    %21 = tpu.matmul %18, %20, %cst_27 {dimension_numbers = #tpu.dot_dimension_numbers<[1], [0], [0], [1], [0, 0, 1, 1], [], []>} : vector<144x4xbf16>, vector<4x8xbf16>, vector<144x8xf32> -> vector<144x8xf32>
    %22 = arith.addf %17, %21 : vector<144x8xf32>
    %c2 = arith.constant 2 : index
    %c0_28 = arith.constant 0 : index
    %23 = vector.load %arg9[%c2, %c0_28] : memref<188x4xbf16, #tpu.memory_space<vmem>>, vector<144x4xbf16>
    %c2_29 = arith.constant 2 : index
    %c0_30 = arith.constant 0 : index
    %c0_31 = arith.constant 0 : index
    %24 = vector.load %arg5[%c2_29, %c0_30, %c0_31] : memref<9x4x8xbf16, #tpu.memory_space<vmem>>, vector<1x4x8xbf16>
    %25 = vector.shape_cast %24 : vector<1x4x8xbf16> to vector<4x8xbf16>
    %cst_32 = arith.constant dense<0.000000e+00> : vector<144x8xf32>
    %26 = tpu.matmul %23, %25, %cst_32 {dimension_numbers = #tpu.dot_dimension_numbers<[1], [0], [0], [1], [0, 0, 1, 1], [], []>} : vector<144x4xbf16>, vector<4x8xbf16>, vector<144x8xf32> -> vector<144x8xf32>
    %27 = arith.addf %22, %26 : vector<144x8xf32>
    %c18 = arith.constant 18 : index
    %c0_33 = arith.constant 0 : index
    %28 = vector.load %arg9[%c18, %c0_33] : memref<188x4xbf16, #tpu.memory_space<vmem>>, vector<144x4xbf16>
    %c3 = arith.constant 3 : index
    %c0_34 = arith.constant 0 : index
    %c0_35 = arith.constant 0 : index
    %29 = vector.load %arg5[%c3, %c0_34, %c0_35] : memref<9x4x8xbf16, #tpu.memory_space<vmem>>, vector<1x4x8xbf16>
    %30 = vector.shape_cast %29 : vector<1x4x8xbf16> to vector<4x8xbf16>
    %cst_36 = arith.constant dense<0.000000e+00> : vector<144x8xf32>
    %31 = tpu.matmul %28, %30, %cst_36 {dimension_numbers = #tpu.dot_dimension_numbers<[1], [0], [0], [1], [0, 0, 1, 1], [], []>} : vector<144x4xbf16>, vector<4x8xbf16>, vector<144x8xf32> -> vector<144x8xf32>
    %32 = arith.addf %27, %31 : vector<144x8xf32>
    %c19 = arith.constant 19 : index
    %c0_37 = arith.constant 0 : index
    %33 = vector.load %arg9[%c19, %c0_37] : memref<188x4xbf16, #tpu.memory_space<vmem>>, vector<144x4xbf16>
    %c4 = arith.constant 4 : index
    %c0_38 = arith.constant 0 : index
    %c0_39 = arith.constant 0 : index
    %34 = vector.load %arg5[%c4, %c0_38, %c0_39] : memref<9x4x8xbf16, #tpu.memory_space<vmem>>, vector<1x4x8xbf16>
    %35 = vector.shape_cast %34 : vector<1x4x8xbf16> to vector<4x8xbf16>
    %cst_40 = arith.constant dense<0.000000e+00> : vector<144x8xf32>
    %36 = tpu.matmul %33, %35, %cst_40 {dimension_numbers = #tpu.dot_dimension_numbers<[1], [0], [0], [1], [0, 0, 1, 1], [], []>} : vector<144x4xbf16>, vector<4x8xbf16>, vector<144x8xf32> -> vector<144x8xf32>
    %37 = arith.addf %32, %36 : vector<144x8xf32>
    %c20 = arith.constant 20 : index
    %c0_41 = arith.constant 0 : index
    %38 = vector.load %arg9[%c20, %c0_41] : memref<188x4xbf16, #tpu.memory_space<vmem>>, vector<144x4xbf16>
    %c5 = arith.constant 5 : index
    %c0_42 = arith.constant 0 : index
    %c0_43 = arith.constant 0 : index
    %39 = vector.load %arg5[%c5, %c0_42, %c0_43] : memref<9x4x8xbf16, #tpu.memory_space<vmem>>, vector<1x4x8xbf16>
    %40 = vector.shape_cast %39 : vector<1x4x8xbf16> to vector<4x8xbf16>
    %cst_44 = arith.constant dense<0.000000e+00> : vector<144x8xf32>
    %41 = tpu.matmul %38, %40, %cst_44 {dimension_numbers = #tpu.dot_dimension_numbers<[1], [0], [0], [1], [0, 0, 1, 1], [], []>} : vector<144x4xbf16>, vector<4x8xbf16>, vector<144x8xf32> -> vector<144x8xf32>
    %42 = arith.addf %37, %41 : vector<144x8xf32>
    %c36 = arith.constant 36 : index
    %c0_45 = arith.constant 0 : index
    %43 = vector.load %arg9[%c36, %c0_45] : memref<188x4xbf16, #tpu.memory_space<vmem>>, vector<144x4xbf16>
    %c6 = arith.constant 6 : index
    %c0_46 = arith.constant 0 : index
    %c0_47 = arith.constant 0 : index
    %44 = vector.load %arg5[%c6, %c0_46, %c0_47] : memref<9x4x8xbf16, #tpu.memory_space<vmem>>, vector<1x4x8xbf16>
    %45 = vector.shape_cast %44 : vector<1x4x8xbf16> to vector<4x8xbf16>
    %cst_48 = arith.constant dense<0.000000e+00> : vector<144x8xf32>
    %46 = tpu.matmul %43, %45, %cst_48 {dimension_numbers = #tpu.dot_dimension_numbers<[1], [0], [0], [1], [0, 0, 1, 1], [], []>} : vector<144x4xbf16>, vector<4x8xbf16>, vector<144x8xf32> -> vector<144x8xf32>
    %47 = arith.addf %42, %46 : vector<144x8xf32>
    %c37 = arith.constant 37 : index
    %c0_49 = arith.constant 0 : index
    %48 = vector.load %arg9[%c37, %c0_49] : memref<188x4xbf16, #tpu.memory_space<vmem>>, vector<144x4xbf16>
    %c7 = arith.constant 7 : index
    %c0_50 = arith.constant 0 : index
    %c0_51 = arith.constant 0 : index
    %49 = vector.load %arg5[%c7, %c0_50, %c0_51] : memref<9x4x8xbf16, #tpu.memory_space<vmem>>, vector<1x4x8xbf16>
    %50 = vector.shape_cast %49 : vector<1x4x8xbf16> to vector<4x8xbf16>
    %cst_52 = arith.constant dense<0.000000e+00> : vector<144x8xf32>
    %51 = tpu.matmul %48, %50, %cst_52 {dimension_numbers = #tpu.dot_dimension_numbers<[1], [0], [0], [1], [0, 0, 1, 1], [], []>} : vector<144x4xbf16>, vector<4x8xbf16>, vector<144x8xf32> -> vector<144x8xf32>
    %52 = arith.addf %47, %51 : vector<144x8xf32>
    %c38 = arith.constant 38 : index
    %c0_53 = arith.constant 0 : index
    %53 = vector.load %arg9[%c38, %c0_53] : memref<188x4xbf16, #tpu.memory_space<vmem>>, vector<144x4xbf16>
    %c8 = arith.constant 8 : index
    %c0_54 = arith.constant 0 : index
    %c0_55 = arith.constant 0 : index
    %54 = vector.load %arg5[%c8, %c0_54, %c0_55] : memref<9x4x8xbf16, #tpu.memory_space<vmem>>, vector<1x4x8xbf16>
    %55 = vector.shape_cast %54 : vector<1x4x8xbf16> to vector<4x8xbf16>
    %cst_56 = arith.constant dense<0.000000e+00> : vector<144x8xf32>
    %56 = tpu.matmul %53, %55, %cst_56 {dimension_numbers = #tpu.dot_dimension_numbers<[1], [0], [0], [1], [0, 0, 1, 1], [], []>} : vector<144x4xbf16>, vector<4x8xbf16>, vector<144x8xf32> -> vector<144x8xf32>
    %57 = arith.addf %52, %56 : vector<144x8xf32>
    %c0_57 = arith.constant 0 : index
    %c0_58 = arith.constant 0 : index
    %58 = vector.load %arg6[%c0_57, %c0_58] : memref<1x8xf32, #tpu.memory_space<vmem>>, vector<1x8xf32>
    %59 = vector.broadcast %58 : vector<1x8xf32> to vector<144x8xf32>
    %60 = arith.addf %57, %59 : vector<144x8xf32>
    %cst_59 = arith.constant 0.000000e+00 : f32
    %61 = vector.broadcast %cst_59 : f32 to vector<144x8xf32>
    %62 = arith.maximumf %60, %61 : vector<144x8xf32>
    %63 = arith.truncf %62 : vector<144x8xf32> to vector<144x8xbf16>
    %c0_60 = arith.constant 0 : index
    %c0_61 = arith.constant 0 : index
    %64 = vector.load %arg7[%c0_60, %c0_61] : memref<8x128xbf16, #tpu.memory_space<vmem>>, vector<8x128xbf16>
    %cst_62 = arith.constant dense<0.000000e+00> : vector<144x128xf32>
    %65 = tpu.matmul %63, %64, %cst_62 {dimension_numbers = #tpu.dot_dimension_numbers<[1], [0], [0], [1], [0, 0, 1, 1], [], []>} : vector<144x8xbf16>, vector<8x128xbf16>, vector<144x128xf32> -> vector<144x128xf32>
    %66 = vector.shape_cast %65 : vector<144x128xf32> to vector<8x18x128xf32>
    %67 = vector.extract_strided_slice %66 {offsets = [0, 0, 0], sizes = [8, 16, 128], strides = [1, 1, 1]} : vector<8x18x128xf32> to vector<8x16x128xf32>
    %c0_63 = arith.constant 0 : index
    %c0_64 = arith.constant 0 : index
    %c0_65 = arith.constant 0 : index
    %c0_66 = arith.constant 0 : index
    %68 = vector.load %arg8[%c0_63, %c0_64, %c0_65, %c0_66] : memref<1x8x16x128xf32, #tpu.memory_space<vmem>>, vector<1x8x16x128xf32>
    %69 = vector.shape_cast %68 : vector<1x8x16x128xf32> to vector<8x16x128xf32>
    %70 = vector.shape_cast %67 : vector<8x16x128xf32> to vector<1x8x16x128xf32>
    tpu.vector_store %arg8[%c0_63, %c0_64, %c0_65, %c0_66], %70 {strides = array<i32>} : memref<1x8x16x128xf32, #tpu.memory_space<vmem>>, vector<1x8x16x128xf32>,
    return
  }
  func.func @transform_0(%arg0: i32, %arg1: i32) -> (i32, i32, i32, i32) {
    %c0_i32 = arith.constant 0 : i32
    %c0_i32_0 = arith.constant 0 : i32
    %c0_i32_1 = arith.constant 0 : i32
    return %arg0, %arg1, %c0_i32, %c0_i32_0 : i32, i32, i32, i32
  }
  func.func @transform_1(%arg0: i32, %arg1: i32) -> (i32, i32, i32, i32) {
    %c1_i32 = arith.constant 1 : i32
    %0 = arith.addi %arg1, %c1_i32 : i32
    %c8_i32 = arith.constant 8 : i32
    %1 = arith.muli %0, %c8_i32 : i32
    %c0_i32 = arith.constant 0 : i32
    %c0_i32_0 = arith.constant 0 : i32
    %c0_i32_1 = arith.constant 0 : i32
    return %arg0, %1, %c0_i32, %c0_i32_0 : i32, i32, i32, i32
  }
  func.func @transform_2(%arg0: i32, %arg1: i32) -> (i32, i32, i32, i32) {
    %c1_i32 = arith.constant 1 : i32
    %0 = arith.addi %arg1, %c1_i32 : i32
    %c8_i32 = arith.constant 8 : i32
    %1 = arith.muli %0, %c8_i32 : i32
    %c1_i32_0 = arith.constant 1 : i32
    %2 = arith.addi %1, %c1_i32_0 : i32
    %c0_i32 = arith.constant 0 : i32
    %c0_i32_1 = arith.constant 0 : i32
    %c0_i32_2 = arith.constant 0 : i32
    return %arg0, %2, %c0_i32, %c0_i32_1 : i32, i32, i32, i32
  }
  func.func @transform_3(%arg0: i32, %arg1: i32) -> (i32, i32, i32) {
    %c0_i32 = arith.constant 0 : i32
    %c0_i32_0 = arith.constant 0 : i32
    %c0_i32_1 = arith.constant 0 : i32
    %c0_i32_2 = arith.constant 0 : i32
    return %c0_i32, %c0_i32_0, %c0_i32_1 : i32, i32, i32
  }
  func.func @transform_4(%arg0: i32, %arg1: i32) -> (i32, i32) {
    %c0_i32 = arith.constant 0 : i32
    %c0_i32_0 = arith.constant 0 : i32
    %c0_i32_1 = arith.constant 0 : i32
    return %c0_i32, %c0_i32_0 : i32, i32
  }
  func.func @transform_5(%arg0: i32, %arg1: i32) -> (i32, i32) {
    %c0_i32 = arith.constant 0 : i32
    %c0_i32_0 = arith.constant 0 : i32
    %c0_i32_1 = arith.constant 0 : i32
    return %c0_i32, %c0_i32_0 : i32, i32
  }
  func.func @transform_6(%arg0: i32, %arg1: i32) -> (i32, i32, i32, i32) {
    %c0_i32 = arith.constant 0 : i32
    %c0_i32_0 = arith.constant 0 : i32
    %c0_i32_1 = arith.constant 0 : i32
    return %arg0, %arg1, %c0_i32, %c0_i32_0 : i32, i32, i32, i32
  }
}

</mosaic_0001>

<llo_original>
// kernel: tpu_custom_call.1
$region0: #{tpu_custom_call.1}
  #allocation0 [shape = 'u32[]', space=smem, size = 0x4, offset = 0x4, fixed_abs, tag = 'smem constant byte address 0x4 - core index']
  #allocation1 [shape = 'u32[144,128]{1,0:T(1,128)}', space=vmem, size = 0x12000, scoped, tag = 'internal scratch']
  #allocation2 [shape = 'bf16[188,4]{1,0:T(8,128)(2,1)}', space=vmem, size = 0xc000, scoped, tag = 'scratch operand']
  %s0 = inlined_call_operand.vmem [shape: bf16[2,18,18,4], index: 0, kind: input, shape index: {}]
  %s1 = inlined_call_operand.vmem [shape: bf16[2,18,18,4], index: 1, kind: input, shape index: {}]
  %s2 = inlined_call_operand.vmem [shape: bf16[2,18,18,4], index: 2, kind: input, shape index: {}]
  %s3 = inlined_call_operand.vmem [shape: bf16[9,4,8], index: 3, kind: input, shape index: {}]
  %s4 = inlined_call_operand.vmem [shape: f32[1,8], index: 4, kind: input, shape index: {}]
  %s5 = inlined_call_operand.vmem [shape: bf16[8,128], index: 5, kind: input, shape index: {}]
  %s6 = inlined_call_operand.hbm [shape: f32[2,16,16,128], index: 6, kind: output, shape index: {}]
  %s7 = sld [smem:[#allocation0]]
  $region57: #{tpu_custom_call.1} parent=0
    _
  %s9 = ssub.s32 1, %s7
  %s10 = scalar_select 0, %s9, %s7
  $region1: #{tpu_custom_call.1} parent=0
    #allocation3 [shape = 'u8[131072]{0}', space=vmem, size = 0x20000, scoped, tag = 'output window, operand 0']
    #allocation4 [shape = 's32[2]{0}', space=sflag, size = 0x8, scoped, tag = 'scoped memory for tpu_custom_call.1']
    %11 = vsyncpa [#allocation4], 0
    %s12 = scalar_lea.sflag [#allocation4], 1
    %13 = vsyncpa %s12, 0
    loop: start=0, step=1, limit=6
    $region2: #{tpu_custom_call.1} parent=1 // loop_pre_header
      _
    $region3: #{tpu_custom_call.1} parent=1 // loop_header
      %s15 = sphi 0, %s19
      %p16 = scmp.ge.s32.totalorder %s15, 6
      %s22 = sphi 0, %s34
      %s23 = sphi 0, %s30
      %s24 = sphi 0, %s22
      %s25 = sphi 0, %s23
      %s26 = sphi 0, %s24
      %s27 = sphi 0, %s25
      %s39 = sphi 0, %s41
      %s42 = sphi 0, %s39
      %s43 = sphi 0, %s42
      %s59 = sphi 0, %s43
      %s71 = sphi 0, %s73
      %s74 = sphi 0, %s71
      %s75 = sphi 0, %s74
      %s91 = sphi 0, %s75
      %s105 = sphi 0, %s107
      %s108 = sphi 0, %s105
      %s109 = sphi 0, %s108
      %s125 = sphi 0, %s109
      %s129 = sphi 0, %s129
      %s131 = sphi 0, %s129
      %s132 = sphi 0, %s131
      %s146 = sphi 0, %s132
      %s150 = sphi 0, %s150
      %s152 = sphi 0, %s150
      %s153 = sphi 0, %s152
      %s167 = sphi 0, %s153
      %s171 = sphi 0, %s171
      %s173 = sphi 0, %s171
      %s174 = sphi 0, %s173
      %s188 = sphi 0, %s174
      %s196 = sphi 0, %s198
      %s199 = sphi 0, %s196
      %s200 = sphi 0, %s199
      %s216 = sphi 0, %s200
    $region4: #{tpu_custom_call.1} parent=1 // loop_header_branch
      %18 = sbr.rel (%p16) target = $region8
    $region5: #{tpu_custom_call.1} parent=1 // loop_body
      %s20 = ssub.s32 %s15, 1
      %s21 = ssub.s32 %s15, 2
      %s28 = sadd.s32 1, %s23
      %p29 = scmp.ge.s32.totalorder %s28, 2
      %s30 = scalar_select %p29, 0, %s28
      %s31 = sadd.s32 1, %s22
      %s32 = scalar_select %p29, %s31, %s22
      %p33 = scmp.ge.s32.totalorder %s32, 2
      %s34 = scalar_select %p33, 0, %s32
      %s35 = ssub.s32 %s22, %s34
      %s36 = ssub.s32 %s23, %s30
      %s37 = sor.u32 %s35, %s36
      %p38 = scmp.eq.s32.totalorder %s37, 0
      %s40 = sadd.s32 %s39, 1
      %s41 = scalar_select %p38, %s39, %s40
      %p44 = pneg %p38
      %p45 = scmp.eq.s32.totalorder %s15, 3
      %p46 = por %p44, %p45
      %p47 = scmp.ne.s32.totalorder %s39, %s42
      %p48 = scmp.eq.s32.totalorder %s15, 0
      %p49 = por %p47, %p48
      %p50 = scmp.ne.s32.totalorder %s39, %s42
      %p51 = scmp.eq.s32.totalorder %s20, 3
      %p52 = por %p50, %p51
      %p53 = scmp.ne.s32.totalorder %s42, %s43
      %p54 = scmp.eq.s32.totalorder %s20, 0
      %p55 = por %p53, %p54
      %p56 = scmp.ne.s32.totalorder %s42, %s43
      %p57 = scmp.eq.s32.totalorder %s21, 3
      %p58 = por %p56, %p57
      %p60 = scmp.ne.s32.totalorder %s43, %s59
      %p61 = scmp.eq.s32.totalorder %s21, 0
      %p62 = por %p60, %p61
      %s63 = sadd.s32 %s23, 1
      %s64 = smul.u32 %s63, 8
      %s65 = sadd.s32 %s30, 1
      %s66 = smul.u32 %s65, 8
      %s67 = ssub.s32 %s22, %s34
      %s68 = ssub.s32 %s64, %s66
      %s69 = sor.u32 %s67, %s68
      %p70 = scmp.eq.s32.totalorder %s69, 0
      %s72 = sadd.s32 %s71, 1
      %s73 = scalar_select %p70, %s71, %s72
      %p76 = pneg %p70
      %p77 = scmp.eq.s32.totalorder %s15, 3
      %p78 = por %p76, %p77
      %p79 = scmp.ne.s32.totalorder %s71, %s74
      %p80 = scmp.eq.s32.totalorder %s15, 0
      %p81 = por %p79, %p80
      %p82 = scmp.ne.s32.totalorder %s71, %s74
      %p83 = scmp.eq.s32.totalorder %s20, 3
      %p84 = por %p82, %p83
      %p85 = scmp.ne.s32.totalorder %s74, %s75
      %p86 = scmp.eq.s32.totalorder %s20, 0
      %p87 = por %p85, %p86
      %p88 = scmp.ne.s32.totalorder %s74, %s75
      %p89 = scmp.eq.s32.totalorder %s21, 3
      %p90 = por %p88, %p89
      %p92 = scmp.ne.s32.totalorder %s75, %s91
      %p93 = scmp.eq.s32.totalorder %s21, 0
      %p94 = por %p92, %p93
      %s95 = sadd.s32 %s23, 1
      %s96 = smul.u32 %s95, 8
      %s97 = sadd.s32 %s96, 1
      %s98 = sadd.s32 %s30, 1
      %s99 = smul.u32 %s98, 8
      %s100 = sadd.s32 %s99, 1
      %s101 = ssub.s32 %s22, %s34
      %s102 = ssub.s32 %s97, %s100
      %s103 = sor.u32 %s101, %s102
      %p104 = scmp.eq.s32.totalorder %s103, 0
      %s106 = sadd.s32 %s105, 1
      %s107 = scalar_select %p104, %s105, %s106
      %p110 = pneg %p104
      %p111 = scmp.eq.s32.totalorder %s15, 3
      %p112 = por %p110, %p111
      %p113 = scmp.ne.s32.totalorder %s105, %s108
      %p114 = scmp.eq.s32.totalorder %s15, 0
      %p115 = por %p113, %p114
      %p116 = scmp.ne.s32.totalorder %s105, %s108
      %p117 = scmp.eq.s32.totalorder %s20, 3
      %p118 = por %p116, %p117
      %p119 = scmp.ne.s32.totalorder %s108, %s109
      %p120 = scmp.eq.s32.totalorder %s20, 0
      %p121 = por %p119, %p120
      %p122 = scmp.ne.s32.totalorder %s108, %s109
      %p123 = scmp.eq.s32.totalorder %s21, 3
      %p124 = por %p122, %p123
      %p126 = scmp.ne.s32.totalorder %s109, %s125
      %p127 = scmp.eq.s32.totalorder %s21, 0
      %p128 = por %p126, %p127
      %s130 = sadd.s32 %s129, 1
      %p133 = scmp.eq.s32.totalorder %s15, 3
      %p134 = scmp.ne.s32.totalorder %s129, %s131
      %p135 = scmp.eq.s32.totalorder %s15, 0
      %p136 = por %p134, %p135
      %p137 = scmp.ne.s32.totalorder %s129, %s131
      %p138 = scmp.eq.s32.totalorder %s20, 3
      %p139 = por %p137, %p138
      %p140 = scmp.ne.s32.totalorder %s131, %s132
      %p141 = scmp.eq.s32.totalorder %s20, 0
      %p142 = por %p140, %p141
      %p143 = scmp.ne.s32.totalorder %s131, %s132
      %p144 = scmp.eq.s32.totalorder %s21, 3
      %p145 = por %p143, %p144
      %p147 = scmp.ne.s32.totalorder %s132, %s146
      %p148 = scmp.eq.s32.totalorder %s21, 0
      %p149 = por %p147, %p148
      %s151 = sadd.s32 %s150, 1
      %p154 = scmp.eq.s32.totalorder %s15, 3
      %p155 = scmp.ne.s32.totalorder %s150, %s152
      %p156 = scmp.eq.s32.totalorder %s15, 0
      %p157 = por %p155, %p156
      %p158 = scmp.ne.s32.totalorder %s150, %s152
      %p159 = scmp.eq.s32.totalorder %s20, 3
      %p160 = por %p158, %p159
      %p161 = scmp.ne.s32.totalorder %s152, %s153
      %p162 = scmp.eq.s32.totalorder %s20, 0
      %p163 = por %p161, %p162
      %p164 = scmp.ne.s32.totalorder %s152, %s153
      %p165 = scmp.eq.s32.totalorder %s21, 3
      %p166 = por %p164, %p165
      %p168 = scmp.ne.s32.totalorder %s153, %s167
      %p169 = scmp.eq.s32.totalorder %s21, 0
      %p170 = por %p168, %p169
      %s172 = sadd.s32 %s171, 1
      %p175 = scmp.eq.s32.totalorder %s15, 3
      %p176 = scmp.ne.s32.totalorder %s171, %s173
      %p177 = scmp.eq.s32.totalorder %s15, 0
      %p178 = por %p176, %p177
      %p179 = scmp.ne.s32.totalorder %s171, %s173
      %p180 = scmp.eq.s32.totalorder %s20, 3
      %p181 = por %p179, %p180
      %p182 = scmp.ne.s32.totalorder %s173, %s174
      %p183 = scmp.eq.s32.totalorder %s20, 0
      %p184 = por %p182, %p183
      %p185 = scmp.ne.s32.totalorder %s173, %s174
      %p186 = scmp.eq.s32.totalorder %s21, 3
      %p187 = por %p185, %p186
      %p189 = scmp.ne.s32.totalorder %s174, %s188
      %p190 = scmp.eq.s32.totalorder %s21, 0
      %p191 = por %p189, %p190
      %s192 = ssub.s32 %s22, %s34
      %s193 = ssub.s32 %s23, %s30
      %s194 = sor.u32 %s192, %s193
      %p195 = scmp.eq.s32.totalorder %s194, 0
      %s197 = sadd.s32 %s196, 1
      %s198 = scalar_select %p195, %s196, %s197
      %p201 = pneg %p195
      %p202 = scmp.eq.s32.totalorder %s15, 3
      %p203 = por %p201, %p202
      %p204 = scmp.ne.s32.totalorder %s196, %s199
      %p205 = scmp.eq.s32.totalorder %s15, 0
      %p206 = por %p204, %p205
      %p207 = scmp.ne.s32.totalorder %s196, %s199
      %p208 = scmp.eq.s32.totalorder %s20, 3
      %p209 = por %p207, %p208
      %p210 = scmp.ne.s32.totalorder %s199, %s200
      %p211 = scmp.eq.s32.totalorder %s20, 0
      %p212 = por %p210, %p211
      %p213 = scmp.ne.s32.totalorder %s199, %s200
      %p214 = scmp.eq.s32.totalorder %s21, 3
      %p215 = por %p213, %p214
      %p217 = scmp.ne.s32.totalorder %s200, %s216
      %p218 = scmp.eq.s32.totalorder %s21, 0
      %p219 = por %p217, %p218
      %p220 = scmp.le.s32.totalorder 1, %s15
      %p221 = scmp.lt.s32.totalorder %s15, 5
      %p222 = pnand %p220, %p221
      %p223 = pneg %p222
      // Predicated region
      $region9: #{tpu_custom_call.1} parent=5 // pred_check
        _
      $region10: #{tpu_custom_call.1} parent=5 // pred_check_branch
        %225 = sbr.rel (%p222) target = $region12
      $region11: #{tpu_custom_call.1} parent=5 // pred_region
        %s226 = ssub.s32 %s15, 1
        // Predicated region
        $region13: #{tpu_custom_call.1} parent=11 // pred_check
          %p227 = pneg %p142
        $region14: #{tpu_custom_call.1} parent=11 // pred_check_branch
          %229 = sbr.rel (%p227) target = $region16
        $region15: #{tpu_custom_call.1} parent=11 // pred_region
          _
        $region16: #{tpu_custom_call.1} parent=11 // pred_fallthru
          _
        // Predicated region
        $region17: #{tpu_custom_call.1} parent=11 // pred_check
          %p230 = pneg %p163
        $region18: #{tpu_custom_call.1} parent=11 // pred_check_branch
          %232 = sbr.rel (%p230) target = $region20
        $region19: #{tpu_custom_call.1} parent=11 // pred_region
          _
        $region20: #{tpu_custom_call.1} parent=11 // pred_fallthru
          _
        // Predicated region
        $region21: #{tpu_custom_call.1} parent=11 // pred_check
          %p233 = pneg %p184
        $region22: #{tpu_custom_call.1} parent=11 // pred_check_branch
          %235 = sbr.rel (%p233) target = $region24
        $region23: #{tpu_custom_call.1} parent=11 // pred_region
          _
        $region24: #{tpu_custom_call.1} parent=11 // pred_fallthru
          _
      $region12: #{tpu_custom_call.1} parent=5 // pred_fallthru
        _
      %p236 = scmp.lt.s32.totalorder %s15, 4
      // Predicated region
      $region25: #{tpu_custom_call.1} parent=5 // pred_check
        %p237 = pneg %p236
      $region26: #{tpu_custom_call.1} parent=5 // pred_check_branch
        %239 = sbr.rel (%p237) target = $region28
      $region27: #{tpu_custom_call.1} parent=5 // pred_region
        // Predicated region
        $region29: #{tpu_custom_call.1} parent=27 // pred_check
          %p240 = pneg %p49
        $region30: #{tpu_custom_call.1} parent=27 // pred_check_branch
          %242 = sbr.rel (%p240) target = $region32
        $region31: #{tpu_custom_call.1} parent=27 // pred_region
          %s243 = smul.u32 8, %s23
          %s244 = ssub.s32 18, %s243
          %p245 = scmp.lt.s32.totalorder %s244, 8
          %s246 = scalar_select %p245, %s244, 8
          %s247 = smul.u32 64, %s246
          %s248 = smul.u32 %s247, 3
          %p249 = scmp.lt.s32.totalorder %s22, 1
          %s250 = scalar_select %p249, %s22, 1
          %p251 = scmp.lt.s32.totalorder %s243, 17
          %s252 = scalar_select %p251, %s243, 17
          %s253 = smul.addr %s252, 3
          %s254 = smul.addr %s250, 54
          %s255 = sadd.s32 %s253, %s254
          %s256 = smul.addr %s255, 4
          %s257 = scalar_lea.vmem %s0, %s256
          %s258 = smul.u32 8, %s23
          %s259 = ssub.s32 18, %s258
          %p260 = scmp.lt.s32.totalorder %s259, 8
          %s261 = scalar_select %p260, %s259, 8
          %s262 = smul.u32 64, %s261
          %s263 = smul.u32 %s262, 3
        $region32: #{tpu_custom_call.1} parent=27 // pred_fallthru
          _
        // Predicated region
        $region33: #{tpu_custom_call.1} parent=27 // pred_check
          %p264 = pneg %p81
        $region34: #{tpu_custom_call.1} parent=27 // pred_check_branch
          %266 = sbr.rel (%p264) target = $region36
        $region35: #{tpu_custom_call.1} parent=27 // pred_region
          %s267 = sadd.s32 %s23, 1
          %s268 = smul.u32 %s267, 8
          %p269 = scmp.lt.s32.totalorder %s22, 1
          %s270 = scalar_select %p269, %s22, 1
          %p271 = scmp.lt.s32.totalorder %s268, 17
          %s272 = scalar_select %p271, %s268, 17
          %s273 = smul.addr %s272, 3
          %s274 = smul.addr %s270, 54
          %s275 = sadd.s32 %s273, %s274
          %s276 = smul.addr %s275, 4
          %s277 = scalar_lea.vmem %s1, %s276
          %s278 = sadd.s32 %s23, 1
          %s279 = smul.u32 %s278, 8
        $region36: #{tpu_custom_call.1} parent=27 // pred_fallthru
          _
        // Predicated region
        $region37: #{tpu_custom_call.1} parent=27 // pred_check
          %p280 = pneg %p115
        $region38: #{tpu_custom_call.1} parent=27 // pred_check_branch
          %282 = sbr.rel (%p280) target = $region40
        $region39: #{tpu_custom_call.1} parent=27 // pred_region
          %s283 = sadd.s32 %s23, 1
          %s284 = smul.u32 %s283, 8
          %s285 = sadd.s32 %s284, 1
          %p286 = scmp.lt.s32.totalorder %s22, 1
          %s287 = scalar_select %p286, %s22, 1
          %p288 = scmp.lt.s32.totalorder %s285, 17
          %s289 = scalar_select %p288, %s285, 17
          %s290 = smul.addr %s289, 3
          %s291 = smul.addr %s287, 54
          %s292 = sadd.s32 %s290, %s291
          %s293 = smul.addr %s292, 4
          %s294 = scalar_lea.vmem %s2, %s293
          %s295 = sadd.s32 %s23, 1
          %s296 = smul.u32 %s295, 8
          %s297 = sadd.s32 %s296, 1
        $region40: #{tpu_custom_call.1} parent=27 // pred_fallthru
          _
      $region28: #{tpu_custom_call.1} parent=5 // pred_fallthru
        _
      %p298 = scmp.le.s32.totalorder 1, %s15
      %p299 = scmp.lt.s32.totalorder %s15, 5
      %p300 = pnand %p298, %p299
      %p301 = pneg %p300
      // Predicated region
      $region41: #{tpu_custom_call.1} parent=5 // pred_check
        _
      $region42: #{tpu_custom_call.1} parent=5 // pred_check_branch
        %303 = sbr.rel (%p300) target = $region44
      $region43: #{tpu_custom_call.1} parent=5 // pred_region
        %s304 = ssub.s32 %s15, 1
        %s305 = smul.u32 8, %s25
        %s306 = ssub.s32 18, %s305
        %p307 = scmp.lt.s32.totalorder %s306, 8
        %s308 = scalar_select %p307, %s306, 8
        %s309 = smul.u32 64, %s308
        %s310 = smul.u32 %s309, 3
        %p311 = scmp.lt.s32.totalorder %s24, 1
        %s312 = scalar_select %p311, %s24, 1
        %p313 = scmp.lt.s32.totalorder %s305, 17
        %s314 = scalar_select %p313, %s305, 17
        %s315 = smul.addr %s314, 3
        %s316 = smul.addr %s312, 54
        %s317 = sadd.s32 %s315, %s316
        %s318 = smul.addr %s317, 4
        %s319 = scalar_lea.vmem %s0, %s318
        %p320 = pneg %p55
        %p321 = pneg %p52
        %s322 = sadd.s32 %s25, 1
        %s323 = smul.u32 %s322, 8
        %p324 = scmp.lt.s32.totalorder %s24, 1
        %s325 = scalar_select %p324, %s24, 1
        %p326 = scmp.lt.s32.totalorder %s323, 17
        %s327 = scalar_select %p326, %s323, 17
        %s328 = smul.addr %s327, 3
        %s329 = smul.addr %s325, 54
        %s330 = sadd.s32 %s328, %s329
        %s331 = smul.addr %s330, 4
        %s332 = scalar_lea.vmem %s1, %s331
        %p333 = pneg %p87
        %p334 = pneg %p84
        %s335 = sadd.s32 %s25, 1
        %s336 = smul.u32 %s335, 8
        %s337 = sadd.s32 %s336, 1
        %p338 = scmp.lt.s32.totalorder %s24, 1
        %s339 = scalar_select %p338, %s24, 1
        %p340 = scmp.lt.s32.totalorder %s337, 17
        %s341 = scalar_select %p340, %s337, 17
        %s342 = smul.addr %s341, 3
        %s343 = smul.addr %s339, 54
        %s344 = sadd.s32 %s342, %s343
        %s345 = smul.addr %s344, 4
        %s346 = scalar_lea.vmem %s2, %s345
        %p347 = pneg %p121
        %p348 = pneg %p118
        %p349 = pneg %p142
        %p350 = pneg %p139
        %p351 = pneg %p163
        %p352 = pneg %p160
        %p353 = pneg %p184
        %p354 = pneg %p181
        %p355 = pneg %p212
        %p356 = pneg %p209
        %s357 = sand.u32 %s199, 1
        %s358 = scalar_lea.sflag [#allocation4], %s357
        %s359 = sand.u32 %s199, 1
        %s360 = smul.addr %s359, 128
        %s361 = scalar_lea.vmem [#allocation3], %s360
        %s362 = smul.u32 8, %s25
        %s363 = ssub.s32 18, %s362
        %p364 = scmp.lt.s32.totalorder %s363, 8
        %s365 = scalar_select %p364, %s363, 8
        %s366 = smul.u32 64, %s365
        %s367 = smul.u32 %s366, 3
        %p368 = scmp.lt.s32.totalorder %s24, 1
        %s369 = scalar_select %p368, %s24, 1
        %p370 = scmp.lt.s32.totalorder %s362, 17
        %s371 = scalar_select %p370, %s362, 17
        %s372 = smul.addr %s371, 3
        %s373 = smul.addr %s369, 54
        %s374 = sadd.s32 %s372, %s373
        %s375 = smul.addr %s374, 4
        %s376 = scalar_lea.vmem %s0, %s375
        %s377 = smul.u32 8, %s25
        %s378 = ssub.s32 18, %s377
        %p379 = scmp.lt.s32.totalorder %s378, 8
        %s380 = scalar_select %p379, %s378, 8
        %s381 = smul.u32 64, %s380
        %s382 = smul.u32 %s381, 3
        %s383 = sadd.s32 %s25, 1
        %s384 = smul.u32 %s383, 8
        %p385 = scmp.lt.s32.totalorder %s24, 1
        %s386 = scalar_select %p385, %s24, 1
        %p387 = scmp.lt.s32.totalorder %s384, 17
        %s388 = scalar_select %p387, %s384, 17
        %s389 = smul.addr %s388, 3
        %s390 = smul.addr %s386, 54
        %s391 = sadd.s32 %s389, %s390
        %s392 = smul.addr %s391, 4
        %s393 = scalar_lea.vmem %s1, %s392
        %s394 = sadd.s32 %s25, 1
        %s395 = smul.u32 %s394, 8
        %s396 = sadd.s32 %s25, 1
        %s397 = smul.u32 %s396, 8
        %s398 = sadd.s32 %s397, 1
        %p399 = scmp.lt.s32.totalorder %s24, 1
        %s400 = scalar_select %p399, %s24, 1
        %p401 = scmp.lt.s32.totalorder %s398, 17
        %s402 = scalar_select %p401, %s398, 17
        %s403 = smul.addr %s402, 3
        %s404 = smul.addr %s400, 54
        %s405 = sadd.s32 %s403, %s404
        %s406 = smul.addr %s405, 4
        %s407 = scalar_lea.vmem %s2, %s406
        %s408 = sadd.s32 %s25, 1
        %s409 = smul.u32 %s408, 8
        %s410 = sadd.s32 %s409, 1
        %s411 = smul.u32 8, %s25
        %v413 = vld [vmem:[%s376] sm:$0xf]
        %v414 = vld [vmem:[%s376 + $0x4] sm:$0xf]
        %v415 = vld [vmem:[%s376 + $0x8] sm:$0x1]
        %v416 = vld [vmem:[%s376 + $0xc] sm:$0xf]
        %v417 = vld [vmem:[%s376 + $0x10] sm:$0xf]
        %v418 = vld [vmem:[%s376 + $0x14] sm:$0x1]
        %v419 = vld [vmem:[%s376 + $0x18] sm:$0xf]
        %v420 = vld [vmem:[%s376 + $0x1c] sm:$0xf]
        %v421 = vld [vmem:[%s376 + $0x20] sm:$0x1]
        %v422 = vld [vmem:[%s376 + $0x24] sm:$0xf]
        %v423 = vld [vmem:[%s376 + $0x28] sm:$0xf]
        %v424 = vld [vmem:[%s376 + $0x2c] sm:$0x1]
        %v425 = vld [vmem:[%s376 + $0x30] sm:$0xf]
        %v426 = vld [vmem:[%s376 + $0x34] sm:$0xf]
        %v427 = vld [vmem:[%s376 + $0x38] sm:$0x1]
        %v428 = vld [vmem:[%s376 + $0x3c] sm:$0xf]
        %v429 = vld [vmem:[%s376 + $0x40] sm:$0xf]
        %v430 = vld [vmem:[%s376 + $0x44] sm:$0x1]
        %v431 = vld [vmem:[%s376 + $0x48] sm:$0xf]
        %v432 = vld [vmem:[%s376 + $0x4c] sm:$0xf]
        %v433 = vld [vmem:[%s376 + $0x50] sm:$0x1]
        %v434 = vld [vmem:[%s376 + $0x54] sm:$0xf]
        %v435 = vld [vmem:[%s376 + $0x58] sm:$0xf]
        %v436 = vld [vmem:[%s376 + $0x5c] sm:$0x1]
        %v462 = vunpack.c.l.s4 1966171168
        %v463 = vunpack.c.0.s8 %v462
        %v464 = vlaneseq
        %v465 = vshrl.u32 %v464, 7
        %v466 = vsub.s32 %v463, %v465
        %v467 = vrot.slane %v413, %v466
        %v468 = vcombine.high %v467, %v467
        %v470 = vunpack.c.l.s4 1966171168
        %v471 = vunpack.c.0.s8 %v470
        %v472 = vlaneseq
        %v473 = vshrl.u32 %v472, 7
        %v474 = vsub.s32 %v471, %v473
        %v475 = vrot.slane %v467, %v474
        %v477 = vunpack.c.l.s4 1966171168
        %v478 = vunpack.c.0.s8 %v477
        %v479 = vlaneseq
        %v480 = vshrl.u32 %v479, 7
        %v481 = vsub.s32 %v478, %v480
        %v482 = vrot.slane %v468, %v481
        %v483 = vcombine.high %v475, %v475
        %v484 = vcombine.high %v482, %v482
        %v486 = vunpack.c.l.s4 1966171168
        %v487 = vunpack.c.0.s8 %v486
        %v488 = vlaneseq
        %v489 = vshrl.u32 %v488, 7
        %v490 = vsub.s32 %v487, %v489
        %v491 = vrot.slane %v414, %v490
        %v492 = vcombine.high %v491, %v491
        %v494 = vunpack.c.l.s4 1966171168
        %v495 = vunpack.c.0.s8 %v494
        %v496 = vlaneseq
        %v497 = vshrl.u32 %v496, 7
        %v498 = vsub.s32 %v495, %v497
        %v499 = vrot.slane %v491, %v498
        %v501 = vunpack.c.l.s4 1966171168
        %v502 = vunpack.c.0.s8 %v501
        %v503 = vlaneseq
        %v504 = vshrl.u32 %v503, 7
        %v505 = vsub.s32 %v502, %v504
        %v506 = vrot.slane %v492, %v505
        %v507 = vcombine.high %v499, %v499
        %v508 = vcombine.high %v506, %v506
        %v510 = vunpack.c.l.s4 1966171168
        %v511 = vunpack.c.0.s8 %v510
        %v512 = vlaneseq
        %v513 = vshrl.u32 %v512, 7
        %v514 = vsub.s32 %v511, %v513
        %v515 = vrot.slane %v415, %v514
        %v517 = vunpack.c.l.s4 1966171168
        %v518 = vunpack.c.0.s8 %v517
        %v519 = vlaneseq
        %v520 = vshrl.u32 %v519, 7
        %v521 = vsub.s32 %v518, %v520
        %v522 = vrot.slane %v515, %v521
        %v524 = vunpack.c.l.s4 1966171168
        %v525 = vunpack.c.0.s8 %v524
        %v526 = vlaneseq
        %v527 = vshrl.u32 %v526, 7
        %v528 = vsub.s32 %v525, %v527
        %v529 = vrot.slane %v416, %v528
        %v530 = vcombine.high %v529, %v529
        %v532 = vunpack.c.l.s4 1966171168
        %v533 = vunpack.c.0.s8 %v532
        %v534 = vlaneseq
        %v535 = vshrl.u32 %v534, 7
        %v536 = vsub.s32 %v533, %v535
        %v537 = vrot.slane %v529, %v536
        %v539 = vunpack.c.l.s4 1966171168
        %v540 = vunpack.c.0.s8 %v539
        %v541 = vlaneseq
        %v542 = vshrl.u32 %v541, 7
        %v543 = vsub.s32 %v540, %v542
        %v544 = vrot.slane %v530, %v543
        %v545 = vcombine.high %v537, %v537
        %v546 = vcombine.high %v544, %v544
        %v548 = vunpack.c.l.s4 1966171168
        %v549 = vunpack.c.0.s8 %v548
        %v550 = vlaneseq
        %v551 = vshrl.u32 %v550, 7
        %v552 = vsub.s32 %v549, %v551
        %v553 = vrot.slane %v417, %v552
        %v554 = vcombine.high %v553, %v553
        %v556 = vunpack.c.l.s4 1966171168
        %v557 = vunpack.c.0.s8 %v556
        %v558 = vlaneseq
        %v559 = vshrl.u32 %v558, 7
        %v560 = vsub.s32 %v557, %v559
        %v561 = vrot.slane %v553, %v560
        %v563 = vunpack.c.l.s4 1966171168
        %v564 = vunpack.c.0.s8 %v563
        %v565 = vlaneseq
        %v566 = vshrl.u32 %v565, 7
        %v567 = vsub.s32 %v564, %v566
        %v568 = vrot.slane %v554, %v567
        %v569 = vcombine.high %v561, %v561
        %v570 = vcombine.high %v568, %v568
        %v572 = vunpack.c.l.s4 1966171168
        %v573 = vunpack.c.0.s8 %v572
        %v574 = vlaneseq
        %v575 = vshrl.u32 %v574, 7
        %v576 = vsub.s32 %v573, %v575
        %v577 = vrot.slane %v418, %v576
        %v579 = vunpack.c.l.s4 1966171168
        %v580 = vunpack.c.0.s8 %v579
        %v581 = vlaneseq
        %v582 = vshrl.u32 %v581, 7
        %v583 = vsub.s32 %v580, %v582
        %v584 = vrot.slane %v577, %v583
        %v586 = vunpack.c.l.s4 1966171168
        %v587 = vunpack.c.0.s8 %v586
        %v588 = vlaneseq
        %v589 = vshrl.u32 %v588, 7
        %v590 = vsub.s32 %v587, %v589
        %v591 = vrot.slane %v419, %v590
        %v592 = vcombine.high %v591, %v591
        %v594 = vunpack.c.l.s4 1966171168
        %v595 = vunpack.c.0.s8 %v594
        %v596 = vlaneseq
        %v597 = vshrl.u32 %v596, 7
        %v598 = vsub.s32 %v595, %v597
        %v599 = vrot.slane %v591, %v598
        %v601 = vunpack.c.l.s4 1966171168
        %v602 = vunpack.c.0.s8 %v601
        %v603 = vlaneseq
        %v604 = vshrl.u32 %v603, 7
        %v605 = vsub.s32 %v602, %v604
        %v606 = vrot.slane %v592, %v605
        %v607 = vcombine.high %v599, %v599
        %v608 = vcombine.high %v606, %v606
        %v610 = vunpack.c.l.s4 1966171168
        %v611 = vunpack.c.0.s8 %v610
        %v612 = vlaneseq
        %v613 = vshrl.u32 %v612, 7
        %v614 = vsub.s32 %v611, %v613
        %v615 = vrot.slane %v420, %v614
        %v616 = vcombine.high %v615, %v615
        %v618 = vunpack.c.l.s4 1966171168
        %v619 = vunpack.c.0.s8 %v618
        %v620 = vlaneseq
        %v621 = vshrl.u32 %v620, 7
        %v622 = vsub.s32 %v619, %v621
        %v623 = vrot.slane %v615, %v622
        %v625 = vunpack.c.l.s4 1966171168
        %v626 = vunpack.c.0.s8 %v625
        %v627 = vlaneseq
        %v628 = vshrl.u32 %v627, 7
        %v629 = vsub.s32 %v626, %v628
        %v630 = vrot.slane %v616, %v629
        %v631 = vcombine.high %v623, %v623
        %v632 = vcombine.high %v630, %v630
        %v634 = vunpack.c.l.s4 1966171168
        %v635 = vunpack.c.0.s8 %v634
        %v636 = vlaneseq
        %v637 = vshrl.u32 %v636, 7
        %v638 = vsub.s32 %v635, %v637
        %v639 = vrot.slane %v421, %v638
        %v641 = vunpack.c.l.s4 1966171168
        %v642 = vunpack.c.0.s8 %v641
        %v643 = vlaneseq
        %v644 = vshrl.u32 %v643, 7
        %v645 = vsub.s32 %v642, %v644
        %v646 = vrot.slane %v639, %v645
        %v648 = vunpack.c.l.s4 1966171168
        %v649 = vunpack.c.0.s8 %v648
        %v650 = vlaneseq
        %v651 = vshrl.u32 %v650, 7
        %v652 = vsub.s32 %v649, %v651
        %v653 = vrot.slane %v422, %v652
        %v654 = vcombine.high %v653, %v653
        %v656 = vunpack.c.l.s4 1966171168
        %v657 = vunpack.c.0.s8 %v656
        %v658 = vlaneseq
        %v659 = vshrl.u32 %v658, 7
        %v660 = vsub.s32 %v657, %v659
        %v661 = vrot.slane %v653, %v660
        %v663 = vunpack.c.l.s4 1966171168
        %v664 = vunpack.c.0.s8 %v663
        %v665 = vlaneseq
        %v666 = vshrl.u32 %v665, 7
        %v667 = vsub.s32 %v664, %v666
        %v668 = vrot.slane %v654, %v667
        %v669 = vcombine.high %v661, %v661
        %v670 = vcombine.high %v668, %v668
        %v672 = vunpack.c.l.s4 1966171168
        %v673 = vunpack.c.0.s8 %v672
        %v674 = vlaneseq
        %v675 = vshrl.u32 %v674, 7
        %v676 = vsub.s32 %v673, %v675
        %v677 = vrot.slane %v423, %v676
        %v678 = vcombine.high %v677, %v677
        %v680 = vunpack.c.l.s4 1966171168
        %v681 = vunpack.c.0.s8 %v680
        %v682 = vlaneseq
        %v683 = vshrl.u32 %v682, 7
        %v684 = vsub.s32 %v681, %v683
        %v685 = vrot.slane %v677, %v684
        %v687 = vunpack.c.l.s4 1966171168
        %v688 = vunpack.c.0.s8 %v687
        %v689 = vlaneseq
        %v690 = vshrl.u32 %v689, 7
        %v691 = vsub.s32 %v688, %v690
        %v692 = vrot.slane %v678, %v691
        %v693 = vcombine.high %v685, %v685
        %v694 = vcombine.high %v692, %v692
        %v696 = vunpack.c.l.s4 1966171168
        %v697 = vunpack.c.0.s8 %v696
        %v698 = vlaneseq
        %v699 = vshrl.u32 %v698, 7
        %v700 = vsub.s32 %v697, %v699
        %v701 = vrot.slane %v424, %v700
        %v703 = vunpack.c.l.s4 1966171168
        %v704 = vunpack.c.0.s8 %v703
        %v705 = vlaneseq
        %v706 = vshrl.u32 %v705, 7
        %v707 = vsub.s32 %v704, %v706
        %v708 = vrot.slane %v701, %v707
        %v710 = vunpack.c.l.s4 1966171168
        %v711 = vunpack.c.0.s8 %v710
        %v712 = vlaneseq
        %v713 = vshrl.u32 %v712, 7
        %v714 = vsub.s32 %v711, %v713
        %v715 = vrot.slane %v425, %v714
        %v716 = vcombine.high %v715, %v715
        %v718 = vunpack.c.l.s4 1966171168
        %v719 = vunpack.c.0.s8 %v718
        %v720 = vlaneseq
        %v721 = vshrl.u32 %v720, 7
        %v722 = vsub.s32 %v719, %v721
        %v723 = vrot.slane %v715, %v722
        %v725 = vunpack.c.l.s4 1966171168
        %v726 = vunpack.c.0.s8 %v725
        %v727 = vlaneseq
        %v728 = vshrl.u32 %v727, 7
        %v729 = vsub.s32 %v726, %v728
        %v730 = vrot.slane %v716, %v729
        %v731 = vcombine.high %v723, %v723
        %v732 = vcombine.high %v730, %v730
        %v734 = vunpack.c.l.s4 1966171168
        %v735 = vunpack.c.0.s8 %v734
        %v736 = vlaneseq
        %v737 = vshrl.u32 %v736, 7
        %v738 = vsub.s32 %v735, %v737
        %v739 = vrot.slane %v426, %v738
        %v740 = vcombine.high %v739, %v739
        %v742 = vunpack.c.l.s4 1966171168
        %v743 = vunpack.c.0.s8 %v742
        %v744 = vlaneseq
        %v745 = vshrl.u32 %v744, 7
        %v746 = vsub.s32 %v743, %v745
        %v747 = vrot.slane %v739, %v746
        %v749 = vunpack.c.l.s4 1966171168
        %v750 = vunpack.c.0.s8 %v749
        %v751 = vlaneseq
        %v752 = vshrl.u32 %v751, 7
        %v753 = vsub.s32 %v750, %v752
        %v754 = vrot.slane %v740, %v753
        %v755 = vcombine.high %v747, %v747
        %v756 = vcombine.high %v754, %v754
        %v758 = vunpack.c.l.s4 1966171168
        %v759 = vunpack.c.0.s8 %v758
        %v760 = vlaneseq
        %v761 = vshrl.u32 %v760, 7
        %v762 = vsub.s32 %v759, %v761
        %v763 = vrot.slane %v427, %v762
        %v765 = vunpack.c.l.s4 1966171168
        %v766 = vunpack.c.0.s8 %v765
        %v767 = vlaneseq
        %v768 = vshrl.u32 %v767, 7
        %v769 = vsub.s32 %v766, %v768
        %v770 = vrot.slane %v763, %v769
        %v772 = vunpack.c.l.s4 1966171168
        %v773 = vunpack.c.0.s8 %v772
        %v774 = vlaneseq
        %v775 = vshrl.u32 %v774, 7
        %v776 = vsub.s32 %v773, %v775
        %v777 = vrot.slane %v428, %v776
        %v778 = vcombine.high %v777, %v777
        %v780 = vunpack.c.l.s4 1966171168
        %v781 = vunpack.c.0.s8 %v780
        %v782 = vlaneseq
        %v783 = vshrl.u32 %v782, 7
        %v784 = vsub.s32 %v781, %v783
        %v785 = vrot.slane %v777, %v784
        %v787 = vunpack.c.l.s4 1966171168
        %v788 = vunpack.c.0.s8 %v787
        %v789 = vlaneseq
        %v790 = vshrl.u32 %v789, 7
        %v791 = vsub.s32 %v788, %v790
        %v792 = vrot.slane %v778, %v791
        %v793 = vcombine.high %v785, %v785
        %v794 = vcombine.high %v792, %v792
        %v796 = vunpack.c.l.s4 1966171168
        %v797 = vunpack.c.0.s8 %v796
        %v798 = vlaneseq
        %v799 = vshrl.u32 %v798, 7
        %v800 = vsub.s32 %v797, %v799
        %v801 = vrot.slane %v429, %v800
        %v802 = vcombine.high %v801, %v801
        %v804 = vunpack.c.l.s4 1966171168
        %v805 = vunpack.c.0.s8 %v804
        %v806 = vlaneseq
        %v807 = vshrl.u32 %v806, 7
        %v808 = vsub.s32 %v805, %v807
        %v809 = vrot.slane %v801, %v808
        %v811 = vunpack.c.l.s4 1966171168
        %v812 = vunpack.c.0.s8 %v811
        %v813 = vlaneseq
        %v814 = vshrl.u32 %v813, 7
        %v815 = vsub.s32 %v812, %v814
        %v816 = vrot.slane %v802, %v815
        %v817 = vcombine.high %v809, %v809
        %v818 = vcombine.high %v816, %v816
        %v820 = vunpack.c.l.s4 1966171168
        %v821 = vunpack.c.0.s8 %v820
        %v822 = vlaneseq
        %v823 = vshrl.u32 %v822, 7
        %v824 = vsub.s32 %v821, %v823
        %v825 = vrot.slane %v430, %v824
        %v827 = vunpack.c.l.s4 1966171168
        %v828 = vunpack.c.0.s8 %v827
        %v829 = vlaneseq
        %v830 = vshrl.u32 %v829, 7
        %v831 = vsub.s32 %v828, %v830
        %v832 = vrot.slane %v825, %v831
        %v834 = vunpack.c.l.s4 1966171168
        %v835 = vunpack.c.0.s8 %v834
        %v836 = vlaneseq
        %v837 = vshrl.u32 %v836, 7
        %v838 = vsub.s32 %v835, %v837
        %v839 = vrot.slane %v431, %v838
        %v840 = vcombine.high %v839, %v839
        %v842 = vunpack.c.l.s4 1966171168
        %v843 = vunpack.c.0.s8 %v842
        %v844 = vlaneseq
        %v845 = vshrl.u32 %v844, 7
        %v846 = vsub.s32 %v843, %v845
        %v847 = vrot.slane %v839, %v846
        %v849 = vunpack.c.l.s4 1966171168
        %v850 = vunpack.c.0.s8 %v849
        %v851 = vlaneseq
        %v852 = vshrl.u32 %v851, 7
        %v853 = vsub.s32 %v850, %v852
        %v854 = vrot.slane %v840, %v853
        %v855 = vcombine.high %v847, %v847
        %v856 = vcombine.high %v854, %v854
        %v858 = vunpack.c.l.s4 1966171168
        %v859 = vunpack.c.0.s8 %v858
        %v860 = vlaneseq
        %v861 = vshrl.u32 %v860, 7
        %v862 = vsub.s32 %v859, %v861
        %v863 = vrot.slane %v432, %v862
        %v864 = vcombine.high %v863, %v863
        %v866 = vunpack.c.l.s4 1966171168
        %v867 = vunpack.c.0.s8 %v866
        %v868 = vlaneseq
        %v869 = vshrl.u32 %v868, 7
        %v870 = vsub.s32 %v867, %v869
        %v871 = vrot.slane %v863, %v870
        %v873 = vunpack.c.l.s4 1966171168
        %v874 = vunpack.c.0.s8 %v873
        %v875 = vlaneseq
        %v876 = vshrl.u32 %v875, 7
        %v877 = vsub.s32 %v874, %v876
        %v878 = vrot.slane %v864, %v877
        %v879 = vcombine.high %v871, %v871
        %v880 = vcombine.high %v878, %v878
        %v882 = vunpack.c.l.s4 1966171168
        %v883 = vunpack.c.0.s8 %v882
        %v884 = vlaneseq
        %v885 = vshrl.u32 %v884, 7
        %v886 = vsub.s32 %v883, %v885
        %v887 = vrot.slane %v433, %v886
        %v889 = vunpack.c.l.s4 1966171168
        %v890 = vunpack.c.0.s8 %v889
        %v891 = vlaneseq
        %v892 = vshrl.u32 %v891, 7
        %v893 = vsub.s32 %v890, %v892
        %v894 = vrot.slane %v887, %v893
        %v896 = vunpack.c.l.s4 1966171168
        %v897 = vunpack.c.0.s8 %v896
        %v898 = vlaneseq
        %v899 = vshrl.u32 %v898, 7
        %v900 = vsub.s32 %v897, %v899
        %v901 = vrot.slane %v434, %v900
        %v902 = vcombine.high %v901, %v901
        %v904 = vunpack.c.l.s4 1966171168
        %v905 = vunpack.c.0.s8 %v904
        %v906 = vlaneseq
        %v907 = vshrl.u32 %v906, 7
        %v908 = vsub.s32 %v905, %v907
        %v909 = vrot.slane %v901, %v908
        %v911 = vunpack.c.l.s4 1966171168
        %v912 = vunpack.c.0.s8 %v911
        %v913 = vlaneseq
        %v914 = vshrl.u32 %v913, 7
        %v915 = vsub.s32 %v912, %v914
        %v916 = vrot.slane %v902, %v915
        %v917 = vcombine.high %v909, %v909
        %v918 = vcombine.high %v916, %v916
        %v920 = vunpack.c.l.s4 1966171168
        %v921 = vunpack.c.0.s8 %v920
        %v922 = vlaneseq
        %v923 = vshrl.u32 %v922, 7
        %v924 = vsub.s32 %v921, %v923
        %v925 = vrot.slane %v435, %v924
        %v926 = vcombine.high %v925, %v925
        %v928 = vunpack.c.l.s4 1966171168
        %v929 = vunpack.c.0.s8 %v928
        %v930 = vlaneseq
        %v931 = vshrl.u32 %v930, 7
        %v932 = vsub.s32 %v929, %v931
        %v933 = vrot.slane %v925, %v932
        %v935 = vunpack.c.l.s4 1966171168
        %v936 = vunpack.c.0.s8 %v935
        %v937 = vlaneseq
        %v938 = vshrl.u32 %v937, 7
        %v939 = vsub.s32 %v936, %v938
        %v940 = vrot.slane %v926, %v939
        %v941 = vcombine.high %v933, %v933
        %v942 = vcombine.high %v940, %v940
        %v944 = vunpack.c.l.s4 1966171168
        %v945 = vunpack.c.0.s8 %v944
        %v946 = vlaneseq
        %v947 = vshrl.u32 %v946, 7
        %v948 = vsub.s32 %v945, %v947
        %v949 = vrot.slane %v436, %v948
        %v951 = vunpack.c.l.s4 1966171168
        %v952 = vunpack.c.0.s8 %v951
        %v953 = vlaneseq
        %v954 = vshrl.u32 %v953, 7
        %v955 = vsub.s32 %v952, %v954
        %v956 = vrot.slane %v949, %v955
        %v957 = vcombine.low %v475, %v483
        %v958 = vcombine.low %v482, %v484
        %v960 = vunpack.c.l.s4 1935823168
        %v961 = vunpack.c.0.s8 %v960
        %v962 = vlaneseq
        %v963 = vshrl.u32 %v962, 7
        %v964 = vsub.s32 %v961, %v963
        %v965 = vrot.slane %v957, %v964
        %v967 = vunpack.c.l.s4 1935823168
        %v968 = vunpack.c.0.s8 %v967
        %v969 = vlaneseq
        %v970 = vshrl.u32 %v969, 7
        %v971 = vsub.s32 %v968, %v970
        %v972 = vrot.slane %v958, %v971
        %v973 = vcombine.low %v965, %v972
        %v975 = vunpack.c.l.s4 1935823168
        %v976 = vunpack.c.0.s8 %v975
        %v977 = vlaneseq
        %v978 = vshrl.u32 %v977, 7
        %v979 = vsub.s32 %v976, %v978
        %v980 = vrot.slane %v973, %v979
        %v981 = vcombine.low %v499, %v507
        %v982 = vcombine.low %v506, %v508
        %v984 = vunpack.c.l.s4 1935823168
        %v985 = vunpack.c.0.s8 %v984
        %v986 = vlaneseq
        %v987 = vshrl.u32 %v986, 7
        %v988 = vsub.s32 %v985, %v987
        %v989 = vrot.slane %v981, %v988
        %v991 = vunpack.c.l.s4 1935823168
        %v992 = vunpack.c.0.s8 %v991
        %v993 = vlaneseq
        %v994 = vshrl.u32 %v993, 7
        %v995 = vsub.s32 %v992, %v994
        %v996 = vrot.slane %v982, %v995
        %v997 = vcombine.low %v989, %v996
        %v999 = vunpack.c.l.s4 1935823168
        %v1000 = vunpack.c.0.s8 %v999
        %v1001 = vlaneseq
        %v1002 = vshrl.u32 %v1001, 7
        %v1003 = vsub.s32 %v1000, %v1002
        %v1004 = vrot.slane %v997, %v1003
        %v1005 = vcombine.low %v522, %v544
        %v1006 = vcombine.low %v537, %v545
        %v1008 = vunpack.c.l.s4 1935823168
        %v1009 = vunpack.c.0.s8 %v1008
        %v1010 = vlaneseq
        %v1011 = vshrl.u32 %v1010, 7
        %v1012 = vsub.s32 %v1009, %v1011
        %v1013 = vrot.slane %v1005, %v1012
        %v1015 = vunpack.c.l.s4 1935823168
        %v1016 = vunpack.c.0.s8 %v1015
        %v1017 = vlaneseq
        %v1018 = vshrl.u32 %v1017, 7
        %v1019 = vsub.s32 %v1016, %v1018
        %v1020 = vrot.slane %v1006, %v1019
        %v1021 = vcombine.low %v1013, %v1020
        %v1023 = vunpack.c.l.s4 1935823168
        %v1024 = vunpack.c.0.s8 %v1023
        %v1025 = vlaneseq
        %v1026 = vshrl.u32 %v1025, 7
        %v1027 = vsub.s32 %v1024, %v1026
        %v1028 = vrot.slane %v1021, %v1027
        %v1029 = vcombine.low %v546, %v568
        %v1030 = vcombine.low %v561, %v569
        %v1032 = vunpack.c.l.s4 1935823168
        %v1033 = vunpack.c.0.s8 %v1032
        %v1034 = vlaneseq
        %v1035 = vshrl.u32 %v1034, 7
        %v1036 = vsub.s32 %v1033, %v1035
        %v1037 = vrot.slane %v1029, %v1036
        %v1039 = vunpack.c.l.s4 1935823168
        %v1040 = vunpack.c.0.s8 %v1039
        %v1041 = vlaneseq
        %v1042 = vshrl.u32 %v1041, 7
        %v1043 = vsub.s32 %v1040, %v1042
        %v1044 = vrot.slane %v1030, %v1043
        %v1045 = vcombine.low %v1037, %v1044
        %v1047 = vunpack.c.l.s4 1935823168
        %v1048 = vunpack.c.0.s8 %v1047
        %v1049 = vlaneseq
        %v1050 = vshrl.u32 %v1049, 7
        %v1051 = vsub.s32 %v1048, %v1050
        %v1052 = vrot.slane %v1045, %v1051
        %v1053 = vcombine.low %v570, %v599
        %v1054 = vcombine.low %v584, %v606
        %v1056 = vunpack.c.l.s4 1935823168
        %v1057 = vunpack.c.0.s8 %v1056
        %v1058 = vlaneseq
        %v1059 = vshrl.u32 %v1058, 7
        %v1060 = vsub.s32 %v1057, %v1059
        %v1061 = vrot.slane %v1053, %v1060
        %v1063 = vunpack.c.l.s4 1935823168
        %v1064 = vunpack.c.0.s8 %v1063
        %v1065 = vlaneseq
        %v1066 = vshrl.u32 %v1065, 7
        %v1067 = vsub.s32 %v1064, %v1066
        %v1068 = vrot.slane %v1054, %v1067
        %v1069 = vcombine.low %v1061, %v1068
        %v1071 = vunpack.c.l.s4 1935823168
        %v1072 = vunpack.c.0.s8 %v1071
        %v1073 = vlaneseq
        %v1074 = vshrl.u32 %v1073, 7
        %v1075 = vsub.s32 %v1072, %v1074
        %v1076 = vrot.slane %v1069, %v1075
        %v1077 = vcombine.low %v607, %v623
        %v1078 = vcombine.low %v608, %v630
        %v1080 = vunpack.c.l.s4 1935823168
        %v1081 = vunpack.c.0.s8 %v1080
        %v1082 = vlaneseq
        %v1083 = vshrl.u32 %v1082, 7
        %v1084 = vsub.s32 %v1081, %v1083
        %v1085 = vrot.slane %v1077, %v1084
        %v1087 = vunpack.c.l.s4 1935823168
        %v1088 = vunpack.c.0.s8 %v1087
        %v1089 = vlaneseq
        %v1090 = vshrl.u32 %v1089, 7
        %v1091 = vsub.s32 %v1088, %v1090
        %v1092 = vrot.slane %v1078, %v1091
        %v1093 = vcombine.low %v1085, %v1092
        %v1095 = vunpack.c.l.s4 1935823168
        %v1096 = vunpack.c.0.s8 %v1095
        %v1097 = vlaneseq
        %v1098 = vshrl.u32 %v1097, 7
        %v1099 = vsub.s32 %v1096, %v1098
        %v1100 = vrot.slane %v1093, %v1099
        %v1101 = vcombine.low %v631, %v646
        %v1102 = vcombine.low %v632, %v661
        %v1104 = vunpack.c.l.s4 1935823168
        %v1105 = vunpack.c.0.s8 %v1104
        %v1106 = vlaneseq
        %v1107 = vshrl.u32 %v1106, 7
        %v1108 = vsub.s32 %v1105, %v1107
        %v1109 = vrot.slane %v1101, %v1108
        %v1111 = vunpack.c.l.s4 1935823168
        %v1112 = vunpack.c.0.s8 %v1111
        %v1113 = vlaneseq
        %v1114 = vshrl.u32 %v1113, 7
        %v1115 = vsub.s32 %v1112, %v1114
        %v1116 = vrot.slane %v1102, %v1115
        %v1117 = vcombine.low %v1109, %v1116
        %v1119 = vunpack.c.l.s4 1935823168
        %v1120 = vunpack.c.0.s8 %v1119
        %v1121 = vlaneseq
        %v1122 = vshrl.u32 %v1121, 7
        %v1123 = vsub.s32 %v1120, %v1122
        %v1124 = vrot.slane %v1117, %v1123
        %v1125 = vcombine.low %v668, %v670
        %v1126 = vcombine.low %v669, %v685
        %v1128 = vunpack.c.l.s4 1935823168
        %v1129 = vunpack.c.0.s8 %v1128
        %v1130 = vlaneseq
        %v1131 = vshrl.u32 %v1130, 7
        %v1132 = vsub.s32 %v1129, %v1131
        %v1133 = vrot.slane %v1125, %v1132
        %v1135 = vunpack.c.l.s4 1935823168
        %v1136 = vunpack.c.0.s8 %v1135
        %v1137 = vlaneseq
        %v1138 = vshrl.u32 %v1137, 7
        %v1139 = vsub.s32 %v1136, %v1138
        %v1140 = vrot.slane %v1126, %v1139
        %v1141 = vcombine.low %v1133, %v1140
        %v1143 = vunpack.c.l.s4 1935823168
        %v1144 = vunpack.c.0.s8 %v1143
        %v1145 = vlaneseq
        %v1146 = vshrl.u32 %v1145, 7
        %v1147 = vsub.s32 %v1144, %v1146
        %v1148 = vrot.slane %v1141, %v1147
        %v1149 = vcombine.low %v692, %v694
        %v1150 = vcombine.low %v693, %v708
        %v1152 = vunpack.c.l.s4 1935823168
        %v1153 = vunpack.c.0.s8 %v1152
        %v1154 = vlaneseq
        %v1155 = vshrl.u32 %v1154, 7
        %v1156 = vsub.s32 %v1153, %v1155
        %v1157 = vrot.slane %v1149, %v1156
        %v1159 = vunpack.c.l.s4 1935823168
        %v1160 = vunpack.c.0.s8 %v1159
        %v1161 = vlaneseq
        %v1162 = vshrl.u32 %v1161, 7
        %v1163 = vsub.s32 %v1160, %v1162
        %v1164 = vrot.slane %v1150, %v1163
        %v1165 = vcombine.low %v1157, %v1164
        %v1167 = vunpack.c.l.s4 1935823168
        %v1168 = vunpack.c.0.s8 %v1167
        %v1169 = vlaneseq
        %v1170 = vshrl.u32 %v1169, 7
        %v1171 = vsub.s32 %v1168, %v1170
        %v1172 = vrot.slane %v1165, %v1171
        %v1173 = vcombine.low %v723, %v731
        %v1174 = vcombine.low %v730, %v732
        %v1176 = vunpack.c.l.s4 1935823168
        %v1177 = vunpack.c.0.s8 %v1176
        %v1178 = vlaneseq
        %v1179 = vshrl.u32 %v1178, 7
        %v1180 = vsub.s32 %v1177, %v1179
        %v1181 = vrot.slane %v1173, %v1180
        %v1183 = vunpack.c.l.s4 1935823168
        %v1184 = vunpack.c.0.s8 %v1183
        %v1185 = vlaneseq
        %v1186 = vshrl.u32 %v1185, 7
        %v1187 = vsub.s32 %v1184, %v1186
        %v1188 = vrot.slane %v1174, %v1187
        %v1189 = vcombine.low %v1181, %v1188
        %v1191 = vunpack.c.l.s4 1935823168
        %v1192 = vunpack.c.0.s8 %v1191
        %v1193 = vlaneseq
        %v1194 = vshrl.u32 %v1193, 7
        %v1195 = vsub.s32 %v1192, %v1194
        %v1196 = vrot.slane %v1189, %v1195
        %v1197 = vcombine.low %v747, %v755
        %v1198 = vcombine.low %v754, %v756
        %v1200 = vunpack.c.l.s4 1935823168
        %v1201 = vunpack.c.0.s8 %v1200
        %v1202 = vlaneseq
        %v1203 = vshrl.u32 %v1202, 7
        %v1204 = vsub.s32 %v1201, %v1203
        %v1205 = vrot.slane %v1197, %v1204
        %v1207 = vunpack.c.l.s4 1935823168
        %v1208 = vunpack.c.0.s8 %v1207
        %v1209 = vlaneseq
        %v1210 = vshrl.u32 %v1209, 7
        %v1211 = vsub.s32 %v1208, %v1210
        %v1212 = vrot.slane %v1198, %v1211
        %v1213 = vcombine.low %v1205, %v1212
        %v1215 = vunpack.c.l.s4 1935823168
        %v1216 = vunpack.c.0.s8 %v1215
        %v1217 = vlaneseq
        %v1218 = vshrl.u32 %v1217, 7
        %v1219 = vsub.s32 %v1216, %v1218
        %v1220 = vrot.slane %v1213, %v1219
        %v1221 = vcombine.low %v770, %v792
        %v1222 = vcombine.low %v785, %v793
        %v1224 = vunpack.c.l.s4 1935823168
        %v1225 = vunpack.c.0.s8 %v1224
        %v1226 = vlaneseq
        %v1227 = vshrl.u32 %v1226, 7
        %v1228 = vsub.s32 %v1225, %v1227
        %v1229 = vrot.slane %v1221, %v1228
        %v1231 = vunpack.c.l.s4 1935823168
        %v1232 = vunpack.c.0.s8 %v1231
        %v1233 = vlaneseq
        %v1234 = vshrl.u32 %v1233, 7
        %v1235 = vsub.s32 %v1232, %v1234
        %v1236 = vrot.slane %v1222, %v1235
        %v1237 = vcombine.low %v1229, %v1236
        %v1239 = vunpack.c.l.s4 1935823168
        %v1240 = vunpack.c.0.s8 %v1239
        %v1241 = vlaneseq
        %v1242 = vshrl.u32 %v1241, 7
        %v1243 = vsub.s32 %v1240, %v1242
        %v1244 = vrot.slane %v1237, %v1243
        %v1245 = vcombine.low %v794, %v816
        %v1246 = vcombine.low %v809, %v817
        %v1248 = vunpack.c.l.s4 1935823168
        %v1249 = vunpack.c.0.s8 %v1248
        %v1250 = vlaneseq
        %v1251 = vshrl.u32 %v1250, 7
        %v1252 = vsub.s32 %v1249, %v1251
        %v1253 = vrot.slane %v1245, %v1252
        %v1255 = vunpack.c.l.s4 1935823168
        %v1256 = vunpack.c.0.s8 %v1255
        %v1257 = vlaneseq
        %v1258 = vshrl.u32 %v1257, 7
        %v1259 = vsub.s32 %v1256, %v1258
        %v1260 = vrot.slane %v1246, %v1259
        %v1261 = vcombine.low %v1253, %v1260
        %v1263 = vunpack.c.l.s4 1935823168
        %v1264 = vunpack.c.0.s8 %v1263
        %v1265 = vlaneseq
        %v1266 = vshrl.u32 %v1265, 7
        %v1267 = vsub.s32 %v1264, %v1266
        %v1268 = vrot.slane %v1261, %v1267
        %v1269 = vcombine.low %v818, %v847
        %v1270 = vcombine.low %v832, %v854
        %v1272 = vunpack.c.l.s4 1935823168
        %v1273 = vunpack.c.0.s8 %v1272
        %v1274 = vlaneseq
        %v1275 = vshrl.u32 %v1274, 7
        %v1276 = vsub.s32 %v1273, %v1275
        %v1277 = vrot.slane %v1269, %v1276
        %v1279 = vunpack.c.l.s4 1935823168
        %v1280 = vunpack.c.0.s8 %v1279
        %v1281 = vlaneseq
        %v1282 = vshrl.u32 %v1281, 7
        %v1283 = vsub.s32 %v1280, %v1282
        %v1284 = vrot.slane %v1270, %v1283
        %v1285 = vcombine.low %v1277, %v1284
        %v1287 = vunpack.c.l.s4 1935823168
        %v1288 = vunpack.c.0.s8 %v1287
        %v1289 = vlaneseq
        %v1290 = vshrl.u32 %v1289, 7
        %v1291 = vsub.s32 %v1288, %v1290
        %v1292 = vrot.slane %v1285, %v1291
        %v1293 = vcombine.low %v855, %v871
        %v1294 = vcombine.low %v856, %v878
        %v1296 = vunpack.c.l.s4 1935823168
        %v1297 = vunpack.c.0.s8 %v1296
        %v1298 = vlaneseq
        %v1299 = vshrl.u32 %v1298, 7
        %v1300 = vsub.s32 %v1297, %v1299
        %v1301 = vrot.slane %v1293, %v1300
        %v1303 = vunpack.c.l.s4 1935823168
        %v1304 = vunpack.c.0.s8 %v1303
        %v1305 = vlaneseq
        %v1306 = vshrl.u32 %v1305, 7
        %v1307 = vsub.s32 %v1304, %v1306
        %v1308 = vrot.slane %v1294, %v1307
        %v1309 = vcombine.low %v1301, %v1308
        %v1311 = vunpack.c.l.s4 1935823168
        %v1312 = vunpack.c.0.s8 %v1311
        %v1313 = vlaneseq
        %v1314 = vshrl.u32 %v1313, 7
        %v1315 = vsub.s32 %v1312, %v1314
        %v1316 = vrot.slane %v1309, %v1315
        %v1317 = vcombine.low %v879, %v894
        %v1318 = vcombine.low %v880, %v909
        %v1320 = vunpack.c.l.s4 1935823168
        %v1321 = vunpack.c.0.s8 %v1320
        %v1322 = vlaneseq
        %v1323 = vshrl.u32 %v1322, 7
        %v1324 = vsub.s32 %v1321, %v1323
        %v1325 = vrot.slane %v1317, %v1324
        %v1327 = vunpack.c.l.s4 1935823168
        %v1328 = vunpack.c.0.s8 %v1327
        %v1329 = vlaneseq
        %v1330 = vshrl.u32 %v1329, 7
        %v1331 = vsub.s32 %v1328, %v1330
        %v1332 = vrot.slane %v1318, %v1331
        %v1333 = vcombine.low %v1325, %v1332
        %v1335 = vunpack.c.l.s4 1935823168
        %v1336 = vunpack.c.0.s8 %v1335
        %v1337 = vlaneseq
        %v1338 = vshrl.u32 %v1337, 7
        %v1339 = vsub.s32 %v1336, %v1338
        %v1340 = vrot.slane %v1333, %v1339
        %v1341 = vcombine.low %v916, %v918
        %v1342 = vcombine.low %v917, %v933
        %v1344 = vunpack.c.l.s4 1935823168
        %v1345 = vunpack.c.0.s8 %v1344
        %v1346 = vlaneseq
        %v1347 = vshrl.u32 %v1346, 7
        %v1348 = vsub.s32 %v1345, %v1347
        %v1349 = vrot.slane %v1341, %v1348
        %v1351 = vunpack.c.l.s4 1935823168
        %v1352 = vunpack.c.0.s8 %v1351
        %v1353 = vlaneseq
        %v1354 = vshrl.u32 %v1353, 7
        %v1355 = vsub.s32 %v1352, %v1354
        %v1356 = vrot.slane %v1342, %v1355
        %v1357 = vcombine.low %v1349, %v1356
        %v1359 = vunpack.c.l.s4 1935823168
        %v1360 = vunpack.c.0.s8 %v1359
        %v1361 = vlaneseq
        %v1362 = vshrl.u32 %v1361, 7
        %v1363 = vsub.s32 %v1360, %v1362
        %v1364 = vrot.slane %v1357, %v1363
        %v1365 = vcombine.low %v940, %v942
        %v1366 = vcombine.low %v941, %v956
        %v1368 = vunpack.c.l.s4 1935823168
        %v1369 = vunpack.c.0.s8 %v1368
        %v1370 = vlaneseq
        %v1371 = vshrl.u32 %v1370, 7
        %v1372 = vsub.s32 %v1369, %v1371
        %v1373 = vrot.slane %v1365, %v1372
        %v1375 = vunpack.c.l.s4 1935823168
        %v1376 = vunpack.c.0.s8 %v1375
        %v1377 = vlaneseq
        %v1378 = vshrl.u32 %v1377, 7
        %v1379 = vsub.s32 %v1376, %v1378
        %v1380 = vrot.slane %v1366, %v1379
        %v1381 = vcombine.low %v1373, %v1380
        %v1383 = vunpack.c.l.s4 1935823168
        %v1384 = vunpack.c.0.s8 %v1383
        %v1385 = vlaneseq
        %v1386 = vshrl.u32 %v1385, 7
        %v1387 = vsub.s32 %v1384, %v1386
        %v1388 = vrot.slane %v1381, %v1387
        %vm1407 = vcmask 27648
        %1408 = vst.msk [vmem:[#allocation2] sm:$0xf] %vm1407, %v980
        %1409 = vst.msk [vmem:[#allocation2 + $0x4] sm:$0xf] %vm1407, %v1004
        %1410 = vst.msk [vmem:[#allocation2 + $0x8] sm:$0xf] %vm1407, %v1028
        %1411 = vst.msk [vmem:[#allocation2 + $0xc] sm:$0xf] %vm1407, %v1052
        %1412 = vst.msk [vmem:[#allocation2 + $0x10] sm:$0xf] %vm1407, %v1076
        %1413 = vst.msk [vmem:[#allocation2 + $0x14] sm:$0xf] %vm1407, %v1100
        %1414 = vst.msk [vmem:[#allocation2 + $0x18] sm:$0xf] %vm1407, %v1124
        %1415 = vst.msk [vmem:[#allocation2 + $0x1c] sm:$0xf] %vm1407, %v1148
        %1416 = vst.msk [vmem:[#allocation2 + $0x20] sm:$0xf] %vm1407, %v1172
        %1417 = vst.msk [vmem:[#allocation2 + $0x24] sm:$0xf] %vm1407, %v1196
        %1418 = vst.msk [vmem:[#allocation2 + $0x28] sm:$0xf] %vm1407, %v1220
        %1419 = vst.msk [vmem:[#allocation2 + $0x2c] sm:$0xf] %vm1407, %v1244
        %1420 = vst.msk [vmem:[#allocation2 + $0x30] sm:$0xf] %vm1407, %v1268
        %1421 = vst.msk [vmem:[#allocation2 + $0x34] sm:$0xf] %vm1407, %v1292
        %1422 = vst.msk [vmem:[#allocation2 + $0x38] sm:$0xf] %vm1407, %v1316
        %1423 = vst.msk [vmem:[#allocation2 + $0x3c] sm:$0xf] %vm1407, %v1340
        %1424 = vst.msk [vmem:[#allocation2 + $0x40] sm:$0xf] %vm1407, %v1364
        %1425 = vst.msk [vmem:[#allocation2 + $0x44] sm:$0xf] %vm1407, %v1388
        %v1426 = vld [vmem:[%s393] sm:$0xf]
        %v1427 = vld [vmem:[%s393 + $0x4] sm:$0xf]
        %v1428 = vld [vmem:[%s393 + $0x8] sm:$0x1]
        %1429 = vst.msk [vmem:[#allocation2 + $0x48] sm:$0xf] %vm1407, %v1426
        %1430 = vst.msk [vmem:[#allocation2 + $0x4c] sm:$0xf] %vm1407, %v1427
        %vm1431 = vcmask 24576
        %1432 = vst.msk [vmem:[#allocation2 + $0x50] sm:$0x1] %vm1431, %v1428
        %v1433 = vld [vmem:[%s407] sm:$0xf]
        %v1434 = vld [vmem:[%s407 + $0x4] sm:$0xf]
        %v1435 = vld [vmem:[%s407 + $0x8] sm:$0x1]
        %vm1439 = vcmask 1040384
        %vm1440 = vcmask 1044484
        %vm1441 = vmor %vm1439, %vm1440
        %v1442 = vrot.slane %v1433, 7
        %v1443 = vrot.slane %v1442, 4
        %v1444 = vrot.slane %v1434, 7
        %v1445 = vsel %vm1441, %v1443, %v1444
        %v1446 = vrot.slane %v1444, 4
        %v1447 = vrot.slane %v1435, 7
        %v1448 = vsel %vm1441, %v1446, %v1447
        %vm1452 = vcmask 27649
        %1453 = vst.msk [vmem:[#allocation2 + $0x50] sm:$0xe] %vm1452, %v1442
        %1454 = vst.msk [vmem:[#allocation2 + $0x54] sm:$0xf] %vm1407, %v1445
        %vm1455 = vcmask 25600
        %1456 = vst.msk [vmem:[#allocation2 + $0x58] sm:$0x3] %vm1455, %v1448
        %vm1457 = vcmask 27650
        %1458 = vst.msk [vmem:[#allocation2 + $0x58] sm:$0xc] %vm1457, 0
        %1459 = vst.msk [vmem:[#allocation2 + $0x5c] sm:$0x3] %vm1455, 0
        %v1460 = vld [vmem:[#allocation2] sm:$0xf]
        %v1461 = vld [vmem:[#allocation2 + $0x4] sm:$0xf]
        %v1462 = vld [vmem:[#allocation2 + $0x8] sm:$0xf]
        %v1463 = vld [vmem:[#allocation2 + $0xc] sm:$0xf]
        %v1464 = vld [vmem:[#allocation2 + $0x10] sm:$0xf]
        %v1465 = vld [vmem:[#allocation2 + $0x14] sm:$0xf]
        %v1466 = vld [vmem:[#allocation2 + $0x18] sm:$0xf]
        %v1467 = vld [vmem:[#allocation2 + $0x1c] sm:$0xf]
        %v1468 = vld [vmem:[#allocation2 + $0x20] sm:$0xf]
        %v1469 = vld [vmem:[#allocation2 + $0x24] sm:$0xf]
        %v1470 = vld [vmem:[#allocation2 + $0x28] sm:$0xf]
        %v1471 = vld [vmem:[#allocation2 + $0x2c] sm:$0xf]
        %v1472 = vld [vmem:[#allocation2 + $0x30] sm:$0xf]
        %v1473 = vld [vmem:[#allocation2 + $0x34] sm:$0xf]
        %v1474 = vld [vmem:[#allocation2 + $0x38] sm:$0xf]
        %v1475 = vld [vmem:[#allocation2 + $0x3c] sm:$0xf]
        %v1476 = vld [vmem:[#allocation2 + $0x40] sm:$0xf]
        %v1477 = vld [vmem:[#allocation2 + $0x44] sm:$0xf]
        %v1478 = vld [vmem:[%s3] sm:$0x3]
        %v1479 = vld [vmem:[#allocation2 + $0x48] sm:$0x1]
        %s1480 = scalar_lea.vmem %s3, 2
        %v1481 = vld [vmem:[%s1480] sm:$0x3]
        %v1501 = vunpack.c.l.b16 %v1460
        %v1502 = vunpack.c.l.b16 %v1461
        %v1503 = vunpack.c.l.b16 %v1462
        %v1504 = vunpack.c.l.b16 %v1463
        %v1505 = vunpack.c.l.b16 %v1464
        %v1506 = vunpack.c.l.b16 %v1465
        %v1507 = vunpack.c.l.b16 %v1466
        %v1508 = vunpack.c.l.b16 %v1467
        %v1509 = vunpack.c.l.b16 %v1468
        %v1510 = vunpack.c.l.b16 %v1469
        %v1511 = vunpack.c.l.b16 %v1470
        %v1512 = vunpack.c.l.b16 %v1471
        %v1513 = vunpack.c.l.b16 %v1472
        %v1514 = vunpack.c.l.b16 %v1473
        %v1515 = vunpack.c.l.b16 %v1474
        %v1516 = vunpack.c.l.b16 %v1475
        %v1517 = vunpack.c.l.b16 %v1476
        %v1518 = vunpack.c.l.b16 %v1477
        %v1519 = vunpack.c.l.b16 %v1479
        %v1520 = vpack.c.b16 %v1502, %v1501
        %v1521 = vpack.c.b16 %v1504, %v1503
        %v1522 = vpack.c.b16 %v1506, %v1505
        %v1523 = vpack.c.b16 %v1508, %v1507
        %v1524 = vpack.c.b16 %v1510, %v1509
        %v1525 = vpack.c.b16 %v1512, %v1511
        %v1526 = vpack.c.b16 %v1514, %v1513
        %v1527 = vpack.c.b16 %v1516, %v1515
        %v1528 = vpack.c.b16 %v1518, %v1517
        %v1529 = vpack.c.b16 %v1519, %v1519
        %vm1530 = vsmask.f32 7424
        %v1532 = vshrl.u32 %v1520, 16
        %v1534 = vshll.u32 %v1520, 16
        %v1536 = vrot.slane %v1534, 1
        %v1537 = vor.u32 %v1532, %v1536
        %v1539 = vshll.u32 %v1521, 16
        %v1541 = vrot.slane %v1539, 1
        %v1542 = vsel %vm1530, %v1537, %v1541
        %v1543 = vshrl.u32 %v1521, 16
        %v1545 = vor.u32 %v1543, %v1541
        %v1547 = vshll.u32 %v1522, 16
        %v1549 = vrot.slane %v1547, 1
        %v1550 = vsel %vm1530, %v1545, %v1549
        %v1551 = vshrl.u32 %v1522, 16
        %v1553 = vor.u32 %v1551, %v1549
        %v1555 = vshll.u32 %v1523, 16
        %v1557 = vrot.slane %v1555, 1
        %v1558 = vsel %vm1530, %v1553, %v1557
        %v1559 = vshrl.u32 %v1523, 16
        %v1561 = vor.u32 %v1559, %v1557
        %v1563 = vshll.u32 %v1524, 16
        %v1565 = vrot.slane %v1563, 1
        %v1566 = vsel %vm1530, %v1561, %v1565
        %v1567 = vshrl.u32 %v1524, 16
        %v1569 = vor.u32 %v1567, %v1565
        %v1571 = vshll.u32 %v1525, 16
        %v1573 = vrot.slane %v1571, 1
        %v1574 = vsel %vm1530, %v1569, %v1573
        %v1575 = vshrl.u32 %v1525, 16
        %v1577 = vor.u32 %v1575, %v1573
        %v1579 = vshll.u32 %v1526, 16
        %v1581 = vrot.slane %v1579, 1
        %v1582 = vsel %vm1530, %v1577, %v1581
        %v1583 = vshrl.u32 %v1526, 16
        %v1585 = vor.u32 %v1583, %v1581
        %v1587 = vshll.u32 %v1527, 16
        %v1589 = vrot.slane %v1587, 1
        %v1590 = vsel %vm1530, %v1585, %v1589
        %v1591 = vshrl.u32 %v1527, 16
        %v1593 = vor.u32 %v1591, %v1589
        %v1595 = vshll.u32 %v1528, 16
        %v1597 = vrot.slane %v1595, 1
        %v1598 = vsel %vm1530, %v1593, %v1597
        %v1599 = vshrl.u32 %v1528, 16
        %v1601 = vor.u32 %v1599, %v1597
        %v1603 = vshll.u32 %v1529, 16
        %v1605 = vrot.slane %v1603, 1
        %v1606 = vsel %vm1530, %v1601, %v1605
        %vm1607 = vcmask 31744
        %v1609 = vsel %vm1607, %v1542, 0
        %v1612 = vsel %vm1607, %v1550, 0
        %v1615 = vsel %vm1607, %v1558, 0
        %v1618 = vsel %vm1607, %v1566, 0
        %v1621 = vsel %vm1607, %v1574, 0
        %v1624 = vsel %vm1607, %v1582, 0
        %v1627 = vsel %vm1607, %v1590, 0
        %v1630 = vsel %vm1607, %v1598, 0
        %v1633 = vsel %vm1607, %v1606, 0
        %vm1635 = vcmask 1041408
        %v1637 = vsel %vm1635, %v1481, 0
        %1639 = vmatprep.subr.bf16.mxu0 0
        %1640 = vmatpush1.bf16.msra.mxu0 0
        %1641 = vmatprep.subr.bf16.mxu0 0
        %1642 = vmatpush1.bf16.msra.mxu0 0
        %1643 = vmatprep.subr.bf16.mxu0 0
        %1644 = vmatpush1.bf16.msra.mxu0 0
        %1645 = vmatprep.subr.bf16.mxu0 0
        %1646 = vmatpush1.bf16.msra.mxu0 0
        %1647 = vmatprep.subr.bf16.mxu0 0
        %1648 = vmatpush1.bf16.msra.mxu0 0
        %1649 = vmatprep.subr.bf16.mxu0 0
        %1650 = vmatpush1.bf16.msra.mxu0 0
        %1651 = vmatprep.subr.bf16.mxu0 0
        %1652 = vmatpush1.bf16.msra.mxu0 0
        %1653 = vmatprep.subr.bf16.mxu0 0
        %1654 = vmatpush1.bf16.msra.mxu0 %v1637
        %1655 = vmatprep.subr.bf16.mxu0 0
        %1656 = vmatpush2.bf16.msra.mxu0 0
        %1657 = vmatprep.subr.bf16.mxu0 0
        %1658 = vmatpush2.bf16.msra.mxu0 0
        %1659 = vmatprep.subr.bf16.mxu0 0
        %1660 = vmatpush2.bf16.msra.mxu0 0
        %1661 = vmatprep.subr.bf16.mxu0 0
        %1662 = vmatpush2.bf16.msra.mxu0 0
        %1663 = vmatprep.subr.bf16.mxu0 0
        %1664 = vmatpush2.bf16.msra.mxu0 0
        %1665 = vmatprep.subr.bf16.mxu0 0
        %1666 = vmatpush2.bf16.msra.mxu0 0
        %1667 = vmatprep.subr.bf16.mxu0 0
        %1668 = vmatpush2.bf16.msra.mxu0 0
        %1669 = vmatprep.subr.bf16.mxu0 0
        %1670 = vmatpush2.bf16.msra.mxu0 0
        %1671 = vmatprep.mubr.bf16.mxu0 0
        %1672 = vmatmul.mubr.bf16.gmra.mxu0 %v1609
        %v1673 = vpop.f32.mrf.mxu0
        %v1674 = vadd.f32 0.0, %v1673
        %v1675 = vpop.f32.mrf.mxu0
        %v1676 = vpop.f32.mrf.mxu0
        %v1677 = vadd.f32 0.0, %v1676
        %v1678 = vpop.f32.mrf.mxu0
        %1679 = vmatprep.mubr.bf16.mxu0 0
        %1680 = vmatmul.mubr.bf16.gmra.mxu0 %v1612
        %v1681 = vpop.f32.mrf.mxu0
        %v1682 = vadd.f32 0.0, %v1681
        %v1683 = vpop.f32.mrf.mxu0
        %v1684 = vpop.f32.mrf.mxu0
        %v1685 = vadd.f32 0.0, %v1684
        %v1686 = vpop.f32.mrf.mxu0
        %1687 = vmatprep.mubr.bf16.mxu0 0
        %1688 = vmatmul.mubr.bf16.gmra.mxu0 %v1615
        %v1689 = vpop.f32.mrf.mxu0
        %v1690 = vadd.f32 0.0, %v1689
        %v1691 = vpop.f32.mrf.mxu0
        %v1692 = vpop.f32.mrf.mxu0
        %v1693 = vadd.f32 0.0, %v1692
        %v1694 = vpop.f32.mrf.mxu0
        %1695 = vmatprep.mubr.bf16.mxu0 0
        %1696 = vmatmul.mubr.bf16.gmra.mxu0 %v1618
        %v1697 = vpop.f32.mrf.mxu0
        %v1698 = vadd.f32 0.0, %v1697
        %v1699 = vpop.f32.mrf.mxu0
        %v1700 = vpop.f32.mrf.mxu0
        %v1701 = vadd.f32 0.0, %v1700
        %v1702 = vpop.f32.mrf.mxu0
        %1703 = vmatprep.mubr.bf16.mxu0 0
        %1704 = vmatmul.mubr.bf16.gmra.mxu0 %v1621
        %v1705 = vpop.f32.mrf.mxu0
        %v1706 = vadd.f32 0.0, %v1705
        %v1707 = vpop.f32.mrf.mxu0
        %v1708 = vpop.f32.mrf.mxu0
        %v1709 = vadd.f32 0.0, %v1708
        %v1710 = vpop.f32.mrf.mxu0
        %1711 = vmatprep.mubr.bf16.mxu0 0
        %1712 = vmatmul.mubr.bf16.gmra.mxu0 %v1624
        %v1713 = vpop.f32.mrf.mxu0
        %v1714 = vadd.f32 0.0, %v1713
        %v1715 = vpop.f32.mrf.mxu0
        %v1716 = vpop.f32.mrf.mxu0
        %v1717 = vadd.f32 0.0, %v1716
        %v1718 = vpop.f32.mrf.mxu0
        %1719 = vmatprep.mubr.bf16.mxu0 0
        %1720 = vmatmul.mubr.bf16.gmra.mxu0 %v1627
        %v1721 = vpop.f32.mrf.mxu0
        %v1722 = vadd.f32 0.0, %v1721
        %v1723 = vpop.f32.mrf.mxu0
        %v1724 = vpop.f32.mrf.mxu0
        %v1725 = vadd.f32 0.0, %v1724
        %v1726 = vpop.f32.mrf.mxu0
        %1727 = vmatprep.mubr.bf16.mxu0 0
        %1728 = vmatmul.mubr.bf16.gmra.mxu0 %v1630
        %v1729 = vpop.f32.mrf.mxu0
        %v1730 = vadd.f32 0.0, %v1729
        %v1731 = vpop.f32.mrf.mxu0
        %v1732 = vpop.f32.mrf.mxu0
        %v1733 = vadd.f32 0.0, %v1732
        %v1734 = vpop.f32.mrf.mxu0
        %1735 = vmatprep.mubr.bf16.mxu0 0
        %1736 = vmatmul.mubr.bf16.gmra.mxu0 %v1633
        %v1737 = vpop.f32.mrf.mxu0
        %v1738 = vadd.f32 0.0, %v1737
        %v1739 = vpop.f32.mrf.mxu0
        %v1740 = vpop.f32.mrf.mxu0
        %v1741 = vadd.f32 0.0, %v1740
        %v1742 = vpop.f32.mrf.mxu0
        %1743 = vdwg.mxu0
        %v1744 = vsel %vm1607, %v1520, 0
        %v1746 = vsel %vm1607, %v1521, 0
        %v1748 = vsel %vm1607, %v1522, 0
        %v1750 = vsel %vm1607, %v1523, 0
        %v1752 = vsel %vm1607, %v1524, 0
        %v1754 = vsel %vm1607, %v1525, 0
        %v1756 = vsel %vm1607, %v1526, 0
        %v1758 = vsel %vm1607, %v1527, 0
        %v1760 = vsel %vm1607, %v1528, 0
        %v1763 = vsel %vm1635, %v1478, 0
        %1765 = vmatprep.subr.bf16.mxu0 0
        %1766 = vmatpush1.bf16.msra.mxu0 0
        %1767 = vmatprep.subr.bf16.mxu0 0
        %1768 = vmatpush1.bf16.msra.mxu0 0
        %1769 = vmatprep.subr.bf16.mxu0 0
        %1770 = vmatpush1.bf16.msra.mxu0 0
        %1771 = vmatprep.subr.bf16.mxu0 0
        %1772 = vmatpush1.bf16.msra.mxu0 0
        %1773 = vmatprep.subr.bf16.mxu0 0
        %1774 = vmatpush1.bf16.msra.mxu0 0
        %1775 = vmatprep.subr.bf16.mxu0 0
        %1776 = vmatpush1.bf16.msra.mxu0 0
        %1777 = vmatprep.subr.bf16.mxu0 0
        %1778 = vmatpush1.bf16.msra.mxu0 0
        %1779 = vmatprep.subr.bf16.mxu0 0
        %1780 = vmatpush1.bf16.msra.mxu0 %v1763
        %1781 = vmatprep.subr.bf16.mxu0 0
        %1782 = vmatpush2.bf16.msra.mxu0 0
        %1783 = vmatprep.subr.bf16.mxu0 0
        %1784 = vmatpush2.bf16.msra.mxu0 0
        %1785 = vmatprep.subr.bf16.mxu0 0
        %1786 = vmatpush2.bf16.msra.mxu0 0
        %1787 = vmatprep.subr.bf16.mxu0 0
        %1788 = vmatpush2.bf16.msra.mxu0 0
        %1789 = vmatprep.subr.bf16.mxu0 0
        %1790 = vmatpush2.bf16.msra.mxu0 0
        %1791 = vmatprep.subr.bf16.mxu0 0
        %1792 = vmatpush2.bf16.msra.mxu0 0
        %1793 = vmatprep.subr.bf16.mxu0 0
        %1794 = vmatpush2.bf16.msra.mxu0 0
        %1795 = vmatprep.subr.bf16.mxu0 0
        %1796 = vmatpush2.bf16.msra.mxu0 0
        %1797 = vmatprep.mubr.bf16.mxu0 0
        %1798 = vmatmul.mubr.bf16.gmra.mxu0 %v1744
        %v1799 = vpop.f32.mrf.mxu0
        %v1800 = vadd.f32 %v1674, %v1799
        %v1801 = vpop.f32.mrf.mxu0
        %v1802 = vpop.f32.mrf.mxu0
        %v1803 = vadd.f32 %v1677, %v1802
        %v1804 = vpop.f32.mrf.mxu0
        %1805 = vmatprep.mubr.bf16.mxu0 0
        %1806 = vmatmul.mubr.bf16.gmra.mxu0 %v1746
        %v1807 = vpop.f32.mrf.mxu0
        %v1808 = vadd.f32 %v1682, %v1807
        %v1809 = vpop.f32.mrf.mxu0
        %v1810 = vpop.f32.mrf.mxu0
        %v1811 = vadd.f32 %v1685, %v1810
        %v1812 = vpop.f32.mrf.mxu0
        %1813 = vmatprep.mubr.bf16.mxu0 0
        %1814 = vmatmul.mubr.bf16.gmra.mxu0 %v1748
        %v1815 = vpop.f32.mrf.mxu0
        %v1816 = vadd.f32 %v1690, %v1815
        %v1817 = vpop.f32.mrf.mxu0
        %v1818 = vpop.f32.mrf.mxu0
        %v1819 = vadd.f32 %v1693, %v1818
        %v1820 = vpop.f32.mrf.mxu0
        %1821 = vmatprep.mubr.bf16.mxu0 0
        %1822 = vmatmul.mubr.bf16.gmra.mxu0 %v1750
        %v1823 = vpop.f32.mrf.mxu0
        %v1824 = vadd.f32 %v1698, %v1823
        %v1825 = vpop.f32.mrf.mxu0
        %v1826 = vpop.f32.mrf.mxu0
        %v1827 = vadd.f32 %v1701, %v1826
        %v1828 = vpop.f32.mrf.mxu0
        %1829 = vmatprep.mubr.bf16.mxu0 0
        %1830 = vmatmul.mubr.bf16.gmra.mxu0 %v1752
        %v1831 = vpop.f32.mrf.mxu0
        %v1832 = vadd.f32 %v1706, %v1831
        %v1833 = vpop.f32.mrf.mxu0
        %v1834 = vpop.f32.mrf.mxu0
        %v1835 = vadd.f32 %v1709, %v1834
        %v1836 = vpop.f32.mrf.mxu0
        %1837 = vmatprep.mubr.bf16.mxu0 0
        %1838 = vmatmul.mubr.bf16.gmra.mxu0 %v1754
        %v1839 = vpop.f32.mrf.mxu0
        %v1840 = vadd.f32 %v1714, %v1839
        %v1841 = vpop.f32.mrf.mxu0
        %v1842 = vpop.f32.mrf.mxu0
        %v1843 = vadd.f32 %v1717, %v1842
        %v1844 = vpop.f32.mrf.mxu0
        %1845 = vmatprep.mubr.bf16.mxu0 0
        %1846 = vmatmul.mubr.bf16.gmra.mxu0 %v1756
        %v1847 = vpop.f32.mrf.mxu0
        %v1848 = vadd.f32 %v1722, %v1847
        %v1849 = vpop.f32.mrf.mxu0
        %v1850 = vpop.f32.mrf.mxu0
        %v1851 = vadd.f32 %v1725, %v1850
        %v1852 = vpop.f32.mrf.mxu0
        %1853 = vmatprep.mubr.bf16.mxu0 0
        %1854 = vmatmul.mubr.bf16.gmra.mxu0 %v1758
        %v1855 = vpop.f32.mrf.mxu0
        %v1856 = vadd.f32 %v1730, %v1855
        %v1857 = vpop.f32.mrf.mxu0
        %v1858 = vpop.f32.mrf.mxu0
        %v1859 = vadd.f32 %v1733, %v1858
        %v1860 = vpop.f32.mrf.mxu0
        %1861 = vmatprep.mubr.bf16.mxu0 0
        %1862 = vmatmul.mubr.bf16.gmra.mxu0 %v1760
        %v1863 = vpop.f32.mrf.mxu0
        %v1864 = vadd.f32 %v1738, %v1863
        %v1865 = vpop.f32.mrf.mxu0
        %v1866 = vpop.f32.mrf.mxu0
        %v1867 = vadd.f32 %v1741, %v1866
        %v1868 = vpop.f32.mrf.mxu0
        %1869 = vdwg.mxu0
        %v1870 = vld [vmem:[#allocation2] sm:$0xe]
        %s1871 = scalar_lea.vmem %s3, 4
        %v1872 = vld [vmem:[%s1871] sm:$0x3]
        %v1874 = vunpack.c.l.b16 %v1870
        %v1875 = vpack.c.b16 %v1502, %v1874
        %vm1876 = vcmask 1046528
        %v1877 = vrot.slane %v1875, 1
        %v1878 = vrot.slane %v1521, 1
        %v1879 = vsel %vm1876, %v1877, %v1878
        %v1880 = vrot.slane %v1522, 1
        %v1881 = vsel %vm1876, %v1878, %v1880
        %v1882 = vrot.slane %v1523, 1
        %v1883 = vsel %vm1876, %v1880, %v1882
        %v1884 = vrot.slane %v1524, 1
        %v1885 = vsel %vm1876, %v1882, %v1884
        %v1886 = vrot.slane %v1525, 1
        %v1887 = vsel %vm1876, %v1884, %v1886
        %v1888 = vrot.slane %v1526, 1
        %v1889 = vsel %vm1876, %v1886, %v1888
        %v1890 = vrot.slane %v1527, 1
        %v1891 = vsel %vm1876, %v1888, %v1890
        %v1892 = vrot.slane %v1528, 1
        %v1893 = vsel %vm1876, %v1890, %v1892
        %v1894 = vrot.slane %v1529, 1
        %v1895 = vsel %vm1876, %v1892, %v1894
        %v1897 = vsel %vm1607, %v1879, 0
        %v1900 = vsel %vm1607, %v1881, 0
        %v1903 = vsel %vm1607, %v1883, 0
        %v1906 = vsel %vm1607, %v1885, 0
        %v1909 = vsel %vm1607, %v1887, 0
        %v1912 = vsel %vm1607, %v1889, 0
        %v1915 = vsel %vm1607, %v1891, 0
        %v1918 = vsel %vm1607, %v1893, 0
        %v1921 = vsel %vm1607, %v1895, 0
        %v1924 = vsel %vm1635, %v1872, 0
        %1926 = vmatprep.subr.bf16.mxu0 0
        %1927 = vmatpush1.bf16.msra.mxu0 0
        %1928 = vmatprep.subr.bf16.mxu0 0
        %1929 = vmatpush1.bf16.msra.mxu0 0
        %1930 = vmatprep.subr.bf16.mxu0 0
        %1931 = vmatpush1.bf16.msra.mxu0 0
        %1932 = vmatprep.subr.bf16.mxu0 0
        %1933 = vmatpush1.bf16.msra.mxu0 0
        %1934 = vmatprep.subr.bf16.mxu0 0
        %1935 = vmatpush1.bf16.msra.mxu0 0
        %1936 = vmatprep.subr.bf16.mxu0 0
        %1937 = vmatpush1.bf16.msra.mxu0 0
        %1938 = vmatprep.subr.bf16.mxu0 0
        %1939 = vmatpush1.bf16.msra.mxu0 0
        %1940 = vmatprep.subr.bf16.mxu0 0
        %1941 = vmatpush1.bf16.msra.mxu0 %v1924
        %1942 = vmatprep.subr.bf16.mxu0 0
        %1943 = vmatpush2.bf16.msra.mxu0 0
        %1944 = vmatprep.subr.bf16.mxu0 0
        %1945 = vmatpush2.bf16.msra.mxu0 0
        %1946 = vmatprep.subr.bf16.mxu0 0
        %1947 = vmatpush2.bf16.msra.mxu0 0
        %1948 = vmatprep.subr.bf16.mxu0 0
        %1949 = vmatpush2.bf16.msra.mxu0 0
        %1950 = vmatprep.subr.bf16.mxu0 0
        %1951 = vmatpush2.bf16.msra.mxu0 0
        %1952 = vmatprep.subr.bf16.mxu0 0
        %1953 = vmatpush2.bf16.msra.mxu0 0
        %1954 = vmatprep.subr.bf16.mxu0 0
        %1955 = vmatpush2.bf16.msra.mxu0 0
        %1956 = vmatprep.subr.bf16.mxu0 0
        %1957 = vmatpush2.bf16.msra.mxu0 0
        %1958 = vmatprep.mubr.bf16.mxu0 0
        %1959 = vmatmul.mubr.bf16.gmra.mxu0 %v1897
        %v1960 = vpop.f32.mrf.mxu0
        %v1961 = vadd.f32 0.0, %v1960
        %v1962 = vpop.f32.mrf.mxu0
        %v1963 = vpop.f32.mrf.mxu0
        %v1964 = vadd.f32 0.0, %v1963
        %v1965 = vpop.f32.mrf.mxu0
        %1966 = vmatprep.mubr.bf16.mxu0 0
        %1967 = vmatmul.mubr.bf16.gmra.mxu0 %v1900
        %v1968 = vpop.f32.mrf.mxu0
        %v1969 = vadd.f32 0.0, %v1968
        %v1970 = vpop.f32.mrf.mxu0
        %v1971 = vpop.f32.mrf.mxu0
        %v1972 = vadd.f32 0.0, %v1971
        %v1973 = vpop.f32.mrf.mxu0
        %1974 = vmatprep.mubr.bf16.mxu0 0
        %1975 = vmatmul.mubr.bf16.gmra.mxu0 %v1903
        %v1976 = vpop.f32.mrf.mxu0
        %v1977 = vadd.f32 0.0, %v1976
        %v1978 = vpop.f32.mrf.mxu0
        %v1979 = vpop.f32.mrf.mxu0
        %v1980 = vadd.f32 0.0, %v1979
        %v1981 = vpop.f32.mrf.mxu0
        %1982 = vmatprep.mubr.bf16.mxu0 0
        %1983 = vmatmul.mubr.bf16.gmra.mxu0 %v1906
        %v1984 = vpop.f32.mrf.mxu0
        %v1985 = vadd.f32 0.0, %v1984
        %v1986 = vpop.f32.mrf.mxu0
        %v1987 = vpop.f32.mrf.mxu0
        %v1988 = vadd.f32 0.0, %v1987
        %v1989 = vpop.f32.mrf.mxu0
        %1990 = vmatprep.mubr.bf16.mxu0 0
        %1991 = vmatmul.mubr.bf16.gmra.mxu0 %v1909
        %v1992 = vpop.f32.mrf.mxu0
        %v1993 = vadd.f32 0.0, %v1992
        %v1994 = vpop.f32.mrf.mxu0
        %v1995 = vpop.f32.mrf.mxu0
        %v1996 = vadd.f32 0.0, %v1995
        %v1997 = vpop.f32.mrf.mxu0
        %1998 = vmatprep.mubr.bf16.mxu0 0
        %1999 = vmatmul.mubr.bf16.gmra.mxu0 %v1912
        %v2000 = vpop.f32.mrf.mxu0
        %v2001 = vadd.f32 0.0, %v2000
        %v2002 = vpop.f32.mrf.mxu0
        %v2003 = vpop.f32.mrf.mxu0
        %v2004 = vadd.f32 0.0, %v2003
        %v2005 = vpop.f32.mrf.mxu0
        %2006 = vmatprep.mubr.bf16.mxu0 0
        %2007 = vmatmul.mubr.bf16.gmra.mxu0 %v1915
        %v2008 = vpop.f32.mrf.mxu0
        %v2009 = vadd.f32 0.0, %v2008
        %v2010 = vpop.f32.mrf.mxu0
        %v2011 = vpop.f32.mrf.mxu0
        %v2012 = vadd.f32 0.0, %v2011
        %v2013 = vpop.f32.mrf.mxu0
        %2014 = vmatprep.mubr.bf16.mxu0 0
        %2015 = vmatmul.mubr.bf16.gmra.mxu0 %v1918
        %v2016 = vpop.f32.mrf.mxu0
        %v2017 = vadd.f32 0.0, %v2016
        %v2018 = vpop.f32.mrf.mxu0
        %v2019 = vpop.f32.mrf.mxu0
        %v2020 = vadd.f32 0.0, %v2019
        %v2021 = vpop.f32.mrf.mxu0
        %2022 = vmatprep.mubr.bf16.mxu0 0
        %2023 = vmatmul.mubr.bf16.gmra.mxu0 %v1921
        %v2024 = vpop.f32.mrf.mxu0
        %v2025 = vadd.f32 0.0, %v2024
        %v2026 = vpop.f32.mrf.mxu0
        %v2027 = vpop.f32.mrf.mxu0
        %v2028 = vadd.f32 0.0, %v2027
        %v2029 = vpop.f32.mrf.mxu0
        %2030 = vdwg.mxu0
        %v2031 = vadd.f32 %v1800, %v1961
        %v2032 = vadd.f32 %v1803, %v1964
        %v2033 = vadd.f32 %v1808, %v1969
        %v2034 = vadd.f32 %v1811, %v1972
        %v2035 = vadd.f32 %v1816, %v1977
        %v2036 = vadd.f32 %v1819, %v1980
        %v2037 = vadd.f32 %v1824, %v1985
        %v2038 = vadd.f32 %v1827, %v1988
        %v2039 = vadd.f32 %v1832, %v1993
        %v2040 = vadd.f32 %v1835, %v1996
        %v2041 = vadd.f32 %v1840, %v2001
        %v2042 = vadd.f32 %v1843, %v2004
        %v2043 = vadd.f32 %v1848, %v2009
        %v2044 = vadd.f32 %v1851, %v2012
        %v2045 = vadd.f32 %v1856, %v2017
        %v2046 = vadd.f32 %v1859, %v2020
        %v2047 = vadd.f32 %v1864, %v2025
        %v2048 = vadd.f32 %v1867, %v2028
        %v2049 = vld [vmem:[#allocation2 + $0x8] sm:$0xe]
        %v2050 = vld [vmem:[#allocation2 + $0xc] sm:$0xf]
        %v2051 = vld [vmem:[#allocation2 + $0x10] sm:$0xf]
        %v2052 = vld [vmem:[#allocation2 + $0x14] sm:$0xf]
        %v2053 = vld [vmem:[#allocation2 + $0x18] sm:$0xf]
        %v2054 = vld [vmem:[#allocation2 + $0x1c] sm:$0xf]
        %v2055 = vld [vmem:[#allocation2 + $0x20] sm:$0xf]
        %v2056 = vld [vmem:[#allocation2 + $0x24] sm:$0xf]
        %v2057 = vld [vmem:[#allocation2 + $0x28] sm:$0xf]
        %v2058 = vld [vmem:[#allocation2 + $0x2c] sm:$0xf]
        %v2059 = vld [vmem:[#allocation2 + $0x30] sm:$0xf]
        %v2060 = vld [vmem:[#allocation2 + $0x34] sm:$0xf]
        %v2061 = vld [vmem:[#allocation2 + $0x38] sm:$0xf]
        %v2062 = vld [vmem:[#allocation2 + $0x3c] sm:$0xf]
        %v2063 = vld [vmem:[#allocation2 + $0x40] sm:$0xf]
        %v2064 = vld [vmem:[#allocation2 + $0x44] sm:$0xf]
        %v2065 = vld [vmem:[#allocation2 + $0x48] sm:$0xf]
        %v2066 = vld [vmem:[#allocation2 + $0x4c] sm:$0xf]
        %v2067 = vld [vmem:[#allocation2 + $0x50] sm:$0x1]
        %s2068 = scalar_lea.vmem %s3, 6
        %v2069 = vld [vmem:[%s2068] sm:$0x3]
        %v2089 = vunpack.c.l.b16 %v2049
        %v2090 = vunpack.c.l.b16 %v2050
        %v2091 = vunpack.c.l.b16 %v2051
        %v2092 = vunpack.c.l.b16 %v2052
        %v2093 = vunpack.c.l.b16 %v2053
        %v2094 = vunpack.c.l.b16 %v2054
        %v2095 = vunpack.c.l.b16 %v2055
        %v2096 = vunpack.c.l.b16 %v2056
        %v2097 = vunpack.c.l.b16 %v2057
        %v2098 = vunpack.c.l.b16 %v2058
        %v2099 = vunpack.c.l.b16 %v2059
        %v2100 = vunpack.c.l.b16 %v2060
        %v2101 = vunpack.c.l.b16 %v2061
        %v2102 = vunpack.c.l.b16 %v2062
        %v2103 = vunpack.c.l.b16 %v2063
        %v2104 = vunpack.c.l.b16 %v2064
        %v2105 = vunpack.c.l.b16 %v2065
        %v2106 = vunpack.c.l.b16 %v2066
        %v2107 = vunpack.c.l.b16 %v2067
        %v2108 = vpack.c.b16 %v2090, %v2089
        %v2109 = vpack.c.b16 %v2092, %v2091
        %v2110 = vpack.c.b16 %v2094, %v2093
        %v2111 = vpack.c.b16 %v2096, %v2095
        %v2112 = vpack.c.b16 %v2098, %v2097
        %v2113 = vpack.c.b16 %v2100, %v2099
        %v2114 = vpack.c.b16 %v2102, %v2101
        %v2115 = vpack.c.b16 %v2104, %v2103
        %v2116 = vpack.c.b16 %v2106, %v2105
        %v2117 = vpack.c.b16 %v2107, %v2107
        %v2118 = vrot.slane %v2108, 1
        %v2119 = vrot.slane %v2109, 1
        %v2120 = vsel %vm1876, %v2118, %v2119
        %v2121 = vrot.slane %v2110, 1
        %v2122 = vsel %vm1876, %v2119, %v2121
        %v2123 = vrot.slane %v2111, 1
        %v2124 = vsel %vm1876, %v2121, %v2123
        %v2125 = vrot.slane %v2112, 1
        %v2126 = vsel %vm1876, %v2123, %v2125
        %v2127 = vrot.slane %v2113, 1
        %v2128 = vsel %vm1876, %v2125, %v2127
        %v2129 = vrot.slane %v2114, 1
        %v2130 = vsel %vm1876, %v2127, %v2129
        %v2131 = vrot.slane %v2115, 1
        %v2132 = vsel %vm1876, %v2129, %v2131
        %v2133 = vrot.slane %v2116, 1
        %v2134 = vsel %vm1876, %v2131, %v2133
        %v2135 = vrot.slane %v2117, 1
        %v2136 = vsel %vm1876, %v2133, %v2135
        %v2138 = vsel %vm1607, %v2120, 0
        %v2141 = vsel %vm1607, %v2122, 0
        %v2144 = vsel %vm1607, %v2124, 0
        %v2147 = vsel %vm1607, %v2126, 0
        %v2150 = vsel %vm1607, %v2128, 0
        %v2153 = vsel %vm1607, %v2130, 0
        %v2156 = vsel %vm1607, %v2132, 0
        %v2159 = vsel %vm1607, %v2134, 0
        %v2162 = vsel %vm1607, %v2136, 0
        %v2165 = vsel %vm1635, %v2069, 0
        %2167 = vmatprep.subr.bf16.mxu0 0
        %2168 = vmatpush1.bf16.msra.mxu0 0
        %2169 = vmatprep.subr.bf16.mxu0 0
        %2170 = vmatpush1.bf16.msra.mxu0 0
        %2171 = vmatprep.subr.bf16.mxu0 0
        %2172 = vmatpush1.bf16.msra.mxu0 0
        %2173 = vmatprep.subr.bf16.mxu0 0
        %2174 = vmatpush1.bf16.msra.mxu0 0
        %2175 = vmatprep.subr.bf16.mxu0 0
        %2176 = vmatpush1.bf16.msra.mxu0 0
        %2177 = vmatprep.subr.bf16.mxu0 0
        %2178 = vmatpush1.bf16.msra.mxu0 0
        %2179 = vmatprep.subr.bf16.mxu0 0
        %2180 = vmatpush1.bf16.msra.mxu0 0
        %2181 = vmatprep.subr.bf16.mxu0 0
        %2182 = vmatpush1.bf16.msra.mxu0 %v2165
        %2183 = vmatprep.subr.bf16.mxu0 0
        %2184 = vmatpush2.bf16.msra.mxu0 0
        %2185 = vmatprep.subr.bf16.mxu0 0
        %2186 = vmatpush2.bf16.msra.mxu0 0
        %2187 = vmatprep.subr.bf16.mxu0 0
        %2188 = vmatpush2.bf16.msra.mxu0 0
        %2189 = vmatprep.subr.bf16.mxu0 0
        %2190 = vmatpush2.bf16.msra.mxu0 0
        %2191 = vmatprep.subr.bf16.mxu0 0
        %2192 = vmatpush2.bf16.msra.mxu0 0
        %2193 = vmatprep.subr.bf16.mxu0 0
        %2194 = vmatpush2.bf16.msra.mxu0 0
        %2195 = vmatprep.subr.bf16.mxu0 0
        %2196 = vmatpush2.bf16.msra.mxu0 0
        %2197 = vmatprep.subr.bf16.mxu0 0
        %2198 = vmatpush2.bf16.msra.mxu0 0
        %2199 = vmatprep.mubr.bf16.mxu0 0
        %2200 = vmatmul.mubr.bf16.gmra.mxu0 %v2138
        %v2201 = vpop.f32.mrf.mxu0
        %v2202 = vadd.f32 0.0, %v2201
        %v2203 = vpop.f32.mrf.mxu0
        %v2204 = vpop.f32.mrf.mxu0
        %v2205 = vadd.f32 0.0, %v2204
        %v2206 = vpop.f32.mrf.mxu0
        %2207 = vmatprep.mubr.bf16.mxu0 0
        %2208 = vmatmul.mubr.bf16.gmra.mxu0 %v2141
        %v2209 = vpop.f32.mrf.mxu0
        %v2210 = vadd.f32 0.0, %v2209
        %v2211 = vpop.f32.mrf.mxu0
        %v2212 = vpop.f32.mrf.mxu0
        %v2213 = vadd.f32 0.0, %v2212
        %v2214 = vpop.f32.mrf.mxu0
        %2215 = vmatprep.mubr.bf16.mxu0 0
        %2216 = vmatmul.mubr.bf16.gmra.mxu0 %v2144
        %v2217 = vpop.f32.mrf.mxu0
        %v2218 = vadd.f32 0.0, %v2217
        %v2219 = vpop.f32.mrf.mxu0
        %v2220 = vpop.f32.mrf.mxu0
        %v2221 = vadd.f32 0.0, %v2220
        %v2222 = vpop.f32.mrf.mxu0
        %2223 = vmatprep.mubr.bf16.mxu0 0
        %2224 = vmatmul.mubr.bf16.gmra.mxu0 %v2147
        %v2225 = vpop.f32.mrf.mxu0
        %v2226 = vadd.f32 0.0, %v2225
        %v2227 = vpop.f32.mrf.mxu0
        %v2228 = vpop.f32.mrf.mxu0
        %v2229 = vadd.f32 0.0, %v2228
        %v2230 = vpop.f32.mrf.mxu0
        %2231 = vmatprep.mubr.bf16.mxu0 0
        %2232 = vmatmul.mubr.bf16.gmra.mxu0 %v2150
        %v2233 = vpop.f32.mrf.mxu0
        %v2234 = vadd.f32 0.0, %v2233
        %v2235 = vpop.f32.mrf.mxu0
        %v2236 = vpop.f32.mrf.mxu0
        %v2237 = vadd.f32 0.0, %v2236
        %v2238 = vpop.f32.mrf.mxu0
        %2239 = vmatprep.mubr.bf16.mxu0 0
        %2240 = vmatmul.mubr.bf16.gmra.mxu0 %v2153
        %v2241 = vpop.f32.mrf.mxu0
        %v2242 = vadd.f32 0.0, %v2241
        %v2243 = vpop.f32.mrf.mxu0
        %v2244 = vpop.f32.mrf.mxu0
        %v2245 = vadd.f32 0.0, %v2244
        %v2246 = vpop.f32.mrf.mxu0
        %2247 = vmatprep.mubr.bf16.mxu0 0
        %2248 = vmatmul.mubr.bf16.gmra.mxu0 %v2156
        %v2249 = vpop.f32.mrf.mxu0
        %v2250 = vadd.f32 0.0, %v2249
        %v2251 = vpop.f32.mrf.mxu0
        %v2252 = vpop.f32.mrf.mxu0
        %v2253 = vadd.f32 0.0, %v2252
        %v2254 = vpop.f32.mrf.mxu0
        %2255 = vmatprep.mubr.bf16.mxu0 0
        %2256 = vmatmul.mubr.bf16.gmra.mxu0 %v2159
        %v2257 = vpop.f32.mrf.mxu0
        %v2258 = vadd.f32 0.0, %v2257
        %v2259 = vpop.f32.mrf.mxu0
        %v2260 = vpop.f32.mrf.mxu0
        %v2261 = vadd.f32 0.0, %v2260
        %v2262 = vpop.f32.mrf.mxu0
        %2263 = vmatprep.mubr.bf16.mxu0 0
        %2264 = vmatmul.mubr.bf16.gmra.mxu0 %v2162
        %v2265 = vpop.f32.mrf.mxu0
        %v2266 = vadd.f32 0.0, %v2265
        %v2267 = vpop.f32.mrf.mxu0
        %v2268 = vpop.f32.mrf.mxu0
        %v2269 = vadd.f32 0.0, %v2268
        %v2270 = vpop.f32.mrf.mxu0
        %2271 = vdwg.mxu0
        %v2272 = vadd.f32 %v2031, %v2202
        %v2273 = vadd.f32 %v2032, %v2205
        %v2274 = vadd.f32 %v2033, %v2210
        %v2275 = vadd.f32 %v2034, %v2213
        %v2276 = vadd.f32 %v2035, %v2218
        %v2277 = vadd.f32 %v2036, %v2221
        %v2278 = vadd.f32 %v2037, %v2226
        %v2279 = vadd.f32 %v2038, %v2229
        %v2280 = vadd.f32 %v2039, %v2234
        %v2281 = vadd.f32 %v2040, %v2237
        %v2282 = vadd.f32 %v2041, %v2242
        %v2283 = vadd.f32 %v2042, %v2245
        %v2284 = vadd.f32 %v2043, %v2250
        %v2285 = vadd.f32 %v2044, %v2253
        %v2286 = vadd.f32 %v2045, %v2258
        %v2287 = vadd.f32 %v2046, %v2261
        %v2288 = vadd.f32 %v2047, %v2266
        %v2289 = vadd.f32 %v2048, %v2269
        %v2290 = vld [vmem:[#allocation2 + $0x50] sm:$0x3]
        %s2291 = scalar_lea.vmem %s3, 8
        %v2292 = vld [vmem:[%s2291] sm:$0x3]
        %v2294 = vunpack.c.l.b16 %v2290
        %v2295 = vpack.c.b16 %v2294, %v2294
        %vm2296 = vsmask.f32 6400
        %v2298 = vshrl.u32 %v2108, 16
        %v2300 = vrot.slane %v2298, 1
        %v2301 = vshll.u32 %v2108, 16
        %v2303 = vrot.slane %v2301, 2
        %v2304 = vor.u32 %v2300, %v2303
        %v2306 = vshrl.u32 %v2109, 16
        %v2308 = vrot.slane %v2306, 1
        %v2309 = vshll.u32 %v2109, 16
        %v2311 = vrot.slane %v2309, 2
        %v2312 = vor.u32 %v2308, %v2311
        %v2313 = vsel %vm2296, %v2304, %v2312
        %v2315 = vshrl.u32 %v2110, 16
        %v2317 = vrot.slane %v2315, 1
        %v2318 = vshll.u32 %v2110, 16
        %v2320 = vrot.slane %v2318, 2
        %v2321 = vor.u32 %v2317, %v2320
        %v2322 = vsel %vm2296, %v2312, %v2321
        %v2324 = vshrl.u32 %v2111, 16
        %v2326 = vrot.slane %v2324, 1
        %v2327 = vshll.u32 %v2111, 16
        %v2329 = vrot.slane %v2327, 2
        %v2330 = vor.u32 %v2326, %v2329
        %v2331 = vsel %vm2296, %v2321, %v2330
        %v2333 = vshrl.u32 %v2112, 16
        %v2335 = vrot.slane %v2333, 1
        %v2336 = vshll.u32 %v2112, 16
        %v2338 = vrot.slane %v2336, 2
        %v2339 = vor.u32 %v2335, %v2338
        %v2340 = vsel %vm2296, %v2330, %v2339
        %v2342 = vshrl.u32 %v2113, 16
        %v2344 = vrot.slane %v2342, 1
        %v2345 = vshll.u32 %v2113, 16
        %v2347 = vrot.slane %v2345, 2
        %v2348 = vor.u32 %v2344, %v2347
        %v2349 = vsel %vm2296, %v2339, %v2348
        %v2351 = vshrl.u32 %v2114, 16
        %v2353 = vrot.slane %v2351, 1
        %v2354 = vshll.u32 %v2114, 16
        %v2356 = vrot.slane %v2354, 2
        %v2357 = vor.u32 %v2353, %v2356
        %v2358 = vsel %vm2296, %v2348, %v2357
        %v2360 = vshrl.u32 %v2115, 16
        %v2362 = vrot.slane %v2360, 1
        %v2363 = vshll.u32 %v2115, 16
        %v2365 = vrot.slane %v2363, 2
        %v2366 = vor.u32 %v2362, %v2365
        %v2367 = vsel %vm2296, %v2357, %v2366
        %v2369 = vshrl.u32 %v2116, 16
        %v2371 = vrot.slane %v2369, 1
        %v2372 = vshll.u32 %v2116, 16
        %v2374 = vrot.slane %v2372, 2
        %v2375 = vor.u32 %v2371, %v2374
        %v2376 = vsel %vm2296, %v2366, %v2375
        %v2378 = vshrl.u32 %v2295, 16
        %v2380 = vrot.slane %v2378, 1
        %v2381 = vshll.u32 %v2295, 16
        %v2383 = vrot.slane %v2381, 2
        %v2384 = vor.u32 %v2380, %v2383
        %v2385 = vsel %vm2296, %v2375, %v2384
        %v2387 = vsel %vm1607, %v2313, 0
        %v2390 = vsel %vm1607, %v2322, 0
        %v2393 = vsel %vm1607, %v2331, 0
        %v2396 = vsel %vm1607, %v2340, 0
        %v2399 = vsel %vm1607, %v2349, 0
        %v2402 = vsel %vm1607, %v2358, 0
        %v2405 = vsel %vm1607, %v2367, 0
        %v2408 = vsel %vm1607, %v2376, 0
        %v2411 = vsel %vm1607, %v2385, 0
        %v2414 = vsel %vm1635, %v2292, 0
        %2416 = vmatprep.subr.bf16.mxu0 0
        %2417 = vmatpush1.bf16.msra.mxu0 0
        %2418 = vmatprep.subr.bf16.mxu0 0
        %2419 = vmatpush1.bf16.msra.mxu0 0
        %2420 = vmatprep.subr.bf16.mxu0 0
        %2421 = vmatpush1.bf16.msra.mxu0 0
        %2422 = vmatprep.subr.bf16.mxu0 0
        %2423 = vmatpush1.bf16.msra.mxu0 0
        %2424 = vmatprep.subr.bf16.mxu0 0
        %2425 = vmatpush1.bf16.msra.mxu0 0
        %2426 = vmatprep.subr.bf16.mxu0 0
        %2427 = vmatpush1.bf16.msra.mxu0 0
        %2428 = vmatprep.subr.bf16.mxu0 0
        %2429 = vmatpush1.bf16.msra.mxu0 0
        %2430 = vmatprep.subr.bf16.mxu0 0
        %2431 = vmatpush1.bf16.msra.mxu0 %v2414
        %2432 = vmatprep.subr.bf16.mxu0 0
        %2433 = vmatpush2.bf16.msra.mxu0 0
        %2434 = vmatprep.subr.bf16.mxu0 0
        %2435 = vmatpush2.bf16.msra.mxu0 0
        %2436 = vmatprep.subr.bf16.mxu0 0
        %2437 = vmatpush2.bf16.msra.mxu0 0
        %2438 = vmatprep.subr.bf16.mxu0 0
        %2439 = vmatpush2.bf16.msra.mxu0 0
        %2440 = vmatprep.subr.bf16.mxu0 0
        %2441 = vmatpush2.bf16.msra.mxu0 0
        %2442 = vmatprep.subr.bf16.mxu0 0
        %2443 = vmatpush2.bf16.msra.mxu0 0
        %2444 = vmatprep.subr.bf16.mxu0 0
        %2445 = vmatpush2.bf16.msra.mxu0 0
        %2446 = vmatprep.subr.bf16.mxu0 0
        %2447 = vmatpush2.bf16.msra.mxu0 0
        %2448 = vmatprep.mubr.bf16.mxu0 0
        %2449 = vmatmul.mubr.bf16.gmra.mxu0 %v2387
        %v2450 = vpop.f32.mrf.mxu0
        %v2451 = vadd.f32 0.0, %v2450
        %v2452 = vpop.f32.mrf.mxu0
        %v2453 = vpop.f32.mrf.mxu0
        %v2454 = vadd.f32 0.0, %v2453
        %v2455 = vpop.f32.mrf.mxu0
        %2456 = vmatprep.mubr.bf16.mxu0 0
        %2457 = vmatmul.mubr.bf16.gmra.mxu0 %v2390
        %v2458 = vpop.f32.mrf.mxu0
        %v2459 = vadd.f32 0.0, %v2458
        %v2460 = vpop.f32.mrf.mxu0
        %v2461 = vpop.f32.mrf.mxu0
        %v2462 = vadd.f32 0.0, %v2461
        %v2463 = vpop.f32.mrf.mxu0
        %2464 = vmatprep.mubr.bf16.mxu0 0
        %2465 = vmatmul.mubr.bf16.gmra.mxu0 %v2393
        %v2466 = vpop.f32.mrf.mxu0
        %v2467 = vadd.f32 0.0, %v2466
        %v2468 = vpop.f32.mrf.mxu0
        %v2469 = vpop.f32.mrf.mxu0
        %v2470 = vadd.f32 0.0, %v2469
        %v2471 = vpop.f32.mrf.mxu0
        %2472 = vmatprep.mubr.bf16.mxu0 0
        %2473 = vmatmul.mubr.bf16.gmra.mxu0 %v2396
        %v2474 = vpop.f32.mrf.mxu0
        %v2475 = vadd.f32 0.0, %v2474
        %v2476 = vpop.f32.mrf.mxu0
        %v2477 = vpop.f32.mrf.mxu0
        %v2478 = vadd.f32 0.0, %v2477
        %v2479 = vpop.f32.mrf.mxu0
        %2480 = vmatprep.mubr.bf16.mxu0 0
        %2481 = vmatmul.mubr.bf16.gmra.mxu0 %v2399
        %v2482 = vpop.f32.mrf.mxu0
        %v2483 = vadd.f32 0.0, %v2482
        %v2484 = vpop.f32.mrf.mxu0
        %v2485 = vpop.f32.mrf.mxu0
        %v2486 = vadd.f32 0.0, %v2485
        %v2487 = vpop.f32.mrf.mxu0
        %2488 = vmatprep.mubr.bf16.mxu0 0
        %2489 = vmatmul.mubr.bf16.gmra.mxu0 %v2402
        %v2490 = vpop.f32.mrf.mxu0
        %v2491 = vadd.f32 0.0, %v2490
        %v2492 = vpop.f32.mrf.mxu0
        %v2493 = vpop.f32.mrf.mxu0
        %v2494 = vadd.f32 0.0, %v2493
        %v2495 = vpop.f32.mrf.mxu0
        %2496 = vmatprep.mubr.bf16.mxu0 0
        %2497 = vmatmul.mubr.bf16.gmra.mxu0 %v2405
        %v2498 = vpop.f32.mrf.mxu0
        %v2499 = vadd.f32 0.0, %v2498
        %v2500 = vpop.f32.mrf.mxu0
        %v2501 = vpop.f32.mrf.mxu0
        %v2502 = vadd.f32 0.0, %v2501
        %v2503 = vpop.f32.mrf.mxu0
        %2504 = vmatprep.mubr.bf16.mxu0 0
        %2505 = vmatmul.mubr.bf16.gmra.mxu0 %v2408
        %v2506 = vpop.f32.mrf.mxu0
        %v2507 = vadd.f32 0.0, %v2506
        %v2508 = vpop.f32.mrf.mxu0
        %v2509 = vpop.f32.mrf.mxu0
        %v2510 = vadd.f32 0.0, %v2509
        %v2511 = vpop.f32.mrf.mxu0
        %2512 = vmatprep.mubr.bf16.mxu0 0
        %2513 = vmatmul.mubr.bf16.gmra.mxu0 %v2411
        %v2514 = vpop.f32.mrf.mxu0
        %v2515 = vadd.f32 0.0, %v2514
        %v2516 = vpop.f32.mrf.mxu0
        %v2517 = vpop.f32.mrf.mxu0
        %v2518 = vadd.f32 0.0, %v2517
        %v2519 = vpop.f32.mrf.mxu0
        %2520 = vdwg.mxu0
        %v2521 = vadd.f32 %v2272, %v2451
        %v2522 = vadd.f32 %v2273, %v2454
        %v2523 = vadd.f32 %v2274, %v2459
        %v2524 = vadd.f32 %v2275, %v2462
        %v2525 = vadd.f32 %v2276, %v2467
        %v2526 = vadd.f32 %v2277, %v2470
        %v2527 = vadd.f32 %v2278, %v2475
        %v2528 = vadd.f32 %v2279, %v2478
        %v2529 = vadd.f32 %v2280, %v2483
        %v2530 = vadd.f32 %v2281, %v2486
        %v2531 = vadd.f32 %v2282, %v2491
        %v2532 = vadd.f32 %v2283, %v2494
        %v2533 = vadd.f32 %v2284, %v2499
        %v2534 = vadd.f32 %v2285, %v2502
        %v2535 = vadd.f32 %v2286, %v2507
        %v2536 = vadd.f32 %v2287, %v2510
        %v2537 = vadd.f32 %v2288, %v2515
        %v2538 = vadd.f32 %v2289, %v2518
        %v2539 = vld [vmem:[#allocation2 + $0x8] sm:$0xc]
        %s2540 = scalar_lea.vmem %s3, 10
        %v2541 = vld [vmem:[%s2540] sm:$0x3]
        %v2543 = vunpack.c.l.b16 %v2539
        %v2544 = vpack.c.b16 %v2090, %v2543
        %vm2545 = vcmask 1045504
        %v2546 = vrot.slane %v2544, 2
        %v2547 = vrot.slane %v2109, 2
        %v2548 = vsel %vm2545, %v2546, %v2547
        %v2549 = vrot.slane %v2110, 2
        %v2550 = vsel %vm2545, %v2547, %v2549
        %v2551 = vrot.slane %v2111, 2
        %v2552 = vsel %vm2545, %v2549, %v2551
        %v2553 = vrot.slane %v2112, 2
        %v2554 = vsel %vm2545, %v2551, %v2553
        %v2555 = vrot.slane %v2113, 2
        %v2556 = vsel %vm2545, %v2553, %v2555
        %v2557 = vrot.slane %v2114, 2
        %v2558 = vsel %vm2545, %v2555, %v2557
        %v2559 = vrot.slane %v2115, 2
        %v2560 = vsel %vm2545, %v2557, %v2559
        %v2561 = vrot.slane %v2116, 2
        %v2562 = vsel %vm2545, %v2559, %v2561
        %v2563 = vrot.slane %v2295, 2
        %v2564 = vsel %vm2545, %v2561, %v2563
        %v2566 = vsel %vm1607, %v2548, 0
        %v2569 = vsel %vm1607, %v2550, 0
        %v2572 = vsel %vm1607, %v2552, 0
        %v2575 = vsel %vm1607, %v2554, 0
        %v2578 = vsel %vm1607, %v2556, 0
        %v2581 = vsel %vm1607, %v2558, 0
        %v2584 = vsel %vm1607, %v2560, 0
        %v2587 = vsel %vm1607, %v2562, 0
        %v2590 = vsel %vm1607, %v2564, 0
        %v2593 = vsel %vm1635, %v2541, 0
        %2595 = vmatprep.subr.bf16.mxu0 0
        %2596 = vmatpush1.bf16.msra.mxu0 0
        %2597 = vmatprep.subr.bf16.mxu0 0
        %2598 = vmatpush1.bf16.msra.mxu0 0
        %2599 = vmatprep.subr.bf16.mxu0 0
        %2600 = vmatpush1.bf16.msra.mxu0 0
        %2601 = vmatprep.subr.bf16.mxu0 0
        %2602 = vmatpush1.bf16.msra.mxu0 0
        %2603 = vmatprep.subr.bf16.mxu0 0
        %2604 = vmatpush1.bf16.msra.mxu0 0
        %2605 = vmatprep.subr.bf16.mxu0 0
        %2606 = vmatpush1.bf16.msra.mxu0 0
        %2607 = vmatprep.subr.bf16.mxu0 0
        %2608 = vmatpush1.bf16.msra.mxu0 0
        %2609 = vmatprep.subr.bf16.mxu0 0
        %2610 = vmatpush1.bf16.msra.mxu0 %v2593
        %2611 = vmatprep.subr.bf16.mxu0 0
        %2612 = vmatpush2.bf16.msra.mxu0 0
        %2613 = vmatprep.subr.bf16.mxu0 0
        %2614 = vmatpush2.bf16.msra.mxu0 0
        %2615 = vmatprep.subr.bf16.mxu0 0
        %2616 = vmatpush2.bf16.msra.mxu0 0
        %2617 = vmatprep.subr.bf16.mxu0 0
        %2618 = vmatpush2.bf16.msra.mxu0 0
        %2619 = vmatprep.subr.bf16.mxu0 0
        %2620 = vmatpush2.bf16.msra.mxu0 0
        %2621 = vmatprep.subr.bf16.mxu0 0
        %2622 = vmatpush2.bf16.msra.mxu0 0
        %2623 = vmatprep.subr.bf16.mxu0 0
        %2624 = vmatpush2.bf16.msra.mxu0 0
        %2625 = vmatprep.subr.bf16.mxu0 0
        %2626 = vmatpush2.bf16.msra.mxu0 0
        %2627 = vmatprep.mubr.bf16.mxu0 0
        %2628 = vmatmul.mubr.bf16.gmra.mxu0 %v2566
        %v2629 = vpop.f32.mrf.mxu0
        %v2630 = vadd.f32 0.0, %v2629
        %v2631 = vpop.f32.mrf.mxu0
        %v2632 = vpop.f32.mrf.mxu0
        %v2633 = vadd.f32 0.0, %v2632
        %v2634 = vpop.f32.mrf.mxu0
        %2635 = vmatprep.mubr.bf16.mxu0 0
        %2636 = vmatmul.mubr.bf16.gmra.mxu0 %v2569
        %v2637 = vpop.f32.mrf.mxu0
        %v2638 = vadd.f32 0.0, %v2637
        %v2639 = vpop.f32.mrf.mxu0
        %v2640 = vpop.f32.mrf.mxu0
        %v2641 = vadd.f32 0.0, %v2640
        %v2642 = vpop.f32.mrf.mxu0
        %2643 = vmatprep.mubr.bf16.mxu0 0
        %2644 = vmatmul.mubr.bf16.gmra.mxu0 %v2572
        %v2645 = vpop.f32.mrf.mxu0
        %v2646 = vadd.f32 0.0, %v2645
        %v2647 = vpop.f32.mrf.mxu0
        %v2648 = vpop.f32.mrf.mxu0
        %v2649 = vadd.f32 0.0, %v2648
        %v2650 = vpop.f32.mrf.mxu0
        %2651 = vmatprep.mubr.bf16.mxu0 0
        %2652 = vmatmul.mubr.bf16.gmra.mxu0 %v2575
        %v2653 = vpop.f32.mrf.mxu0
        %v2654 = vadd.f32 0.0, %v2653
        %v2655 = vpop.f32.mrf.mxu0
        %v2656 = vpop.f32.mrf.mxu0
        %v2657 = vadd.f32 0.0, %v2656
        %v2658 = vpop.f32.mrf.mxu0
        %2659 = vmatprep.mubr.bf16.mxu0 0
        %2660 = vmatmul.mubr.bf16.gmra.mxu0 %v2578
        %v2661 = vpop.f32.mrf.mxu0
        %v2662 = vadd.f32 0.0, %v2661
        %v2663 = vpop.f32.mrf.mxu0
        %v2664 = vpop.f32.mrf.mxu0
        %v2665 = vadd.f32 0.0, %v2664
        %v2666 = vpop.f32.mrf.mxu0
        %2667 = vmatprep.mubr.bf16.mxu0 0
        %2668 = vmatmul.mubr.bf16.gmra.mxu0 %v2581
        %v2669 = vpop.f32.mrf.mxu0
        %v2670 = vadd.f32 0.0, %v2669
        %v2671 = vpop.f32.mrf.mxu0
        %v2672 = vpop.f32.mrf.mxu0
        %v2673 = vadd.f32 0.0, %v2672
        %v2674 = vpop.f32.mrf.mxu0
        %2675 = vmatprep.mubr.bf16.mxu0 0
        %2676 = vmatmul.mubr.bf16.gmra.mxu0 %v2584
        %v2677 = vpop.f32.mrf.mxu0
        %v2678 = vadd.f32 0.0, %v2677
        %v2679 = vpop.f32.mrf.mxu0
        %v2680 = vpop.f32.mrf.mxu0
        %v2681 = vadd.f32 0.0, %v2680
        %v2682 = vpop.f32.mrf.mxu0
        %2683 = vmatprep.mubr.bf16.mxu0 0
        %2684 = vmatmul.mubr.bf16.gmra.mxu0 %v2587
        %v2685 = vpop.f32.mrf.mxu0
        %v2686 = vadd.f32 0.0, %v2685
        %v2687 = vpop.f32.mrf.mxu0
        %v2688 = vpop.f32.mrf.mxu0
        %v2689 = vadd.f32 0.0, %v2688
        %v2690 = vpop.f32.mrf.mxu0
        %2691 = vmatprep.mubr.bf16.mxu0 0
        %2692 = vmatmul.mubr.bf16.gmra.mxu0 %v2590
        %v2693 = vpop.f32.mrf.mxu0
        %v2694 = vadd.f32 0.0, %v2693
        %v2695 = vpop.f32.mrf.mxu0
        %v2696 = vpop.f32.mrf.mxu0
        %v2697 = vadd.f32 0.0, %v2696
        %v2698 = vpop.f32.mrf.mxu0
        %2699 = vdwg.mxu0
        %v2700 = vadd.f32 %v2521, %v2630
        %v2701 = vadd.f32 %v2522, %v2633
        %v2702 = vadd.f32 %v2523, %v2638
        %v2703 = vadd.f32 %v2524, %v2641
        %v2704 = vadd.f32 %v2525, %v2646
        %v2705 = vadd.f32 %v2526, %v2649
        %v2706 = vadd.f32 %v2527, %v2654
        %v2707 = vadd.f32 %v2528, %v2657
        %v2708 = vadd.f32 %v2529, %v2662
        %v2709 = vadd.f32 %v2530, %v2665
        %v2710 = vadd.f32 %v2531, %v2670
        %v2711 = vadd.f32 %v2532, %v2673
        %v2712 = vadd.f32 %v2533, %v2678
        %v2713 = vadd.f32 %v2534, %v2681
        %v2714 = vadd.f32 %v2535, %v2686
        %v2715 = vadd.f32 %v2536, %v2689
        %v2716 = vadd.f32 %v2537, %v2694
        %v2717 = vadd.f32 %v2538, %v2697
        %v2718 = vld [vmem:[#allocation2 + $0x10] sm:$0xc]
        %v2719 = vld [vmem:[#allocation2 + $0x14] sm:$0xf]
        %v2720 = vld [vmem:[#allocation2 + $0x18] sm:$0xf]
        %v2721 = vld [vmem:[#allocation2 + $0x1c] sm:$0xf]
        %v2722 = vld [vmem:[#allocation2 + $0x20] sm:$0xf]
        %v2723 = vld [vmem:[#allocation2 + $0x24] sm:$0xf]
        %v2724 = vld [vmem:[#allocation2 + $0x28] sm:$0xf]
        %v2725 = vld [vmem:[#allocation2 + $0x2c] sm:$0xf]
        %v2726 = vld [vmem:[#allocation2 + $0x30] sm:$0xf]
        %v2727 = vld [vmem:[#allocation2 + $0x34] sm:$0xf]
        %v2728 = vld [vmem:[#allocation2 + $0x38] sm:$0xf]
        %v2729 = vld [vmem:[#allocation2 + $0x3c] sm:$0xf]
        %v2730 = vld [vmem:[#allocation2 + $0x40] sm:$0xf]
        %v2731 = vld [vmem:[#allocation2 + $0x44] sm:$0xf]
        %v2732 = vld [vmem:[#allocation2 + $0x48] sm:$0xf]
        %v2733 = vld [vmem:[#allocation2 + $0x4c] sm:$0xf]
        %v2734 = vld [vmem:[#allocation2 + $0x50] sm:$0xf]
        %v2735 = vld [vmem:[#allocation2 + $0x54] sm:$0xf]
        %v2736 = vld [vmem:[#allocation2 + $0x58] sm:$0x3]
        %s2737 = scalar_lea.vmem %s3, 12
        %v2738 = vld [vmem:[%s2737] sm:$0x3]
        %v2758 = vunpack.c.l.b16 %v2718
        %v2759 = vunpack.c.l.b16 %v2719
        %v2760 = vunpack.c.l.b16 %v2720
        %v2761 = vunpack.c.l.b16 %v2721
        %v2762 = vunpack.c.l.b16 %v2722
        %v2763 = vunpack.c.l.b16 %v2723
        %v2764 = vunpack.c.l.b16 %v2724
        %v2765 = vunpack.c.l.b16 %v2725
        %v2766 = vunpack.c.l.b16 %v2726
        %v2767 = vunpack.c.l.b16 %v2727
        %v2768 = vunpack.c.l.b16 %v2728
        %v2769 = vunpack.c.l.b16 %v2729
        %v2770 = vunpack.c.l.b16 %v2730
        %v2771 = vunpack.c.l.b16 %v2731
        %v2772 = vunpack.c.l.b16 %v2732
        %v2773 = vunpack.c.l.b16 %v2733
        %v2774 = vunpack.c.l.b16 %v2734
        %v2775 = vunpack.c.l.b16 %v2735
        %v2776 = vunpack.c.l.b16 %v2736
        %v2777 = vpack.c.b16 %v2759, %v2758
        %v2778 = vpack.c.b16 %v2761, %v2760
        %v2779 = vpack.c.b16 %v2763, %v2762
        %v2780 = vpack.c.b16 %v2765, %v2764
        %v2781 = vpack.c.b16 %v2767, %v2766
        %v2782 = vpack.c.b16 %v2769, %v2768
        %v2783 = vpack.c.b16 %v2771, %v2770
        %v2784 = vpack.c.b16 %v2773, %v2772
        %v2785 = vpack.c.b16 %v2775, %v2774
        %v2786 = vpack.c.b16 %v2776, %v2776
        %v2787 = vrot.slane %v2777, 2
        %v2788 = vrot.slane %v2778, 2
        %v2789 = vsel %vm2545, %v2787, %v2788
        %v2790 = vrot.slane %v2779, 2
        %v2791 = vsel %vm2545, %v2788, %v2790
        %v2792 = vrot.slane %v2780, 2
        %v2793 = vsel %vm2545, %v2790, %v2792
        %v2794 = vrot.slane %v2781, 2
        %v2795 = vsel %vm2545, %v2792, %v2794
        %v2796 = vrot.slane %v2782, 2
        %v2797 = vsel %vm2545, %v2794, %v2796
        %v2798 = vrot.slane %v2783, 2
        %v2799 = vsel %vm2545, %v2796, %v2798
        %v2800 = vrot.slane %v2784, 2
        %v2801 = vsel %vm2545, %v2798, %v2800
        %v2802 = vrot.slane %v2785, 2
        %v2803 = vsel %vm2545, %v2800, %v2802
        %v2804 = vrot.slane %v2786, 2
        %v2805 = vsel %vm2545, %v2802, %v2804
        %v2807 = vsel %vm1607, %v2789, 0
        %v2810 = vsel %vm1607, %v2791, 0
        %v2813 = vsel %vm1607, %v2793, 0
        %v2816 = vsel %vm1607, %v2795, 0
        %v2819 = vsel %vm1607, %v2797, 0
        %v2822 = vsel %vm1607, %v2799, 0
        %v2825 = vsel %vm1607, %v2801, 0
        %v2828 = vsel %vm1607, %v2803, 0
        %v2831 = vsel %vm1607, %v2805, 0
        %v2834 = vsel %vm1635, %v2738, 0
        %2836 = vmatprep.subr.bf16.mxu0 0
        %2837 = vmatpush1.bf16.msra.mxu0 0
        %2838 = vmatprep.subr.bf16.mxu0 0
        %2839 = vmatpush1.bf16.msra.mxu0 0
        %2840 = vmatprep.subr.bf16.mxu0 0
        %2841 = vmatpush1.bf16.msra.mxu0 0
        %2842 = vmatprep.subr.bf16.mxu0 0
        %2843 = vmatpush1.bf16.msra.mxu0 0
        %2844 = vmatprep.subr.bf16.mxu0 0
        %2845 = vmatpush1.bf16.msra.mxu0 0
        %2846 = vmatprep.subr.bf16.mxu0 0
        %2847 = vmatpush1.bf16.msra.mxu0 0
        %2848 = vmatprep.subr.bf16.mxu0 0
        %2849 = vmatpush1.bf16.msra.mxu0 0
        %2850 = vmatprep.subr.bf16.mxu0 0
        %2851 = vmatpush1.bf16.msra.mxu0 %v2834
        %2852 = vmatprep.subr.bf16.mxu0 0
        %2853 = vmatpush2.bf16.msra.mxu0 0
        %2854 = vmatprep.subr.bf16.mxu0 0
        %2855 = vmatpush2.bf16.msra.mxu0 0
        %2856 = vmatprep.subr.bf16.mxu0 0
        %2857 = vmatpush2.bf16.msra.mxu0 0
        %2858 = vmatprep.subr.bf16.mxu0 0
        %2859 = vmatpush2.bf16.msra.mxu0 0
        %2860 = vmatprep.subr.bf16.mxu0 0
        %2861 = vmatpush2.bf16.msra.mxu0 0
        %2862 = vmatprep.subr.bf16.mxu0 0
        %2863 = vmatpush2.bf16.msra.mxu0 0
        %2864 = vmatprep.subr.bf16.mxu0 0
        %2865 = vmatpush2.bf16.msra.mxu0 0
        %2866 = vmatprep.subr.bf16.mxu0 0
        %2867 = vmatpush2.bf16.msra.mxu0 0
        %2868 = vmatprep.mubr.bf16.mxu0 0
        %2869 = vmatmul.mubr.bf16.gmra.mxu0 %v2807
        %v2870 = vpop.f32.mrf.mxu0
        %v2871 = vadd.f32 0.0, %v2870
        %v2872 = vpop.f32.mrf.mxu0
        %v2873 = vpop.f32.mrf.mxu0
        %v2874 = vadd.f32 0.0, %v2873
        %v2875 = vpop.f32.mrf.mxu0
        %2876 = vmatprep.mubr.bf16.mxu0 0
        %2877 = vmatmul.mubr.bf16.gmra.mxu0 %v2810
        %v2878 = vpop.f32.mrf.mxu0
        %v2879 = vadd.f32 0.0, %v2878
        %v2880 = vpop.f32.mrf.mxu0
        %v2881 = vpop.f32.mrf.mxu0
        %v2882 = vadd.f32 0.0, %v2881
        %v2883 = vpop.f32.mrf.mxu0
        %2884 = vmatprep.mubr.bf16.mxu0 0
        %2885 = vmatmul.mubr.bf16.gmra.mxu0 %v2813
        %v2886 = vpop.f32.mrf.mxu0
        %v2887 = vadd.f32 0.0, %v2886
        %v2888 = vpop.f32.mrf.mxu0
        %v2889 = vpop.f32.mrf.mxu0
        %v2890 = vadd.f32 0.0, %v2889
        %v2891 = vpop.f32.mrf.mxu0
        %2892 = vmatprep.mubr.bf16.mxu0 0
        %2893 = vmatmul.mubr.bf16.gmra.mxu0 %v2816
        %v2894 = vpop.f32.mrf.mxu0
        %v2895 = vadd.f32 0.0, %v2894
        %v2896 = vpop.f32.mrf.mxu0
        %v2897 = vpop.f32.mrf.mxu0
        %v2898 = vadd.f32 0.0, %v2897
        %v2899 = vpop.f32.mrf.mxu0
        %2900 = vmatprep.mubr.bf16.mxu0 0
        %2901 = vmatmul.mubr.bf16.gmra.mxu0 %v2819
        %v2902 = vpop.f32.mrf.mxu0
        %v2903 = vadd.f32 0.0, %v2902
        %v2904 = vpop.f32.mrf.mxu0
        %v2905 = vpop.f32.mrf.mxu0
        %v2906 = vadd.f32 0.0, %v2905
        %v2907 = vpop.f32.mrf.mxu0
        %2908 = vmatprep.mubr.bf16.mxu0 0
        %2909 = vmatmul.mubr.bf16.gmra.mxu0 %v2822
        %v2910 = vpop.f32.mrf.mxu0
        %v2911 = vadd.f32 0.0, %v2910
        %v2912 = vpop.f32.mrf.mxu0
        %v2913 = vpop.f32.mrf.mxu0
        %v2914 = vadd.f32 0.0, %v2913
        %v2915 = vpop.f32.mrf.mxu0
        %2916 = vmatprep.mubr.bf16.mxu0 0
        %2917 = vmatmul.mubr.bf16.gmra.mxu0 %v2825
        %v2918 = vpop.f32.mrf.mxu0
        %v2919 = vadd.f32 0.0, %v2918
        %v2920 = vpop.f32.mrf.mxu0
        %v2921 = vpop.f32.mrf.mxu0
        %v2922 = vadd.f32 0.0, %v2921
        %v2923 = vpop.f32.mrf.mxu0
        %2924 = vmatprep.mubr.bf16.mxu0 0
        %2925 = vmatmul.mubr.bf16.gmra.mxu0 %v2828
        %v2926 = vpop.f32.mrf.mxu0
        %v2927 = vadd.f32 0.0, %v2926
        %v2928 = vpop.f32.mrf.mxu0
        %v2929 = vpop.f32.mrf.mxu0
        %v2930 = vadd.f32 0.0, %v2929
        %v2931 = vpop.f32.mrf.mxu0
        %2932 = vmatprep.mubr.bf16.mxu0 0
        %2933 = vmatmul.mubr.bf16.gmra.mxu0 %v2831
        %v2934 = vpop.f32.mrf.mxu0
        %v2935 = vadd.f32 0.0, %v2934
        %v2936 = vpop.f32.mrf.mxu0
        %v2937 = vpop.f32.mrf.mxu0
        %v2938 = vadd.f32 0.0, %v2937
        %v2939 = vpop.f32.mrf.mxu0
        %2940 = vdwg.mxu0
        %v2941 = vadd.f32 %v2700, %v2871
        %v2942 = vadd.f32 %v2701, %v2874
        %v2943 = vadd.f32 %v2702, %v2879
        %v2944 = vadd.f32 %v2703, %v2882
        %v2945 = vadd.f32 %v2704, %v2887
        %v2946 = vadd.f32 %v2705, %v2890
        %v2947 = vadd.f32 %v2706, %v2895
        %v2948 = vadd.f32 %v2707, %v2898
        %v2949 = vadd.f32 %v2708, %v2903
        %v2950 = vadd.f32 %v2709, %v2906
        %v2951 = vadd.f32 %v2710, %v2911
        %v2952 = vadd.f32 %v2711, %v2914
        %v2953 = vadd.f32 %v2712, %v2919
        %v2954 = vadd.f32 %v2713, %v2922
        %v2955 = vadd.f32 %v2714, %v2927
        %v2956 = vadd.f32 %v2715, %v2930
        %v2957 = vadd.f32 %v2716, %v2935
        %v2958 = vadd.f32 %v2717, %v2938
        %v2959 = vld [vmem:[#allocation2 + $0x58] sm:$0x7]
        %s2960 = scalar_lea.vmem %s3, 14
        %v2961 = vld [vmem:[%s2960] sm:$0x3]
        %v2963 = vunpack.c.l.b16 %v2959
        %v2964 = vpack.c.b16 %v2963, %v2963
        %vm2965 = vsmask.f32 5376
        %v2967 = vshrl.u32 %v2777, 16
        %v2969 = vrot.slane %v2967, 2
        %v2970 = vshll.u32 %v2777, 16
        %v2972 = vrot.slane %v2970, 3
        %v2973 = vor.u32 %v2969, %v2972
        %v2975 = vshrl.u32 %v2778, 16
        %v2977 = vrot.slane %v2975, 2
        %v2978 = vshll.u32 %v2778, 16
        %v2980 = vrot.slane %v2978, 3
        %v2981 = vor.u32 %v2977, %v2980
        %v2982 = vsel %vm2965, %v2973, %v2981
        %v2984 = vshrl.u32 %v2779, 16
        %v2986 = vrot.slane %v2984, 2
        %v2987 = vshll.u32 %v2779, 16
        %v2989 = vrot.slane %v2987, 3
        %v2990 = vor.u32 %v2986, %v2989
        %v2991 = vsel %vm2965, %v2981, %v2990
        %v2993 = vshrl.u32 %v2780, 16
        %v2995 = vrot.slane %v2993, 2
        %v2996 = vshll.u32 %v2780, 16
        %v2998 = vrot.slane %v2996, 3
        %v2999 = vor.u32 %v2995, %v2998
        %v3000 = vsel %vm2965, %v2990, %v2999
        %v3002 = vshrl.u32 %v2781, 16
        %v3004 = vrot.slane %v3002, 2
        %v3005 = vshll.u32 %v2781, 16
        %v3007 = vrot.slane %v3005, 3
        %v3008 = vor.u32 %v3004, %v3007
        %v3009 = vsel %vm2965, %v2999, %v3008
        %v3011 = vshrl.u32 %v2782, 16
        %v3013 = vrot.slane %v3011, 2
        %v3014 = vshll.u32 %v2782, 16
        %v3016 = vrot.slane %v3014, 3
        %v3017 = vor.u32 %v3013, %v3016
        %v3018 = vsel %vm2965, %v3008, %v3017
        %v3020 = vshrl.u32 %v2783, 16
        %v3022 = vrot.slane %v3020, 2
        %v3023 = vshll.u32 %v2783, 16
        %v3025 = vrot.slane %v3023, 3
        %v3026 = vor.u32 %v3022, %v3025
        %v3027 = vsel %vm2965, %v3017, %v3026
        %v3029 = vshrl.u32 %v2784, 16
        %v3031 = vrot.slane %v3029, 2
        %v3032 = vshll.u32 %v2784, 16
        %v3034 = vrot.slane %v3032, 3
        %v3035 = vor.u32 %v3031, %v3034
        %v3036 = vsel %vm2965, %v3026, %v3035
        %v3038 = vshrl.u32 %v2785, 16
        %v3040 = vrot.slane %v3038, 2
        %v3041 = vshll.u32 %v2785, 16
        %v3043 = vrot.slane %v3041, 3
        %v3044 = vor.u32 %v3040, %v3043
        %v3045 = vsel %vm2965, %v3035, %v3044
        %v3047 = vshrl.u32 %v2964, 16
        %v3049 = vrot.slane %v3047, 2
        %v3050 = vshll.u32 %v2964, 16
        %v3052 = vrot.slane %v3050, 3
        %v3053 = vor.u32 %v3049, %v3052
        %v3054 = vsel %vm2965, %v3044, %v3053
        %v3056 = vsel %vm1607, %v2982, 0
        %v3059 = vsel %vm1607, %v2991, 0
        %v3062 = vsel %vm1607, %v3000, 0
        %v3065 = vsel %vm1607, %v3009, 0
        %v3068 = vsel %vm1607, %v3018, 0
        %v3071 = vsel %vm1607, %v3027, 0
        %v3074 = vsel %vm1607, %v3036, 0
        %v3077 = vsel %vm1607, %v3045, 0
        %v3080 = vsel %vm1607, %v3054, 0
        %v3083 = vsel %vm1635, %v2961, 0
        %3085 = vmatprep.subr.bf16.mxu0 0
        %3086 = vmatpush1.bf16.msra.mxu0 0
        %3087 = vmatprep.subr.bf16.mxu0 0
        %3088 = vmatpush1.bf16.msra.mxu0 0
        %3089 = vmatprep.subr.bf16.mxu0 0
        %3090 = vmatpush1.bf16.msra.mxu0 0
        %3091 = vmatprep.subr.bf16.mxu0 0
        %3092 = vmatpush1.bf16.msra.mxu0 0
        %3093 = vmatprep.subr.bf16.mxu0 0
        %3094 = vmatpush1.bf16.msra.mxu0 0
        %3095 = vmatprep.subr.bf16.mxu0 0
        %3096 = vmatpush1.bf16.msra.mxu0 0
        %3097 = vmatprep.subr.bf16.mxu0 0
        %3098 = vmatpush1.bf16.msra.mxu0 0
        %3099 = vmatprep.subr.bf16.mxu0 0
        %3100 = vmatpush1.bf16.msra.mxu0 %v3083
        %3101 = vmatprep.subr.bf16.mxu0 0
        %3102 = vmatpush2.bf16.msra.mxu0 0
        %3103 = vmatprep.subr.bf16.mxu0 0
        %3104 = vmatpush2.bf16.msra.mxu0 0
        %3105 = vmatprep.subr.bf16.mxu0 0
        %3106 = vmatpush2.bf16.msra.mxu0 0
        %3107 = vmatprep.subr.bf16.mxu0 0
        %3108 = vmatpush2.bf16.msra.mxu0 0
        %3109 = vmatprep.subr.bf16.mxu0 0
        %3110 = vmatpush2.bf16.msra.mxu0 0
        %3111 = vmatprep.subr.bf16.mxu0 0
        %3112 = vmatpush2.bf16.msra.mxu0 0
        %3113 = vmatprep.subr.bf16.mxu0 0
        %3114 = vmatpush2.bf16.msra.mxu0 0
        %3115 = vmatprep.subr.bf16.mxu0 0
        %3116 = vmatpush2.bf16.msra.mxu0 0
        %3117 = vmatprep.mubr.bf16.mxu0 0
        %3118 = vmatmul.mubr.bf16.gmra.mxu0 %v3056
        %v3119 = vpop.f32.mrf.mxu0
        %v3120 = vadd.f32 0.0, %v3119
        %v3121 = vpop.f32.mrf.mxu0
        %v3122 = vpop.f32.mrf.mxu0
        %v3123 = vadd.f32 0.0, %v3122
        %v3124 = vpop.f32.mrf.mxu0
        %3125 = vmatprep.mubr.bf16.mxu0 0
        %3126 = vmatmul.mubr.bf16.gmra.mxu0 %v3059
        %v3127 = vpop.f32.mrf.mxu0
        %v3128 = vadd.f32 0.0, %v3127
        %v3129 = vpop.f32.mrf.mxu0
        %v3130 = vpop.f32.mrf.mxu0
        %v3131 = vadd.f32 0.0, %v3130
        %v3132 = vpop.f32.mrf.mxu0
        %3133 = vmatprep.mubr.bf16.mxu0 0
        %3134 = vmatmul.mubr.bf16.gmra.mxu0 %v3062
        %v3135 = vpop.f32.mrf.mxu0
        %v3136 = vadd.f32 0.0, %v3135
        %v3137 = vpop.f32.mrf.mxu0
        %v3138 = vpop.f32.mrf.mxu0
        %v3139 = vadd.f32 0.0, %v3138
        %v3140 = vpop.f32.mrf.mxu0
        %3141 = vmatprep.mubr.bf16.mxu0 0
        %3142 = vmatmul.mubr.bf16.gmra.mxu0 %v3065
        %v3143 = vpop.f32.mrf.mxu0
        %v3144 = vadd.f32 0.0, %v3143
        %v3145 = vpop.f32.mrf.mxu0
        %v3146 = vpop.f32.mrf.mxu0
        %v3147 = vadd.f32 0.0, %v3146
        %v3148 = vpop.f32.mrf.mxu0
        %3149 = vmatprep.mubr.bf16.mxu0 0
        %3150 = vmatmul.mubr.bf16.gmra.mxu0 %v3068
        %v3151 = vpop.f32.mrf.mxu0
        %v3152 = vadd.f32 0.0, %v3151
        %v3153 = vpop.f32.mrf.mxu0
        %v3154 = vpop.f32.mrf.mxu0
        %v3155 = vadd.f32 0.0, %v3154
        %v3156 = vpop.f32.mrf.mxu0
        %3157 = vmatprep.mubr.bf16.mxu0 0
        %3158 = vmatmul.mubr.bf16.gmra.mxu0 %v3071
        %v3159 = vpop.f32.mrf.mxu0
        %v3160 = vadd.f32 0.0, %v3159
        %v3161 = vpop.f32.mrf.mxu0
        %v3162 = vpop.f32.mrf.mxu0
        %v3163 = vadd.f32 0.0, %v3162
        %v3164 = vpop.f32.mrf.mxu0
        %3165 = vmatprep.mubr.bf16.mxu0 0
        %3166 = vmatmul.mubr.bf16.gmra.mxu0 %v3074
        %v3167 = vpop.f32.mrf.mxu0
        %v3168 = vadd.f32 0.0, %v3167
        %v3169 = vpop.f32.mrf.mxu0
        %v3170 = vpop.f32.mrf.mxu0
        %v3171 = vadd.f32 0.0, %v3170
        %v3172 = vpop.f32.mrf.mxu0
        %3173 = vmatprep.mubr.bf16.mxu0 0
        %3174 = vmatmul.mubr.bf16.gmra.mxu0 %v3077
        %v3175 = vpop.f32.mrf.mxu0
        %v3176 = vadd.f32 0.0, %v3175
        %v3177 = vpop.f32.mrf.mxu0
        %v3178 = vpop.f32.mrf.mxu0
        %v3179 = vadd.f32 0.0, %v3178
        %v3180 = vpop.f32.mrf.mxu0
        %3181 = vmatprep.mubr.bf16.mxu0 0
        %3182 = vmatmul.mubr.bf16.gmra.mxu0 %v3080
        %v3183 = vpop.f32.mrf.mxu0
        %v3184 = vadd.f32 0.0, %v3183
        %v3185 = vpop.f32.mrf.mxu0
        %v3186 = vpop.f32.mrf.mxu0
        %v3187 = vadd.f32 0.0, %v3186
        %v3188 = vpop.f32.mrf.mxu0
        %3189 = vdwg.mxu0
        %v3190 = vadd.f32 %v2941, %v3120
        %v3191 = vadd.f32 %v2942, %v3123
        %v3192 = vadd.f32 %v2943, %v3128
        %v3193 = vadd.f32 %v2944, %v3131
        %v3194 = vadd.f32 %v2945, %v3136
        %v3195 = vadd.f32 %v2946, %v3139
        %v3196 = vadd.f32 %v2947, %v3144
        %v3197 = vadd.f32 %v2948, %v3147
        %v3198 = vadd.f32 %v2949, %v3152
        %v3199 = vadd.f32 %v2950, %v3155
        %v3200 = vadd.f32 %v2951, %v3160
        %v3201 = vadd.f32 %v2952, %v3163
        %v3202 = vadd.f32 %v2953, %v3168
        %v3203 = vadd.f32 %v2954, %v3171
        %v3204 = vadd.f32 %v2955, %v3176
        %v3205 = vadd.f32 %v2956, %v3179
        %v3206 = vadd.f32 %v2957, %v3184
        %v3207 = vadd.f32 %v2958, %v3187
        %v3208 = vld [vmem:[#allocation2 + $0x10] sm:$0x8]
        %s3209 = scalar_lea.vmem %s3, 16
        %v3210 = vld [vmem:[%s3209] sm:$0x3]
        %v3212 = vunpack.c.l.b16 %v3208
        %v3213 = vpack.c.b16 %v2759, %v3212
        %vm3214 = vcmask 1044480
        %v3215 = vrot.slane %v3213, 3
        %v3216 = vrot.slane %v2778, 3
        %v3217 = vsel %vm3214, %v3215, %v3216
        %v3218 = vrot.slane %v2779, 3
        %v3219 = vsel %vm3214, %v3216, %v3218
        %v3220 = vrot.slane %v2780, 3
        %v3221 = vsel %vm3214, %v3218, %v3220
        %v3222 = vrot.slane %v2781, 3
        %v3223 = vsel %vm3214, %v3220, %v3222
        %v3224 = vrot.slane %v2782, 3
        %v3225 = vsel %vm3214, %v3222, %v3224
        %v3226 = vrot.slane %v2783, 3
        %v3227 = vsel %vm3214, %v3224, %v3226
        %v3228 = vrot.slane %v2784, 3
        %v3229 = vsel %vm3214, %v3226, %v3228
        %v3230 = vrot.slane %v2785, 3
        %v3231 = vsel %vm3214, %v3228, %v3230
        %v3232 = vrot.slane %v2964, 3
        %v3233 = vsel %vm3214, %v3230, %v3232
        %v3235 = vsel %vm1607, %v3217, 0
        %v3238 = vsel %vm1607, %v3219, 0
        %v3241 = vsel %vm1607, %v3221, 0
        %v3244 = vsel %vm1607, %v3223, 0
        %v3247 = vsel %vm1607, %v3225, 0
        %v3250 = vsel %vm1607, %v3227, 0
        %v3253 = vsel %vm1607, %v3229, 0
        %v3256 = vsel %vm1607, %v3231, 0
        %v3259 = vsel %vm1607, %v3233, 0
        %v3262 = vsel %vm1635, %v3210, 0
        %3264 = vmatprep.subr.bf16.mxu0 0
        %3265 = vmatpush1.bf16.msra.mxu0 0
        %3266 = vmatprep.subr.bf16.mxu0 0
        %3267 = vmatpush1.bf16.msra.mxu0 0
        %3268 = vmatprep.subr.bf16.mxu0 0
        %3269 = vmatpush1.bf16.msra.mxu0 0
        %3270 = vmatprep.subr.bf16.mxu0 0
        %3271 = vmatpush1.bf16.msra.mxu0 0
        %3272 = vmatprep.subr.bf16.mxu0 0
        %3273 = vmatpush1.bf16.msra.mxu0 0
        %3274 = vmatprep.subr.bf16.mxu0 0
        %3275 = vmatpush1.bf16.msra.mxu0 0
        %3276 = vmatprep.subr.bf16.mxu0 0
        %3277 = vmatpush1.bf16.msra.mxu0 0
        %3278 = vmatprep.subr.bf16.mxu0 0
        %3279 = vmatpush1.bf16.msra.mxu0 %v3262
        %3280 = vmatprep.subr.bf16.mxu0 0
        %3281 = vmatpush2.bf16.msra.mxu0 0
        %3282 = vmatprep.subr.bf16.mxu0 0
        %3283 = vmatpush2.bf16.msra.mxu0 0
        %3284 = vmatprep.subr.bf16.mxu0 0
        %3285 = vmatpush2.bf16.msra.mxu0 0
        %3286 = vmatprep.subr.bf16.mxu0 0
        %3287 = vmatpush2.bf16.msra.mxu0 0
        %3288 = vmatprep.subr.bf16.mxu0 0
        %3289 = vmatpush2.bf16.msra.mxu0 0
        %3290 = vmatprep.subr.bf16.mxu0 0
        %3291 = vmatpush2.bf16.msra.mxu0 0
        %3292 = vmatprep.subr.bf16.mxu0 0
        %3293 = vmatpush2.bf16.msra.mxu0 0
        %3294 = vmatprep.subr.bf16.mxu0 0
        %3295 = vmatpush2.bf16.msra.mxu0 0
        %3296 = vmatprep.mubr.bf16.mxu0 0
        %3297 = vmatmul.mubr.bf16.gmra.mxu0 %v3235
        %v3298 = vpop.f32.mrf.mxu0
        %v3299 = vadd.f32 0.0, %v3298
        %v3300 = vpop.f32.mrf.mxu0
        %v3301 = vpop.f32.mrf.mxu0
        %v3302 = vadd.f32 0.0, %v3301
        %v3303 = vpop.f32.mrf.mxu0
        %3304 = vmatprep.mubr.bf16.mxu0 0
        %3305 = vmatmul.mubr.bf16.gmra.mxu0 %v3238
        %v3306 = vpop.f32.mrf.mxu0
        %v3307 = vadd.f32 0.0, %v3306
        %v3308 = vpop.f32.mrf.mxu0
        %v3309 = vpop.f32.mrf.mxu0
        %v3310 = vadd.f32 0.0, %v3309
        %v3311 = vpop.f32.mrf.mxu0
        %3312 = vmatprep.mubr.bf16.mxu0 0
        %3313 = vmatmul.mubr.bf16.gmra.mxu0 %v3241
        %v3314 = vpop.f32.mrf.mxu0
        %v3315 = vadd.f32 0.0, %v3314
        %v3316 = vpop.f32.mrf.mxu0
        %v3317 = vpop.f32.mrf.mxu0
        %v3318 = vadd.f32 0.0, %v3317
        %v3319 = vpop.f32.mrf.mxu0
        %3320 = vmatprep.mubr.bf16.mxu0 0
        %3321 = vmatmul.mubr.bf16.gmra.mxu0 %v3244
        %v3322 = vpop.f32.mrf.mxu0
        %v3323 = vadd.f32 0.0, %v3322
        %v3324 = vpop.f32.mrf.mxu0
        %v3325 = vpop.f32.mrf.mxu0
        %v3326 = vadd.f32 0.0, %v3325
        %v3327 = vpop.f32.mrf.mxu0
        %3328 = vmatprep.mubr.bf16.mxu0 0
        %3329 = vmatmul.mubr.bf16.gmra.mxu0 %v3247
        %v3330 = vpop.f32.mrf.mxu0
        %v3331 = vadd.f32 0.0, %v3330
        %v3332 = vpop.f32.mrf.mxu0
        %v3333 = vpop.f32.mrf.mxu0
        %v3334 = vadd.f32 0.0, %v3333
        %v3335 = vpop.f32.mrf.mxu0
        %3336 = vmatprep.mubr.bf16.mxu0 0
        %3337 = vmatmul.mubr.bf16.gmra.mxu0 %v3250
        %v3338 = vpop.f32.mrf.mxu0
        %v3339 = vadd.f32 0.0, %v3338
        %v3340 = vpop.f32.mrf.mxu0
        %v3341 = vpop.f32.mrf.mxu0
        %v3342 = vadd.f32 0.0, %v3341
        %v3343 = vpop.f32.mrf.mxu0
        %3344 = vmatprep.mubr.bf16.mxu0 0
        %3345 = vmatmul.mubr.bf16.gmra.mxu0 %v3253
        %v3346 = vpop.f32.mrf.mxu0
        %v3347 = vadd.f32 0.0, %v3346
        %v3348 = vpop.f32.mrf.mxu0
        %v3349 = vpop.f32.mrf.mxu0
        %v3350 = vadd.f32 0.0, %v3349
        %v3351 = vpop.f32.mrf.mxu0
        %3352 = vmatprep.mubr.bf16.mxu0 0
        %3353 = vmatmul.mubr.bf16.gmra.mxu0 %v3256
        %v3354 = vpop.f32.mrf.mxu0
        %v3355 = vadd.f32 0.0, %v3354
        %v3356 = vpop.f32.mrf.mxu0
        %v3357 = vpop.f32.mrf.mxu0
        %v3358 = vadd.f32 0.0, %v3357
        %v3359 = vpop.f32.mrf.mxu0
        %3360 = vmatprep.mubr.bf16.mxu0 0
        %3361 = vmatmul.mubr.bf16.gmra.mxu0 %v3259
        %v3362 = vpop.f32.mrf.mxu0
        %v3363 = vadd.f32 0.0, %v3362
        %v3364 = vpop.f32.mrf.mxu0
        %v3365 = vpop.f32.mrf.mxu0
        %v3366 = vadd.f32 0.0, %v3365
        %v3367 = vpop.f32.mrf.mxu0
        %3368 = vdwg.mxu0
        %v3369 = vadd.f32 %v3190, %v3299
        %v3370 = vadd.f32 %v3191, %v3302
        %v3371 = vadd.f32 %v3192, %v3307
        %v3372 = vadd.f32 %v3193, %v3310
        %v3373 = vadd.f32 %v3194, %v3315
        %v3374 = vadd.f32 %v3195, %v3318
        %v3375 = vadd.f32 %v3196, %v3323
        %v3376 = vadd.f32 %v3197, %v3326
        %v3377 = vadd.f32 %v3198, %v3331
        %v3378 = vadd.f32 %v3199, %v3334
        %v3379 = vadd.f32 %v3200, %v3339
        %v3380 = vadd.f32 %v3201, %v3342
        %v3381 = vadd.f32 %v3202, %v3347
        %v3382 = vadd.f32 %v3203, %v3350
        %v3383 = vadd.f32 %v3204, %v3355
        %v3384 = vadd.f32 %v3205, %v3358
        %v3385 = vadd.f32 %v3206, %v3363
        %v3386 = vadd.f32 %v3207, %v3366
        %v3387 = vld [vmem:[%s4] sm:$0x1]
        %v3389 = vlaneseq
        %v3390 = vshrl.u32 %v3389, 7
        %v3391 = vsub.s32 0, %v3390
        %v3392 = vrot.slane %v3387, %v3391
        %v3394 = vadd.f32 %v3369, %v3392
        %v3395 = vadd.f32 %v3370, %v3392
        %v3396 = vadd.f32 %v3371, %v3392
        %v3397 = vadd.f32 %v3372, %v3392
        %v3398 = vadd.f32 %v3373, %v3392
        %v3399 = vadd.f32 %v3374, %v3392
        %v3400 = vadd.f32 %v3375, %v3392
        %v3401 = vadd.f32 %v3376, %v3392
        %v3402 = vadd.f32 %v3377, %v3392
        %v3403 = vadd.f32 %v3378, %v3392
        %v3404 = vadd.f32 %v3379, %v3392
        %v3405 = vadd.f32 %v3380, %v3392
        %v3406 = vadd.f32 %v3381, %v3392
        %v3407 = vadd.f32 %v3382, %v3392
        %v3408 = vadd.f32 %v3383, %v3392
        %v3409 = vadd.f32 %v3384, %v3392
        %v3410 = vadd.f32 %v3385, %v3392
        %v3411 = vadd.f32 %v3386, %v3392
        %v3412 = vmax.f32 %v3394, 0.0
        %v3413 = vmax.f32 %v3395, 0.0
        %v3414 = vmax.f32 %v3396, 0.0
        %v3415 = vmax.f32 %v3397, 0.0
        %v3416 = vmax.f32 %v3398, 0.0
        %v3417 = vmax.f32 %v3399, 0.0
        %v3418 = vmax.f32 %v3400, 0.0
        %v3419 = vmax.f32 %v3401, 0.0
        %v3420 = vmax.f32 %v3402, 0.0
        %v3421 = vmax.f32 %v3403, 0.0
        %v3422 = vmax.f32 %v3404, 0.0
        %v3423 = vmax.f32 %v3405, 0.0
        %v3424 = vmax.f32 %v3406, 0.0
        %v3425 = vmax.f32 %v3407, 0.0
        %v3426 = vmax.f32 %v3408, 0.0
        %v3427 = vmax.f32 %v3409, 0.0
        %v3428 = vmax.f32 %v3410, 0.0
        %v3429 = vmax.f32 %v3411, 0.0
        %v3430 = vpack.c.bf16 %v3413, %v3412
        %v3431 = vpack.c.bf16 %v3415, %v3414
        %v3432 = vpack.c.bf16 %v3417, %v3416
        %v3433 = vpack.c.bf16 %v3419, %v3418
        %v3434 = vpack.c.bf16 %v3421, %v3420
        %v3435 = vpack.c.bf16 %v3423, %v3422
        %v3436 = vpack.c.bf16 %v3425, %v3424
        %v3437 = vpack.c.bf16 %v3427, %v3426
        %v3438 = vpack.c.bf16 %v3429, %v3428
        %v3439 = vld [vmem:[%s5] sm:$0xf]
        %vm3440 = vcmask 64512
        %v3442 = vsel %vm3440, %v3430, 0
        %v3445 = vsel %vm3440, %v3431, 0
        %v3448 = vsel %vm3440, %v3432, 0
        %v3451 = vsel %vm3440, %v3433, 0
        %v3454 = vsel %vm3440, %v3434, 0
        %v3457 = vsel %vm3440, %v3435, 0
        %v3460 = vsel %vm3440, %v3436, 0
        %v3463 = vsel %vm3440, %v3437, 0
        %v3466 = vsel %vm3440, %v3438, 0
        %vm3468 = vcmask 1043456
        %v3470 = vsel %vm3468, %v3439, 0
        %3472 = vmatprep.subr.bf16.mxu0 0
        %3473 = vmatpush1.bf16.msra.mxu0 0
        %3474 = vmatprep.subr.bf16.mxu0 0
        %3475 = vmatpush1.bf16.msra.mxu0 0
        %3476 = vmatprep.subr.bf16.mxu0 0
        %3477 = vmatpush1.bf16.msra.mxu0 0
        %3478 = vmatprep.subr.bf16.mxu0 0
        %3479 = vmatpush1.bf16.msra.mxu0 0
        %3480 = vmatprep.subr.bf16.mxu0 0
        %3481 = vmatpush1.bf16.msra.mxu0 0
        %3482 = vmatprep.subr.bf16.mxu0 0
        %3483 = vmatpush1.bf16.msra.mxu0 0
        %3484 = vmatprep.subr.bf16.mxu0 0
        %3485 = vmatpush1.bf16.msra.mxu0 0
        %3486 = vmatprep.subr.bf16.mxu0 0
        %3487 = vmatpush1.bf16.msra.mxu0 %v3470
        %3488 = vmatprep.subr.bf16.mxu0 0
        %3489 = vmatpush2.bf16.msra.mxu0 0
        %3490 = vmatprep.subr.bf16.mxu0 0
        %3491 = vmatpush2.bf16.msra.mxu0 0
        %3492 = vmatprep.subr.bf16.mxu0 0
        %3493 = vmatpush2.bf16.msra.mxu0 0
        %3494 = vmatprep.subr.bf16.mxu0 0
        %3495 = vmatpush2.bf16.msra.mxu0 0
        %3496 = vmatprep.subr.bf16.mxu0 0
        %3497 = vmatpush2.bf16.msra.mxu0 0
        %3498 = vmatprep.subr.bf16.mxu0 0
        %3499 = vmatpush2.bf16.msra.mxu0 0
        %3500 = vmatprep.subr.bf16.mxu0 0
        %3501 = vmatpush2.bf16.msra.mxu0 0
        %3502 = vmatprep.subr.bf16.mxu0 0
        %3503 = vmatpush2.bf16.msra.mxu0 0
        %3504 = vmatprep.mubr.bf16.mxu0 0
        %3505 = vmatmul.mubr.bf16.gmra.mxu0 %v3442
        %v3506 = vpop.f32.mrf.mxu0
        %v3507 = vadd.f32 0.0, %v3506
        %v3508 = vpop.f32.mrf.mxu0
        %v3509 = vpop.f32.mrf.mxu0
        %v3510 = vadd.f32 0.0, %v3509
        %v3511 = vpop.f32.mrf.mxu0
        %3512 = vmatprep.mubr.bf16.mxu0 0
        %3513 = vmatmul.mubr.bf16.gmra.mxu0 %v3445
        %v3514 = vpop.f32.mrf.mxu0
        %v3515 = vadd.f32 0.0, %v3514
        %v3516 = vpop.f32.mrf.mxu0
        %v3517 = vpop.f32.mrf.mxu0
        %v3518 = vadd.f32 0.0, %v3517
        %v3519 = vpop.f32.mrf.mxu0
        %3520 = vmatprep.mubr.bf16.mxu0 0
        %3521 = vmatmul.mubr.bf16.gmra.mxu0 %v3448
        %v3522 = vpop.f32.mrf.mxu0
        %v3523 = vadd.f32 0.0, %v3522
        %v3524 = vpop.f32.mrf.mxu0
        %v3525 = vpop.f32.mrf.mxu0
        %v3526 = vadd.f32 0.0, %v3525
        %v3527 = vpop.f32.mrf.mxu0
        %3528 = vmatprep.mubr.bf16.mxu0 0
        %3529 = vmatmul.mubr.bf16.gmra.mxu0 %v3451
        %v3530 = vpop.f32.mrf.mxu0
        %v3531 = vadd.f32 0.0, %v3530
        %v3532 = vpop.f32.mrf.mxu0
        %v3533 = vpop.f32.mrf.mxu0
        %v3534 = vadd.f32 0.0, %v3533
        %v3535 = vpop.f32.mrf.mxu0
        %3536 = vmatprep.mubr.bf16.mxu0 0
        %3537 = vmatmul.mubr.bf16.gmra.mxu0 %v3454
        %v3538 = vpop.f32.mrf.mxu0
        %v3539 = vadd.f32 0.0, %v3538
        %v3540 = vpop.f32.mrf.mxu0
        %v3541 = vpop.f32.mrf.mxu0
        %v3542 = vadd.f32 0.0, %v3541
        %v3543 = vpop.f32.mrf.mxu0
        %3544 = vmatprep.mubr.bf16.mxu0 0
        %3545 = vmatmul.mubr.bf16.gmra.mxu0 %v3457
        %v3546 = vpop.f32.mrf.mxu0
        %v3547 = vadd.f32 0.0, %v3546
        %v3548 = vpop.f32.mrf.mxu0
        %v3549 = vpop.f32.mrf.mxu0
        %v3550 = vadd.f32 0.0, %v3549
        %v3551 = vpop.f32.mrf.mxu0
        %3552 = vmatprep.mubr.bf16.mxu0 0
        %3553 = vmatmul.mubr.bf16.gmra.mxu0 %v3460
        %v3554 = vpop.f32.mrf.mxu0
        %v3555 = vadd.f32 0.0, %v3554
        %v3556 = vpop.f32.mrf.mxu0
        %v3557 = vpop.f32.mrf.mxu0
        %v3558 = vadd.f32 0.0, %v3557
        %v3559 = vpop.f32.mrf.mxu0
        %3560 = vmatprep.mubr.bf16.mxu0 0
        %3561 = vmatmul.mubr.bf16.gmra.mxu0 %v3463
        %v3562 = vpop.f32.mrf.mxu0
        %v3563 = vadd.f32 0.0, %v3562
        %v3564 = vpop.f32.mrf.mxu0
        %v3565 = vpop.f32.mrf.mxu0
        %v3566 = vadd.f32 0.0, %v3565
        %v3567 = vpop.f32.mrf.mxu0
        %3568 = vmatprep.mubr.bf16.mxu0 0
        %3569 = vmatmul.mubr.bf16.gmra.mxu0 %v3466
        %v3570 = vpop.f32.mrf.mxu0
        %v3571 = vadd.f32 0.0, %v3570
        %v3572 = vpop.f32.mrf.mxu0
        %v3573 = vpop.f32.mrf.mxu0
        %v3574 = vadd.f32 0.0, %v3573
        %v3575 = vpop.f32.mrf.mxu0
        %3576 = vdwg.mxu0
        %v3595 = vcombine.high %v3507, %v3507
        %v3597 = vunpack.c.l.s4 1983009808
        %v3598 = vunpack.c.0.s8 %v3597
        %v3599 = vlaneseq
        %v3600 = vshrl.u32 %v3599, 7
        %v3601 = vsub.s32 %v3598, %v3600
        %v3602 = vrot.slane %v3507, %v3601
        %v3604 = vunpack.c.l.s4 1983009808
        %v3605 = vunpack.c.0.s8 %v3604
        %v3606 = vlaneseq
        %v3607 = vshrl.u32 %v3606, 7
        %v3608 = vsub.s32 %v3605, %v3607
        %v3609 = vrot.slane %v3595, %v3608
        %v3610 = vcombine.high %v3602, %v3602
        %v3611 = vcombine.high %v3609, %v3609
        %v3612 = vcombine.high %v3510, %v3510
        %v3614 = vunpack.c.l.s4 1983009808
        %v3615 = vunpack.c.0.s8 %v3614
        %v3616 = vlaneseq
        %v3617 = vshrl.u32 %v3616, 7
        %v3618 = vsub.s32 %v3615, %v3617
        %v3619 = vrot.slane %v3510, %v3618
        %v3621 = vunpack.c.l.s4 1983009808
        %v3622 = vunpack.c.0.s8 %v3621
        %v3623 = vlaneseq
        %v3624 = vshrl.u32 %v3623, 7
        %v3625 = vsub.s32 %v3622, %v3624
        %v3626 = vrot.slane %v3612, %v3625
        %v3627 = vcombine.high %v3619, %v3619
        %v3628 = vcombine.high %v3626, %v3626
        %v3629 = vcombine.high %v3515, %v3515
        %v3631 = vunpack.c.l.s4 1983009808
        %v3632 = vunpack.c.0.s8 %v3631
        %v3633 = vlaneseq
        %v3634 = vshrl.u32 %v3633, 7
        %v3635 = vsub.s32 %v3632, %v3634
        %v3636 = vrot.slane %v3515, %v3635
        %v3638 = vunpack.c.l.s4 1983009808
        %v3639 = vunpack.c.0.s8 %v3638
        %v3640 = vlaneseq
        %v3641 = vshrl.u32 %v3640, 7
        %v3642 = vsub.s32 %v3639, %v3641
        %v3643 = vrot.slane %v3629, %v3642
        %v3644 = vcombine.high %v3636, %v3636
        %v3645 = vcombine.high %v3643, %v3643
        %v3646 = vcombine.high %v3518, %v3518
        %v3648 = vunpack.c.l.s4 1983009808
        %v3649 = vunpack.c.0.s8 %v3648
        %v3650 = vlaneseq
        %v3651 = vshrl.u32 %v3650, 7
        %v3652 = vsub.s32 %v3649, %v3651
        %v3653 = vrot.slane %v3518, %v3652
        %v3655 = vunpack.c.l.s4 1983009808
        %v3656 = vunpack.c.0.s8 %v3655
        %v3657 = vlaneseq
        %v3658 = vshrl.u32 %v3657, 7
        %v3659 = vsub.s32 %v3656, %v3658
        %v3660 = vrot.slane %v3646, %v3659
        %v3661 = vcombine.high %v3653, %v3653
        %v3662 = vcombine.high %v3660, %v3660
        %v3663 = vcombine.high %v3523, %v3523
        %v3665 = vunpack.c.l.s4 1983009808
        %v3666 = vunpack.c.0.s8 %v3665
        %v3667 = vlaneseq
        %v3668 = vshrl.u32 %v3667, 7
        %v3669 = vsub.s32 %v3666, %v3668
        %v3670 = vrot.slane %v3523, %v3669
        %v3672 = vunpack.c.l.s4 1983009808
        %v3673 = vunpack.c.0.s8 %v3672
        %v3674 = vlaneseq
        %v3675 = vshrl.u32 %v3674, 7
        %v3676 = vsub.s32 %v3673, %v3675
        %v3677 = vrot.slane %v3663, %v3676
        %v3678 = vcombine.high %v3677, %v3677
        %v3679 = vcombine.high %v3526, %v3526
        %v3681 = vunpack.c.l.s4 1983009808
        %v3682 = vunpack.c.0.s8 %v3681
        %v3683 = vlaneseq
        %v3684 = vshrl.u32 %v3683, 7
        %v3685 = vsub.s32 %v3682, %v3684
        %v3686 = vrot.slane %v3526, %v3685
        %v3688 = vunpack.c.l.s4 1983009808
        %v3689 = vunpack.c.0.s8 %v3688
        %v3690 = vlaneseq
        %v3691 = vshrl.u32 %v3690, 7
        %v3692 = vsub.s32 %v3689, %v3691
        %v3693 = vrot.slane %v3679, %v3692
        %v3694 = vcombine.high %v3686, %v3686
        %v3695 = vcombine.high %v3693, %v3693
        %v3696 = vcombine.high %v3531, %v3531
        %v3698 = vunpack.c.l.s4 1983009808
        %v3699 = vunpack.c.0.s8 %v3698
        %v3700 = vlaneseq
        %v3701 = vshrl.u32 %v3700, 7
        %v3702 = vsub.s32 %v3699, %v3701
        %v3703 = vrot.slane %v3531, %v3702
        %v3705 = vunpack.c.l.s4 1983009808
        %v3706 = vunpack.c.0.s8 %v3705
        %v3707 = vlaneseq
        %v3708 = vshrl.u32 %v3707, 7
        %v3709 = vsub.s32 %v3706, %v3708
        %v3710 = vrot.slane %v3696, %v3709
        %v3711 = vcombine.high %v3703, %v3703
        %v3712 = vcombine.high %v3710, %v3710
        %v3713 = vcombine.high %v3534, %v3534
        %v3715 = vunpack.c.l.s4 1983009808
        %v3716 = vunpack.c.0.s8 %v3715
        %v3717 = vlaneseq
        %v3718 = vshrl.u32 %v3717, 7
        %v3719 = vsub.s32 %v3716, %v3718
        %v3720 = vrot.slane %v3534, %v3719
        %v3722 = vunpack.c.l.s4 1983009808
        %v3723 = vunpack.c.0.s8 %v3722
        %v3724 = vlaneseq
        %v3725 = vshrl.u32 %v3724, 7
        %v3726 = vsub.s32 %v3723, %v3725
        %v3727 = vrot.slane %v3713, %v3726
        %v3728 = vcombine.high %v3720, %v3720
        %v3729 = vcombine.high %v3727, %v3727
        %v3730 = vcombine.high %v3539, %v3539
        %v3732 = vunpack.c.l.s4 1983009808
        %v3733 = vunpack.c.0.s8 %v3732
        %v3734 = vlaneseq
        %v3735 = vshrl.u32 %v3734, 7
        %v3736 = vsub.s32 %v3733, %v3735
        %v3737 = vrot.slane %v3539, %v3736
        %v3739 = vunpack.c.l.s4 1983009808
        %v3740 = vunpack.c.0.s8 %v3739
        %v3741 = vlaneseq
        %v3742 = vshrl.u32 %v3741, 7
        %v3743 = vsub.s32 %v3740, %v3742
        %v3744 = vrot.slane %v3730, %v3743
        %v3745 = vcombine.high %v3737, %v3737
        %v3746 = vcombine.high %v3542, %v3542
        %v3748 = vunpack.c.l.s4 1983009808
        %v3749 = vunpack.c.0.s8 %v3748
        %v3750 = vlaneseq
        %v3751 = vshrl.u32 %v3750, 7
        %v3752 = vsub.s32 %v3749, %v3751
        %v3753 = vrot.slane %v3542, %v3752
        %v3755 = vunpack.c.l.s4 1983009808
        %v3756 = vunpack.c.0.s8 %v3755
        %v3757 = vlaneseq
        %v3758 = vshrl.u32 %v3757, 7
        %v3759 = vsub.s32 %v3756, %v3758
        %v3760 = vrot.slane %v3746, %v3759
        %v3761 = vcombine.high %v3753, %v3753
        %v3762 = vcombine.high %v3760, %v3760
        %v3763 = vcombine.high %v3547, %v3547
        %v3765 = vunpack.c.l.s4 1983009808
        %v3766 = vunpack.c.0.s8 %v3765
        %v3767 = vlaneseq
        %v3768 = vshrl.u32 %v3767, 7
        %v3769 = vsub.s32 %v3766, %v3768
        %v3770 = vrot.slane %v3547, %v3769
        %v3772 = vunpack.c.l.s4 1983009808
        %v3773 = vunpack.c.0.s8 %v3772
        %v3774 = vlaneseq
        %v3775 = vshrl.u32 %v3774, 7
        %v3776 = vsub.s32 %v3773, %v3775
        %v3777 = vrot.slane %v3763, %v3776
        %v3778 = vcombine.high %v3770, %v3770
        %v3779 = vcombine.high %v3777, %v3777
        %v3780 = vcombine.high %v3550, %v3550
        %v3782 = vunpack.c.l.s4 1983009808
        %v3783 = vunpack.c.0.s8 %v3782
        %v3784 = vlaneseq
        %v3785 = vshrl.u32 %v3784, 7
        %v3786 = vsub.s32 %v3783, %v3785
        %v3787 = vrot.slane %v3550, %v3786
        %v3789 = vunpack.c.l.s4 1983009808
        %v3790 = vunpack.c.0.s8 %v3789
        %v3791 = vlaneseq
        %v3792 = vshrl.u32 %v3791, 7
        %v3793 = vsub.s32 %v3790, %v3792
        %v3794 = vrot.slane %v3780, %v3793
        %v3795 = vcombine.high %v3787, %v3787
        %v3796 = vcombine.high %v3794, %v3794
        %v3797 = vcombine.high %v3555, %v3555
        %v3799 = vunpack.c.l.s4 1983009808
        %v3800 = vunpack.c.0.s8 %v3799
        %v3801 = vlaneseq
        %v3802 = vshrl.u32 %v3801, 7
        %v3803 = vsub.s32 %v3800, %v3802
        %v3804 = vrot.slane %v3555, %v3803
        %v3806 = vunpack.c.l.s4 1983009808
        %v3807 = vunpack.c.0.s8 %v3806
        %v3808 = vlaneseq
        %v3809 = vshrl.u32 %v3808, 7
        %v3810 = vsub.s32 %v3807, %v3809
        %v3811 = vrot.slane %v3797, %v3810
        %v3812 = vcombine.high %v3804, %v3804
        %v3813 = vcombine.high %v3811, %v3811
        %v3814 = vcombine.high %v3558, %v3558
        %v3816 = vunpack.c.l.s4 1983009808
        %v3817 = vunpack.c.0.s8 %v3816
        %v3818 = vlaneseq
        %v3819 = vshrl.u32 %v3818, 7
        %v3820 = vsub.s32 %v3817, %v3819
        %v3821 = vrot.slane %v3558, %v3820
        %v3823 = vunpack.c.l.s4 1983009808
        %v3824 = vunpack.c.0.s8 %v3823
        %v3825 = vlaneseq
        %v3826 = vshrl.u32 %v3825, 7
        %v3827 = vsub.s32 %v3824, %v3826
        %v3828 = vrot.slane %v3814, %v3827
        %v3829 = vcombine.high %v3828, %v3828
        %v3830 = vcombine.high %v3563, %v3563
        %v3832 = vunpack.c.l.s4 1983009808
        %v3833 = vunpack.c.0.s8 %v3832
        %v3834 = vlaneseq
        %v3835 = vshrl.u32 %v3834, 7
        %v3836 = vsub.s32 %v3833, %v3835
        %v3837 = vrot.slane %v3563, %v3836
        %v3839 = vunpack.c.l.s4 1983009808
        %v3840 = vunpack.c.0.s8 %v3839
        %v3841 = vlaneseq
        %v3842 = vshrl.u32 %v3841, 7
        %v3843 = vsub.s32 %v3840, %v3842
        %v3844 = vrot.slane %v3830, %v3843
        %v3845 = vcombine.high %v3837, %v3837
        %v3846 = vcombine.high %v3844, %v3844
        %v3847 = vcombine.high %v3566, %v3566
        %v3849 = vunpack.c.l.s4 1983009808
        %v3850 = vunpack.c.0.s8 %v3849
        %v3851 = vlaneseq
        %v3852 = vshrl.u32 %v3851, 7
        %v3853 = vsub.s32 %v3850, %v3852
        %v3854 = vrot.slane %v3566, %v3853
        %v3856 = vunpack.c.l.s4 1983009808
        %v3857 = vunpack.c.0.s8 %v3856
        %v3858 = vlaneseq
        %v3859 = vshrl.u32 %v3858, 7
        %v3860 = vsub.s32 %v3857, %v3859
        %v3861 = vrot.slane %v3847, %v3860
        %v3862 = vcombine.high %v3854, %v3854
        %v3863 = vcombine.high %v3861, %v3861
        %v3864 = vcombine.high %v3571, %v3571
        %v3866 = vunpack.c.l.s4 1983009808
        %v3867 = vunpack.c.0.s8 %v3866
        %v3868 = vlaneseq
        %v3869 = vshrl.u32 %v3868, 7
        %v3870 = vsub.s32 %v3867, %v3869
        %v3871 = vrot.slane %v3571, %v3870
        %v3873 = vunpack.c.l.s4 1983009808
        %v3874 = vunpack.c.0.s8 %v3873
        %v3875 = vlaneseq
        %v3876 = vshrl.u32 %v3875, 7
        %v3877 = vsub.s32 %v3874, %v3876
        %v3878 = vrot.slane %v3864, %v3877
        %v3879 = vcombine.high %v3871, %v3871
        %v3880 = vcombine.high %v3878, %v3878
        %v3881 = vcombine.high %v3574, %v3574
        %v3883 = vunpack.c.l.s4 1983009808
        %v3884 = vunpack.c.0.s8 %v3883
        %v3885 = vlaneseq
        %v3886 = vshrl.u32 %v3885, 7
        %v3887 = vsub.s32 %v3884, %v3886
        %v3888 = vrot.slane %v3574, %v3887
        %v3890 = vunpack.c.l.s4 1983009808
        %v3891 = vunpack.c.0.s8 %v3890
        %v3892 = vlaneseq
        %v3893 = vshrl.u32 %v3892, 7
        %v3894 = vsub.s32 %v3891, %v3893
        %v3895 = vrot.slane %v3881, %v3894
        %v3896 = vcombine.high %v3888, %v3888
        %v3897 = vcombine.low %v3602, %v3610
        %v3898 = vcombine.low %v3609, %v3611
        %v3900 = vunpack.c.l.s4 1983009808
        %v3901 = vunpack.c.0.s8 %v3900
        %v3902 = vlaneseq
        %v3903 = vshrl.u32 %v3902, 7
        %v3904 = vsub.s32 %v3901, %v3903
        %v3905 = vrot.slane %v3897, %v3904
        %v3907 = vunpack.c.l.s4 1983009808
        %v3908 = vunpack.c.0.s8 %v3907
        %v3909 = vlaneseq
        %v3910 = vshrl.u32 %v3909, 7
        %v3911 = vsub.s32 %v3908, %v3910
        %v3912 = vrot.slane %v3898, %v3911
        %v3913 = vcombine.low %v3905, %v3912
        %v3914 = vcombine.low %v3619, %v3627
        %v3915 = vcombine.low %v3626, %v3628
        %v3917 = vunpack.c.l.s4 1983009808
        %v3918 = vunpack.c.0.s8 %v3917
        %v3919 = vlaneseq
        %v3920 = vshrl.u32 %v3919, 7
        %v3921 = vsub.s32 %v3918, %v3920
        %v3922 = vrot.slane %v3914, %v3921
        %v3924 = vunpack.c.l.s4 1983009808
        %v3925 = vunpack.c.0.s8 %v3924
        %v3926 = vlaneseq
        %v3927 = vshrl.u32 %v3926, 7
        %v3928 = vsub.s32 %v3925, %v3927
        %v3929 = vrot.slane %v3915, %v3928
        %v3930 = vcombine.low %v3922, %v3929
        %v3931 = vcombine.low %v3644, %v3643
        %v3932 = vcombine.low %v3645, %v3653
        %v3934 = vunpack.c.l.s4 1983009808
        %v3935 = vunpack.c.0.s8 %v3934
        %v3936 = vlaneseq
        %v3937 = vshrl.u32 %v3936, 7
        %v3938 = vsub.s32 %v3935, %v3937
        %v3939 = vrot.slane %v3931, %v3938
        %v3941 = vunpack.c.l.s4 1983009808
        %v3942 = vunpack.c.0.s8 %v3941
        %v3943 = vlaneseq
        %v3944 = vshrl.u32 %v3943, 7
        %v3945 = vsub.s32 %v3942, %v3944
        %v3946 = vrot.slane %v3932, %v3945
        %v3947 = vcombine.low %v3939, %v3946
        %v3948 = vcombine.low %v3661, %v3660
        %v3949 = vcombine.low %v3662, %v3670
        %v3951 = vunpack.c.l.s4 1983009808
        %v3952 = vunpack.c.0.s8 %v3951
        %v3953 = vlaneseq
        %v3954 = vshrl.u32 %v3953, 7
        %v3955 = vsub.s32 %v3952, %v3954
        %v3956 = vrot.slane %v3948, %v3955
        %v3958 = vunpack.c.l.s4 1983009808
        %v3959 = vunpack.c.0.s8 %v3958
        %v3960 = vlaneseq
        %v3961 = vshrl.u32 %v3960, 7
        %v3962 = vsub.s32 %v3959, %v3961
        %v3963 = vrot.slane %v3949, %v3962
        %v3964 = vcombine.low %v3956, %v3963
        %v3965 = vcombine.low %v3677, %v3678
        %v3966 = vcombine.low %v3686, %v3694
        %v3968 = vunpack.c.l.s4 1983009808
        %v3969 = vunpack.c.0.s8 %v3968
        %v3970 = vlaneseq
        %v3971 = vshrl.u32 %v3970, 7
        %v3972 = vsub.s32 %v3969, %v3971
        %v3973 = vrot.slane %v3965, %v3972
        %v3975 = vunpack.c.l.s4 1983009808
        %v3976 = vunpack.c.0.s8 %v3975
        %v3977 = vlaneseq
        %v3978 = vshrl.u32 %v3977, 7
        %v3979 = vsub.s32 %v3976, %v3978
        %v3980 = vrot.slane %v3966, %v3979
        %v3981 = vcombine.low %v3973, %v3980
        %v3982 = vcombine.low %v3693, %v3695
        %v3983 = vcombine.low %v3703, %v3711
        %v3985 = vunpack.c.l.s4 1983009808
        %v3986 = vunpack.c.0.s8 %v3985
        %v3987 = vlaneseq
        %v3988 = vshrl.u32 %v3987, 7
        %v3989 = vsub.s32 %v3986, %v3988
        %v3990 = vrot.slane %v3982, %v3989
        %v3992 = vunpack.c.l.s4 1983009808
        %v3993 = vunpack.c.0.s8 %v3992
        %v3994 = vlaneseq
        %v3995 = vshrl.u32 %v3994, 7
        %v3996 = vsub.s32 %v3993, %v3995
        %v3997 = vrot.slane %v3983, %v3996
        %v3998 = vcombine.low %v3990, %v3997
        %v3999 = vcombine.low %v3712, %v3720
        %v4000 = vcombine.low %v3728, %v3727
        %v4002 = vunpack.c.l.s4 1983009808
        %v4003 = vunpack.c.0.s8 %v4002
        %v4004 = vlaneseq
        %v4005 = vshrl.u32 %v4004, 7
        %v4006 = vsub.s32 %v4003, %v4005
        %v4007 = vrot.slane %v3999, %v4006
        %v4009 = vunpack.c.l.s4 1983009808
        %v4010 = vunpack.c.0.s8 %v4009
        %v4011 = vlaneseq
        %v4012 = vshrl.u32 %v4011, 7
        %v4013 = vsub.s32 %v4010, %v4012
        %v4014 = vrot.slane %v4000, %v4013
        %v4015 = vcombine.low %v4007, %v4014
        %v4016 = vcombine.low %v3729, %v3737
        %v4017 = vcombine.low %v3745, %v3744
        %v4019 = vunpack.c.l.s4 1983009808
        %v4020 = vunpack.c.0.s8 %v4019
        %v4021 = vlaneseq
        %v4022 = vshrl.u32 %v4021, 7
        %v4023 = vsub.s32 %v4020, %v4022
        %v4024 = vrot.slane %v4016, %v4023
        %v4026 = vunpack.c.l.s4 1983009808
        %v4027 = vunpack.c.0.s8 %v4026
        %v4028 = vlaneseq
        %v4029 = vshrl.u32 %v4028, 7
        %v4030 = vsub.s32 %v4027, %v4029
        %v4031 = vrot.slane %v4017, %v4030
        %v4032 = vcombine.low %v4024, %v4031
        %v4033 = vcombine.low %v3753, %v3761
        %v4034 = vcombine.low %v3760, %v3762
        %v4036 = vunpack.c.l.s4 1983009808
        %v4037 = vunpack.c.0.s8 %v4036
        %v4038 = vlaneseq
        %v4039 = vshrl.u32 %v4038, 7
        %v4040 = vsub.s32 %v4037, %v4039
        %v4041 = vrot.slane %v4033, %v4040
        %v4043 = vunpack.c.l.s4 1983009808
        %v4044 = vunpack.c.0.s8 %v4043
        %v4045 = vlaneseq
        %v4046 = vshrl.u32 %v4045, 7
        %v4047 = vsub.s32 %v4044, %v4046
        %v4048 = vrot.slane %v4034, %v4047
        %v4049 = vcombine.low %v4041, %v4048
        %v4050 = vcombine.low %v3770, %v3778
        %v4051 = vcombine.low %v3777, %v3779
        %v4053 = vunpack.c.l.s4 1983009808
        %v4054 = vunpack.c.0.s8 %v4053
        %v4055 = vlaneseq
        %v4056 = vshrl.u32 %v4055, 7
        %v4057 = vsub.s32 %v4054, %v4056
        %v4058 = vrot.slane %v4050, %v4057
        %v4060 = vunpack.c.l.s4 1983009808
        %v4061 = vunpack.c.0.s8 %v4060
        %v4062 = vlaneseq
        %v4063 = vshrl.u32 %v4062, 7
        %v4064 = vsub.s32 %v4061, %v4063
        %v4065 = vrot.slane %v4051, %v4064
        %v4066 = vcombine.low %v4058, %v4065
        %v4067 = vcombine.low %v3795, %v3794
        %v4068 = vcombine.low %v3796, %v3804
        %v4070 = vunpack.c.l.s4 1983009808
        %v4071 = vunpack.c.0.s8 %v4070
        %v4072 = vlaneseq
        %v4073 = vshrl.u32 %v4072, 7
        %v4074 = vsub.s32 %v4071, %v4073
        %v4075 = vrot.slane %v4067, %v4074
        %v4077 = vunpack.c.l.s4 1983009808
        %v4078 = vunpack.c.0.s8 %v4077
        %v4079 = vlaneseq
        %v4080 = vshrl.u32 %v4079, 7
        %v4081 = vsub.s32 %v4078, %v4080
        %v4082 = vrot.slane %v4068, %v4081
        %v4083 = vcombine.low %v4075, %v4082
        %v4084 = vcombine.low %v3812, %v3811
        %v4085 = vcombine.low %v3813, %v3821
        %v4087 = vunpack.c.l.s4 1983009808
        %v4088 = vunpack.c.0.s8 %v4087
        %v4089 = vlaneseq
        %v4090 = vshrl.u32 %v4089, 7
        %v4091 = vsub.s32 %v4088, %v4090
        %v4092 = vrot.slane %v4084, %v4091
        %v4094 = vunpack.c.l.s4 1983009808
        %v4095 = vunpack.c.0.s8 %v4094
        %v4096 = vlaneseq
        %v4097 = vshrl.u32 %v4096, 7
        %v4098 = vsub.s32 %v4095, %v4097
        %v4099 = vrot.slane %v4085, %v4098
        %v4100 = vcombine.low %v4092, %v4099
        %v4101 = vcombine.low %v3828, %v3829
        %v4102 = vcombine.low %v3837, %v3845
        %v4104 = vunpack.c.l.s4 1983009808
        %v4105 = vunpack.c.0.s8 %v4104
        %v4106 = vlaneseq
        %v4107 = vshrl.u32 %v4106, 7
        %v4108 = vsub.s32 %v4105, %v4107
        %v4109 = vrot.slane %v4101, %v4108
        %v4111 = vunpack.c.l.s4 1983009808
        %v4112 = vunpack.c.0.s8 %v4111
        %v4113 = vlaneseq
        %v4114 = vshrl.u32 %v4113, 7
        %v4115 = vsub.s32 %v4112, %v4114
        %v4116 = vrot.slane %v4102, %v4115
        %v4117 = vcombine.low %v4109, %v4116
        %v4118 = vcombine.low %v3844, %v3846
        %v4119 = vcombine.low %v3854, %v3862
        %v4121 = vunpack.c.l.s4 1983009808
        %v4122 = vunpack.c.0.s8 %v4121
        %v4123 = vlaneseq
        %v4124 = vshrl.u32 %v4123, 7
        %v4125 = vsub.s32 %v4122, %v4124
        %v4126 = vrot.slane %v4118, %v4125
        %v4128 = vunpack.c.l.s4 1983009808
        %v4129 = vunpack.c.0.s8 %v4128
        %v4130 = vlaneseq
        %v4131 = vshrl.u32 %v4130, 7
        %v4132 = vsub.s32 %v4129, %v4131
        %v4133 = vrot.slane %v4119, %v4132
        %v4134 = vcombine.low %v4126, %v4133
        %v4135 = vcombine.low %v3863, %v3871
        %v4136 = vcombine.low %v3879, %v3878
        %v4138 = vunpack.c.l.s4 1983009808
        %v4139 = vunpack.c.0.s8 %v4138
        %v4140 = vlaneseq
        %v4141 = vshrl.u32 %v4140, 7
        %v4142 = vsub.s32 %v4139, %v4141
        %v4143 = vrot.slane %v4135, %v4142
        %v4145 = vunpack.c.l.s4 1983009808
        %v4146 = vunpack.c.0.s8 %v4145
        %v4147 = vlaneseq
        %v4148 = vshrl.u32 %v4147, 7
        %v4149 = vsub.s32 %v4146, %v4148
        %v4150 = vrot.slane %v4136, %v4149
        %v4151 = vcombine.low %v4143, %v4150
        %v4152 = vcombine.low %v3880, %v3888
        %v4153 = vcombine.low %v3896, %v3895
        %v4155 = vunpack.c.l.s4 1983009808
        %v4156 = vunpack.c.0.s8 %v4155
        %v4157 = vlaneseq
        %v4158 = vshrl.u32 %v4157, 7
        %v4159 = vsub.s32 %v4156, %v4158
        %v4160 = vrot.slane %v4152, %v4159
        %v4162 = vunpack.c.l.s4 1983009808
        %v4163 = vunpack.c.0.s8 %v4162
        %v4164 = vlaneseq
        %v4165 = vshrl.u32 %v4164, 7
        %v4166 = vsub.s32 %v4163, %v4165
        %v4167 = vrot.slane %v4153, %v4166
        %v4168 = vcombine.low %v4160, %v4167
        %4185 = vst [vmem:[%s361] sm:$0xff] %v3913
        %4186 = vst [vmem:[%s361 + $0x8] sm:$0xff] %v3930
        %4187 = vst [vmem:[%s361 + $0x10] sm:$0xff] %v3947
        %4188 = vst [vmem:[%s361 + $0x18] sm:$0xff] %v3964
        %4189 = vst [vmem:[%s361 + $0x20] sm:$0xff] %v3981
        %4190 = vst [vmem:[%s361 + $0x28] sm:$0xff] %v3998
        %4191 = vst [vmem:[%s361 + $0x30] sm:$0xff] %v4015
        %4192 = vst [vmem:[%s361 + $0x38] sm:$0xff] %v4032
        %4193 = vst [vmem:[%s361 + $0x40] sm:$0xff] %v4049
        %4194 = vst [vmem:[%s361 + $0x48] sm:$0xff] %v4066
        %4195 = vst [vmem:[%s361 + $0x50] sm:$0xff] %v4083
        %4196 = vst [vmem:[%s361 + $0x58] sm:$0xff] %v4100
        %4197 = vst [vmem:[%s361 + $0x60] sm:$0xff] %v4117
        %4198 = vst [vmem:[%s361 + $0x68] sm:$0xff] %v4134
        %4199 = vst [vmem:[%s361 + $0x70] sm:$0xff] %v4151
        %4200 = vst [vmem:[%s361 + $0x78] sm:$0xff] %v4168
        %s4201 = sand.u32 %s199, 1
        %s4202 = scalar_lea.sflag [#allocation4], %s4201
        %s4203 = sand.u32 %s199, 1
        %s4204 = smul.addr %s4203, 128
        %s4205 = scalar_lea.vmem [#allocation3], %s4204
        // Predicated region
        $region45: #{tpu_custom_call.1} parent=43 // pred_check
          %p4206 = pneg %p209
        $region46: #{tpu_custom_call.1} parent=43 // pred_check_branch
          %4208 = sbr.rel (%p4206) target = $region48
        $region47: #{tpu_custom_call.1} parent=43 // pred_region
          %s4209 = smul.u32 8, %s25
          %s4211 = ssub.s32 2048, 2048
          %4212 = vsyncadd %s4202, %s4211
          %s4213 = smul.addr %s4209, 2
          %s4214 = smul.addr %s24, 32
          %s4215 = sadd.s32 %s4213, %s4214
          %s4216 = smul.addr %s4215, 128
          %s4217 = scalar_lea.hbm %s6, %s4216
          %s4218 = sshll.u32 %s4205, 4
          %s4219 = int_to_ptr.vmem [resolvable:$true] %s4218
          %4224 = dma.vmem_to_hbm [thread:$0]  %s4219, 2048, %s4217, %s4202, 128, 128, 8
        $region48: #{tpu_custom_call.1} parent=43 // pred_fallthru
          _
      $region44: #{tpu_custom_call.1} parent=5 // pred_fallthru
        _
      %p4225 = scmp.le.s32.totalorder 2, %s15
      // Predicated region
      $region49: #{tpu_custom_call.1} parent=5 // pred_check
        %p4226 = pneg %p4225
      $region50: #{tpu_custom_call.1} parent=5 // pred_check_branch
        %4228 = sbr.rel (%p4226) target = $region52
      $region51: #{tpu_custom_call.1} parent=5 // pred_region
        %s4229 = ssub.s32 %s15, 2
        // Predicated region
        $region53: #{tpu_custom_call.1} parent=51 // pred_check
          %p4230 = pneg %p215
        $region54: #{tpu_custom_call.1} parent=51 // pred_check_branch
          %4232 = sbr.rel (%p4230) target = $region56
        $region55: #{tpu_custom_call.1} parent=51 // pred_region
          %s4233 = sand.u32 %s200, 1
          %s4234 = scalar_lea.sflag [#allocation4], %s4233
          %s4235 = sand.u32 %s200, 1
          %s4236 = smul.addr %s4235, 128
          %s4237 = scalar_lea.vmem [#allocation3], %s4236
          %4238 = dma.done %s4234, 2048
        $region56: #{tpu_custom_call.1} parent=51 // pred_fallthru
          _
      $region52: #{tpu_custom_call.1} parent=5 // pred_fallthru
        _
    $region6: #{tpu_custom_call.1} parent=1 // loop_footer
      %s19 = sadd.s32 1, %s15
    $region7: #{tpu_custom_call.1} parent=1 // loop_footer_branch
      %14 = sbr.rel target = $region3
    $region8: #{tpu_custom_call.1} parent=1 // loop_exit
      _
    %4239 = vsyncpa [#allocation4], 1
    %s4240 = scalar_lea.sflag [#allocation4], 1
    %4241 = vsyncpa %s4240, 1

</llo_original>
